<compile_context>
chip_gen: v6e
topology: v6e:2x2x1
jax: 0.10.0
libtpu: 0.0.40
codegen_flags: <defaults>
</compile_context>

<pallas_src>
import jax
import jax.numpy as jnp
from jax import lax
from jax.experimental import pallas as pl
from jax.experimental.pallas import tpu as pltpu

BN_EPS = 1e-5


def _residual_flags(cfgs):
    L = len(cfgs)
    has_res = [l > 0 and cfgs[l][0] == cfgs[l][1] for l in range(L)]
    res_store = [(l + 1 < L) and has_res[l + 1] for l in range(L)]
    return has_res, res_store


# --------------------------- fused Pallas kernel -----------------------------
def make_fused_kernel(cfgs, N, H, W, margin):
    """Whole Conv->BN->(res)->ReLU stack inside VMEM.

    Activations are kept zero-padded in (C, Np) with Np = N*Hp*Wp flattened on
    the lane axis (halo + lane margins are zero), so every 'same' conv becomes
    one im2col build + one (cout, k*k*cin) @ (k*k*cin, Np) MXU matmul.
    """
    L = len(cfgs)
    pad_s = max(c[4] for c in cfgs)
    Hp, Wp = H + 2 * pad_s, W + 2 * pad_s
    Np = N * Hp * Wp
    inv_m = 1.0 / float(N * H * W)          # BN stats count interior pixels only
    has_res, res_store = _residual_flags(cfgs)
    any_res = any(has_res)

    def kernel(*refs):
        x_ref = refs[0]
        mask_ref = refs[1 + 2 * L]
        o_ref = refs[2 + 2 * L]
        act_ref = refs[3 + 2 * L]            # padded bf16 activation scratch
        patch_ref = refs[4 + 2 * L]          # im2col scratch
        res_ref = refs[5 + 2 * L] if any_res else None

        mask = mask_ref[...]                 # (1, Np) f32: 1 at interior pixels

        # Zero the activation scratch ONCE: spatial halo + lane margins stay 0
        # for every intermediate layer, so 'same' padding is free afterwards.
        act_ref[...] = jnp.zeros_like(act_ref)

        for l, (cin, cout, k, _, pad) in enumerate(cfgs):
            w_ref = refs[1 + 2 * l]          # (cout, k*k*cin) bf16
            gb_ref = refs[2 + 2 * l]         # (cout, 2) f32: [:,0]=gamma, [:,1]=beta
            kkc = k * k * cin
            src = x_ref if l == 0 else act_ref   # padded activation, halo = 0

            # ---- im2col: k*k row-contiguous shifted copies into the scratch.
            for dh in range(k):
                for dw in range(k):
                    t = dh * k + dw
                    off = margin + (dh - pad) * Wp + (dw - pad)
                    patch_ref[t * cin:(t + 1) * cin, :] = src[0:cin, off:off + Np]

            # ---- whole conv as ONE MXU matmul, bf16 operands / f32 accumulation.
            acc = jnp.dot(w_ref[...], patch_ref[0:kkc, :],
                          preferred_element_type=jnp.float32)       # (cout, Np)

            # ---- training-mode BatchNorm over interior pixels only.
            #      (conv bias omitted: cancels with the mean subtraction.)
            accm = acc * mask
            mean = jnp.sum(accm, axis=1, keepdims=True) * inv_m
            msq = jnp.sum(accm * accm, axis=1, keepdims=True) * inv_m
            var = jnp.maximum(msq - mean * mean, 0.0)
            gb = gb_ref[...]
            scale = gb[:, 0:1] * lax.rsqrt(var + BN_EPS)
            y = acc * scale + (gb[:, 1:2] - mean * scale)

            # ---- residual add (pre-ReLU) when in/out channel counts match.
            if has_res[l]:
                y = y + res_ref[0:cout, :]
            y = jnp.maximum(y, 0.0)

            if l + 1 < L:
                nxt = y * mask               # zero the halo once per layer
                act_ref[0:cout, margin:margin + Np] = nxt.astype(jnp.bfloat16)
                if res_store[l]:             # f32 residual source for next layer
                    res_ref[0:cout, :] = nxt
            else:
                o_ref[...] = y               # halo columns sliced away host-side

    return kernel


# ------------------------------- JAX wrapper ---------------------------------
def conv_layer_forward(x, params, cfgs):
    """Pallas ConvLayer.forward: NCHW in -> NCHW out, one fused pallas_call."""
    N, C0, H, W = x.shape
    L = len(cfgs)
    assert cfgs[0][0] == C0
    for l, (cin, cout, k, stride, pad) in enumerate(cfgs):
        # TODO(synk): the fused kernel covers stride=1 / 'same' padding only
        # (true for the PG-Caps Conv_Cfg); other strides need a relayout pass.
        assert stride == 1 and 2 * pad + 1 == k, "fused kernel: stride=1, same padding only"
        if l > 0:
            assert cin == cfgs[l - 1][1]

    pad_s = max(c[4] for c in cfgs)
    Hp, Wp = H + 2 * pad_s, W + 2 * pad_s
    Np = N * Hp * Wp
    need = pad_s * Wp + pad_s                              # largest tap offset
    margin = 0 if need == 0 else 128 * pl.cdiv(need, 128)  # lane-aligned margins

    # Input: NCHW -> zero spatial halo -> channels-major flat (C0, Np) ->
    # lane margins -> bf16 MXU operand (f32 accumulation happens in-kernel).
    xp = jnp.pad(x, ((0, 0), (0, 0), (pad_s, pad_s), (pad_s, pad_s)))
    xf = jnp.transpose(xp, (1, 0, 2, 3)).reshape(C0, Np)
    x_in = jnp.pad(xf, ((0, 0), (margin, margin))).astype(jnp.bfloat16)

    args = [x_in]
    for (cin, cout, k, _, _), p in zip(cfgs, params):
        # (cout, cin, kh, kw) -> (cout, kh*kw*cin): matches the im2col row order.
        w2 = jnp.transpose(p["w"], (0, 2, 3, 1)).reshape(cout, k * k * cin)
        args.append(w2.astype(jnp.bfloat16))
        args.append(jnp.stack([p["gamma"], p["beta"]], axis=1).astype(jnp.float32))

    # Interior-pixel mask along the padded flat axis (halo pixels -> 0).
    hh, ww = jnp.arange(Hp), jnp.arange(Wp)
    m2d = ((hh[:, None] >= pad_s) & (hh[:, None] < pad_s + H)
           & (ww[None, :] >= pad_s) & (ww[None, :] < pad_s + W))
    mask = jnp.tile(m2d.reshape(-1), N).reshape(1, Np).astype(jnp.float32)
    args.append(mask)

    cout_last = cfgs[-1][1]
    _, res_store = _residual_flags(cfgs)
    c_act = max([c[1] for c in cfgs[:-1]], default=8)      # intermediate channels
    kkc_max = max(c[2] * c[2] * c[0] for c in cfgs)        # im2col rows
    scratch = [pltpu.VMEM((c_act, Np + 2 * margin), jnp.bfloat16),  # padded act
               pltpu.VMEM((kkc_max, Np), jnp.bfloat16)]             # im2col patch
    if any(res_store):
        c_res = max(cfgs[l][1] for l in range(L) if res_store[l])
        scratch.append(pltpu.VMEM((c_res, Np), jnp.float32))        # f32 residual

    kernel = make_fused_kernel(tuple(tuple(c) for c in cfgs), N, H, W, margin)
    in_specs = [pl.BlockSpec(a.shape, (lambda i, nd=a.ndim: (0,) * nd)) for a in args]

    out = pl.pallas_call(
        kernel,
        out_shape=jax.ShapeDtypeStruct((cout_last, Np), jnp.float32),
        grid=(1,),
        in_specs=in_specs,
        out_specs=pl.BlockSpec((cout_last, Np), lambda i: (0, 0)),
        scratch_shapes=scratch,
    )(*args)

    # Single relayout back to NCHW at the very end, dropping the halo.
    out4 = out.reshape(cout_last, N, Hp, Wp)[:, :, pad_s:pad_s + H, pad_s:pad_s + W]
    return jnp.transpose(out4, (1, 0, 2, 3))


# ------------------------------- references ----------------------------------
def conv_layer_forward_ref(x, params, cfgs, quantize_operands=False):
    """Pure-JAX reference mirroring the PyTorch module (training-mode BN).

    quantize_operands=True rounds the conv inputs/weights through bfloat16 --
    exactly the operands the kernel feeds the MXU -- for a tight comparison.
    quantize_operands=False is the full-f32 PyTorch semantics.
    """
    def q(a):
        return a.astype(jnp.bfloat16).astype(jnp.float32) if quantize_operands else a

    out = None
    for i, (cfg, p) in enumerate(zip(cfgs, params)):
        cin, cout, k, stride, pad = cfg
        inp = x if i == 0 else out
        y = lax.conv_general_dilated(
            q(inp), q(p["w"]), (stride, stride), [(pad, pad), (pad, pad)],
            dimension_numbers=("NCHW", "OIHW", "NCHW"),
            precision=lax.Precision.HIGHEST)
        y = y + p["b"].reshape(1, cout, 1, 1)
        mean = jnp.mean(y, axis=(0, 2, 3), keepdims=True)
        var = jnp.mean((y - mean) ** 2, axis=(0, 2, 3), keepdims=True)
        y = (y - mean) * lax.rsqrt(var + BN_EPS)
        y = y * p["gamma"].reshape(1, cout, 1, 1) + p["beta"].reshape(1, cout, 1, 1)
        if i > 0 and inp.shape[1] == y.shape[1]:
            y = y + inp
        out = jnp.maximum(y, 0.0)
    return out


def init_params(key, cfgs):
    params = []
    for cfg in cfgs:
        cin, cout, k, _, _ = cfg
        key, k1, k2 = jax.random.split(key, 3)
        fan_in = cin * k * k
        # kaiming_normal_(nonlinearity='relu'): std = sqrt(2 / fan_in)
        w = jax.random.normal(k1, (cout, cin, k, k), jnp.float32) * jnp.sqrt(2.0 / fan_in)
        bound = 1.0 / jnp.sqrt(jnp.float32(fan_in))
        b = jax.random.uniform(k2, (cout,), jnp.float32, -bound, bound)
        params.append(dict(
            # Conv bias `b` is only consumed by the reference: under
            # training-mode BN it cancels exactly, so the kernel drops it.
            w=w, b=b,
            gamma=jnp.ones((cout,), jnp.float32),
            beta=jnp.zeros((cout,), jnp.float32),
        ))
    return params


if __name__ == "__main__":
    # Conv_Cfg: [in_ch, out_ch, kernel, stride, padding] (PG-Caps style).
    CONV_CFG = [
        [4, 16, 3, 1, 1],   # layer 0: first layer, no residual
        [16, 16, 3, 1, 1],  # layer 1: channels match -> residual add
        [16, 32, 3, 1, 1],  # layer 2: channels change -> no residual
    ]
    key = jax.random.PRNGKey(0)
    key, kx = jax.random.split(key)
    x = jax.random.normal(kx, (2, 4, 16, 16), jnp.float32)
    params = init_params(key, CONV_CFG)

    fwd = jax.jit(lambda xx, pp: conv_layer_forward(xx, pp, CONV_CFG))
    out = jax.block_until_ready(fwd(x, params))
    assert out.shape == (2, 32, 16, 16), out.shape

    # Tight elementwise check vs. a reference fed the same bf16-rounded matmul
    # operands (only accumulation-order / BN roundoff differs).
    ref_bf16 = jax.block_until_ready(
        conv_layer_forward_ref(x, params, CONV_CFG, quantize_operands=True))
    max_err = float(jnp.max(jnp.abs(out - ref_bf16)))
    assert jnp.allclose(out, ref_bf16, atol=3e-3, rtol=3e-3), max_err

    # Sanity check vs. the full-f32 PyTorch-semantics reference: only the bf16
    # rounding of the MXU operands differs.
    ref_f32 = jax.block_until_ready(conv_layer_forward_ref(x, params, CONV_CFG))
    rel = float(jnp.linalg.norm(out - ref_f32) / jnp.linalg.norm(ref_f32))
    assert rel < 3e-2, rel

    print("KERNEL_OK")
</pallas_src>

<mosaic_0001>
module attributes {stable_mosaic.version = 11 : i64} {
  func.func @kernel(%arg0: i32, %arg1: memref<4x904xbf16, #tpu.memory_space<vmem>>, %arg2: memref<16x36xbf16, #tpu.memory_space<vmem>>, %arg3: memref<16x2xf32, #tpu.memory_space<vmem>>, %arg4: memref<16x144xbf16, #tpu.memory_space<vmem>>, %arg5: memref<16x2xf32, #tpu.memory_space<vmem>>, %arg6: memref<32x144xbf16, #tpu.memory_space<vmem>>, %arg7: memref<32x2xf32, #tpu.memory_space<vmem>>, %arg8: memref<1x648xf32, #tpu.memory_space<vmem>>, %arg9: memref<32x648xf32, #tpu.memory_space<vmem>>, %arg10: memref<16x904xbf16, #tpu.memory_space<vmem>>, %arg11: memref<144x648xbf16, #tpu.memory_space<vmem>>, %arg12: memref<16x648xf32, #tpu.memory_space<vmem>>) attributes {dimension_semantics = [#tpu.dimension_semantics<arbitrary>], iteration_bounds = array<i64: 1>, scalar_prefetch = 0 : i64, scratch_operands = 3 : i64, tpu.core_type = #tpu.core_type<tc>, window_params = [{pipeline_mode = #tpu.pipeline_mode<synchronous>, transform_indices = @transform_0, window_bounds = array<i64: 4, 904>}, {pipeline_mode = #tpu.pipeline_mode<synchronous>, transform_indices = @transform_1, window_bounds = array<i64: 16, 36>}, {pipeline_mode = #tpu.pipeline_mode<synchronous>, transform_indices = @transform_2, window_bounds = array<i64: 16, 2>}, {pipeline_mode = #tpu.pipeline_mode<synchronous>, transform_indices = @transform_3, window_bounds = array<i64: 16, 144>}, {pipeline_mode = #tpu.pipeline_mode<synchronous>, transform_indices = @transform_4, window_bounds = array<i64: 16, 2>}, {pipeline_mode = #tpu.pipeline_mode<synchronous>, transform_indices = @transform_5, window_bounds = array<i64: 32, 144>}, {pipeline_mode = #tpu.pipeline_mode<synchronous>, transform_indices = @transform_6, window_bounds = array<i64: 32, 2>}, {pipeline_mode = #tpu.pipeline_mode<synchronous>, transform_indices = @transform_7, window_bounds = array<i64: 1, 648>}, {pipeline_mode = #tpu.pipeline_mode<synchronous>, transform_indices = @transform_8, window_bounds = array<i64: 32, 648>}]} {
    %c0 = arith.constant 0 : index
    %c0_0 = arith.constant 0 : index
    %0 = vector.load %arg8[%c0, %c0_0] : memref<1x648xf32, #tpu.memory_space<vmem>>, vector<1x648xf32>
    %cst = arith.constant 0.000000e+00 : bf16
    %1 = vector.broadcast %cst : bf16 to vector<16x904xbf16>
    %c0_1 = arith.constant 0 : index
    %c0_2 = arith.constant 0 : index
    %2 = vector.load %arg10[%c0_1, %c0_2] : memref<16x904xbf16, #tpu.memory_space<vmem>>, vector<16x904xbf16>
    tpu.vector_store %arg10[%c0_1, %c0_2], %1 {strides = array<i32>} : memref<16x904xbf16, #tpu.memory_space<vmem>>, vector<16x904xbf16>,
    %c0_3 = arith.constant 0 : index
    %c109 = arith.constant 109 : index
    %3 = vector.load %arg1[%c0_3, %c109] : memref<4x904xbf16, #tpu.memory_space<vmem>>, vector<4x648xbf16>
    %c0_4 = arith.constant 0 : index
    %c0_5 = arith.constant 0 : index
    %4 = vector.load %arg11[%c0_4, %c0_5] : memref<144x648xbf16, #tpu.memory_space<vmem>>, vector<4x648xbf16>
    tpu.vector_store %arg11[%c0_4, %c0_5], %3 {strides = array<i32>} : memref<144x648xbf16, #tpu.memory_space<vmem>>, vector<4x648xbf16>,
    %c0_6 = arith.constant 0 : index
    %c110 = arith.constant 110 : index
    %5 = vector.load %arg1[%c0_6, %c110] : memref<4x904xbf16, #tpu.memory_space<vmem>>, vector<4x648xbf16>
    %c4 = arith.constant 4 : index
    %c0_7 = arith.constant 0 : index
    %6 = vector.load %arg11[%c4, %c0_7] : memref<144x648xbf16, #tpu.memory_space<vmem>>, vector<4x648xbf16>
    tpu.vector_store %arg11[%c4, %c0_7], %5 {strides = array<i32>} : memref<144x648xbf16, #tpu.memory_space<vmem>>, vector<4x648xbf16>,
    %c0_8 = arith.constant 0 : index
    %c111 = arith.constant 111 : index
    %7 = vector.load %arg1[%c0_8, %c111] : memref<4x904xbf16, #tpu.memory_space<vmem>>, vector<4x648xbf16>
    %c8 = arith.constant 8 : index
    %c0_9 = arith.constant 0 : index
    %8 = vector.load %arg11[%c8, %c0_9] : memref<144x648xbf16, #tpu.memory_space<vmem>>, vector<4x648xbf16>
    tpu.vector_store %arg11[%c8, %c0_9], %7 {strides = array<i32>} : memref<144x648xbf16, #tpu.memory_space<vmem>>, vector<4x648xbf16>,
    %c0_10 = arith.constant 0 : index
    %c127 = arith.constant 127 : index
    %9 = vector.load %arg1[%c0_10, %c127] : memref<4x904xbf16, #tpu.memory_space<vmem>>, vector<4x648xbf16>
    %c12 = arith.constant 12 : index
    %c0_11 = arith.constant 0 : index
    %10 = vector.load %arg11[%c12, %c0_11] : memref<144x648xbf16, #tpu.memory_space<vmem>>, vector<4x648xbf16>
    tpu.vector_store %arg11[%c12, %c0_11], %9 {strides = array<i32>} : memref<144x648xbf16, #tpu.memory_space<vmem>>, vector<4x648xbf16>,
    %c0_12 = arith.constant 0 : index
    %c128 = arith.constant 128 : index
    %11 = vector.load %arg1[%c0_12, %c128] : memref<4x904xbf16, #tpu.memory_space<vmem>>, vector<4x648xbf16>
    %c16 = arith.constant 16 : index
    %c0_13 = arith.constant 0 : index
    %12 = vector.load %arg11[%c16, %c0_13] : memref<144x648xbf16, #tpu.memory_space<vmem>>, vector<4x648xbf16>
    tpu.vector_store %arg11[%c16, %c0_13], %11 {strides = array<i32>} : memref<144x648xbf16, #tpu.memory_space<vmem>>, vector<4x648xbf16>,
    %c0_14 = arith.constant 0 : index
    %c129 = arith.constant 129 : index
    %13 = vector.load %arg1[%c0_14, %c129] : memref<4x904xbf16, #tpu.memory_space<vmem>>, vector<4x648xbf16>
    %c20 = arith.constant 20 : index
    %c0_15 = arith.constant 0 : index
    %14 = vector.load %arg11[%c20, %c0_15] : memref<144x648xbf16, #tpu.memory_space<vmem>>, vector<4x648xbf16>
    tpu.vector_store %arg11[%c20, %c0_15], %13 {strides = array<i32>} : memref<144x648xbf16, #tpu.memory_space<vmem>>, vector<4x648xbf16>,
    %c0_16 = arith.constant 0 : index
    %c145 = arith.constant 145 : index
    %15 = vector.load %arg1[%c0_16, %c145] : memref<4x904xbf16, #tpu.memory_space<vmem>>, vector<4x648xbf16>
    %c24 = arith.constant 24 : index
    %c0_17 = arith.constant 0 : index
    %16 = vector.load %arg11[%c24, %c0_17] : memref<144x648xbf16, #tpu.memory_space<vmem>>, vector<4x648xbf16>
    tpu.vector_store %arg11[%c24, %c0_17], %15 {strides = array<i32>} : memref<144x648xbf16, #tpu.memory_space<vmem>>, vector<4x648xbf16>,
    %c0_18 = arith.constant 0 : index
    %c146 = arith.constant 146 : index
    %17 = vector.load %arg1[%c0_18, %c146] : memref<4x904xbf16, #tpu.memory_space<vmem>>, vector<4x648xbf16>
    %c28 = arith.constant 28 : index
    %c0_19 = arith.constant 0 : index
    %18 = vector.load %arg11[%c28, %c0_19] : memref<144x648xbf16, #tpu.memory_space<vmem>>, vector<4x648xbf16>
    tpu.vector_store %arg11[%c28, %c0_19], %17 {strides = array<i32>} : memref<144x648xbf16, #tpu.memory_space<vmem>>, vector<4x648xbf16>,
    %c0_20 = arith.constant 0 : index
    %c147 = arith.constant 147 : index
    %19 = vector.load %arg1[%c0_20, %c147] : memref<4x904xbf16, #tpu.memory_space<vmem>>, vector<4x648xbf16>
    %c32 = arith.constant 32 : index
    %c0_21 = arith.constant 0 : index
    %20 = vector.load %arg11[%c32, %c0_21] : memref<144x648xbf16, #tpu.memory_space<vmem>>, vector<4x648xbf16>
    tpu.vector_store %arg11[%c32, %c0_21], %19 {strides = array<i32>} : memref<144x648xbf16, #tpu.memory_space<vmem>>, vector<4x648xbf16>,
    %c0_22 = arith.constant 0 : index
    %c0_23 = arith.constant 0 : index
    %21 = vector.load %arg2[%c0_22, %c0_23] : memref<16x36xbf16, #tpu.memory_space<vmem>>, vector<16x36xbf16>
    %c0_24 = arith.constant 0 : index
    %c0_25 = arith.constant 0 : index
    %22 = vector.load %arg11[%c0_24, %c0_25] : memref<144x648xbf16, #tpu.memory_space<vmem>>, vector<36x648xbf16>
    %cst_26 = arith.constant dense<0.000000e+00> : vector<16x648xf32>
    %23 = tpu.matmul %21, %22, %cst_26 {dimension_numbers = #tpu.dot_dimension_numbers<[1], [0], [0], [1], [0, 0, 1, 1], [], []>} : vector<16x36xbf16>, vector<36x648xbf16>, vector<16x648xf32> -> vector<16x648xf32>
    %24 = vector.broadcast %0 : vector<1x648xf32> to vector<16x648xf32>
    %25 = arith.mulf %23, %24 : vector<16x648xf32>
    %cst_27 = arith.constant dense<0.000000e+00> : vector<16xf32>
    %26 = vector.multi_reduction <add>, %25, %cst_27 [1] : vector<16x648xf32> to vector<16xf32>
    %27 = vector.shape_cast %26 : vector<16xf32> to vector<16x1xf32>
    %cst_28 = arith.constant 0.001953125 : f32
    %28 = vector.broadcast %cst_28 : f32 to vector<16x1xf32>
    %29 = arith.mulf %27, %28 : vector<16x1xf32>
    %30 = arith.mulf %25, %25 : vector<16x648xf32>
    %cst_29 = arith.constant dense<0.000000e+00> : vector<16xf32>
    %31 = vector.multi_reduction <add>, %30, %cst_29 [1] : vector<16x648xf32> to vector<16xf32>
    %32 = vector.shape_cast %31 : vector<16xf32> to vector<16x1xf32>
    %cst_30 = arith.constant 0.001953125 : f32
    %33 = vector.broadcast %cst_30 : f32 to vector<16x1xf32>
    %34 = arith.mulf %32, %33 : vector<16x1xf32>
    %35 = arith.mulf %29, %29 : vector<16x1xf32>
    %36 = arith.subf %34, %35 : vector<16x1xf32>
    %cst_31 = arith.constant 0.000000e+00 : f32
    %37 = vector.broadcast %cst_31 : f32 to vector<16x1xf32>
    %38 = arith.maximumf %36, %37 : vector<16x1xf32>
    %c0_32 = arith.constant 0 : index
    %c0_33 = arith.constant 0 : index
    %39 = vector.load %arg3[%c0_32, %c0_33] : memref<16x2xf32, #tpu.memory_space<vmem>>, vector<16x2xf32>
    %40 = vector.extract_strided_slice %39 {offsets = [0, 0], sizes = [16, 1], strides = [1, 1]} : vector<16x2xf32> to vector<16x1xf32>
    %cst_34 = arith.constant 9.99999974E-6 : f32
    %41 = vector.broadcast %cst_34 : f32 to vector<16x1xf32>
    %42 = arith.addf %38, %41 : vector<16x1xf32>
    %43 = math.rsqrt %42 : vector<16x1xf32>
    %44 = arith.mulf %40, %43 : vector<16x1xf32>
    %45 = vector.broadcast %44 : vector<16x1xf32> to vector<16x648xf32>
    %46 = arith.mulf %23, %45 : vector<16x648xf32>
    %47 = vector.extract_strided_slice %39 {offsets = [0, 1], sizes = [16, 1], strides = [1, 1]} : vector<16x2xf32> to vector<16x1xf32>
    %48 = arith.mulf %29, %44 : vector<16x1xf32>
    %49 = arith.subf %47, %48 : vector<16x1xf32>
    %50 = vector.broadcast %49 : vector<16x1xf32> to vector<16x648xf32>
    %51 = arith.addf %46, %50 : vector<16x648xf32>
    %cst_35 = arith.constant 0.000000e+00 : f32
    %52 = vector.broadcast %cst_35 : f32 to vector<16x648xf32>
    %53 = arith.maximumf %51, %52 : vector<16x648xf32>
    %54 = vector.broadcast %0 : vector<1x648xf32> to vector<16x648xf32>
    %55 = arith.mulf %53, %54 : vector<16x648xf32>
    %56 = arith.truncf %55 : vector<16x648xf32> to vector<16x648xbf16>
    %c0_36 = arith.constant 0 : index
    %c128_37 = arith.constant 128 : index
    %57 = vector.load %arg10[%c0_36, %c128_37] : memref<16x904xbf16, #tpu.memory_space<vmem>>, vector<16x648xbf16>
    tpu.vector_store %arg10[%c0_36, %c128_37], %56 {strides = array<i32>} : memref<16x904xbf16, #tpu.memory_space<vmem>>, vector<16x648xbf16>,
    %c0_38 = arith.constant 0 : index
    %c0_39 = arith.constant 0 : index
    %58 = vector.load %arg12[%c0_38, %c0_39] : memref<16x648xf32, #tpu.memory_space<vmem>>, vector<16x648xf32>
    tpu.vector_store %arg12[%c0_38, %c0_39], %55 {strides = array<i32>} : memref<16x648xf32, #tpu.memory_space<vmem>>, vector<16x648xf32>,
    %c0_40 = arith.constant 0 : index
    %c109_41 = arith.constant 109 : index
    %59 = vector.load %arg10[%c0_40, %c109_41] : memref<16x904xbf16, #tpu.memory_space<vmem>>, vector<16x648xbf16>
    %c0_42 = arith.constant 0 : index
    %c0_43 = arith.constant 0 : index
    %60 = vector.load %arg11[%c0_42, %c0_43] : memref<144x648xbf16, #tpu.memory_space<vmem>>, vector<16x648xbf16>
    tpu.vector_store %arg11[%c0_42, %c0_43], %59 {strides = array<i32>} : memref<144x648xbf16, #tpu.memory_space<vmem>>, vector<16x648xbf16>,
    %c0_44 = arith.constant 0 : index
    %c110_45 = arith.constant 110 : index
    %61 = vector.load %arg10[%c0_44, %c110_45] : memref<16x904xbf16, #tpu.memory_space<vmem>>, vector<16x648xbf16>
    %c16_46 = arith.constant 16 : index
    %c0_47 = arith.constant 0 : index
    %62 = vector.load %arg11[%c16_46, %c0_47] : memref<144x648xbf16, #tpu.memory_space<vmem>>, vector<16x648xbf16>
    tpu.vector_store %arg11[%c16_46, %c0_47], %61 {strides = array<i32>} : memref<144x648xbf16, #tpu.memory_space<vmem>>, vector<16x648xbf16>,
    %c0_48 = arith.constant 0 : index
    %c111_49 = arith.constant 111 : index
    %63 = vector.load %arg10[%c0_48, %c111_49] : memref<16x904xbf16, #tpu.memory_space<vmem>>, vector<16x648xbf16>
    %c32_50 = arith.constant 32 : index
    %c0_51 = arith.constant 0 : index
    %64 = vector.load %arg11[%c32_50, %c0_51] : memref<144x648xbf16, #tpu.memory_space<vmem>>, vector<16x648xbf16>
    tpu.vector_store %arg11[%c32_50, %c0_51], %63 {strides = array<i32>} : memref<144x648xbf16, #tpu.memory_space<vmem>>, vector<16x648xbf16>,
    %c0_52 = arith.constant 0 : index
    %c127_53 = arith.constant 127 : index
    %65 = vector.load %arg10[%c0_52, %c127_53] : memref<16x904xbf16, #tpu.memory_space<vmem>>, vector<16x648xbf16>
    %c48 = arith.constant 48 : index
    %c0_54 = arith.constant 0 : index
    %66 = vector.load %arg11[%c48, %c0_54] : memref<144x648xbf16, #tpu.memory_space<vmem>>, vector<16x648xbf16>
    tpu.vector_store %arg11[%c48, %c0_54], %65 {strides = array<i32>} : memref<144x648xbf16, #tpu.memory_space<vmem>>, vector<16x648xbf16>,
    %c0_55 = arith.constant 0 : index
    %c128_56 = arith.constant 128 : index
    %67 = vector.load %arg10[%c0_55, %c128_56] : memref<16x904xbf16, #tpu.memory_space<vmem>>, vector<16x648xbf16>
    %c64 = arith.constant 64 : index
    %c0_57 = arith.constant 0 : index
    %68 = vector.load %arg11[%c64, %c0_57] : memref<144x648xbf16, #tpu.memory_space<vmem>>, vector<16x648xbf16>
    tpu.vector_store %arg11[%c64, %c0_57], %67 {strides = array<i32>} : memref<144x648xbf16, #tpu.memory_space<vmem>>, vector<16x648xbf16>,
    %c0_58 = arith.constant 0 : index
    %c129_59 = arith.constant 129 : index
    %69 = vector.load %arg10[%c0_58, %c129_59] : memref<16x904xbf16, #tpu.memory_space<vmem>>, vector<16x648xbf16>
    %c80 = arith.constant 80 : index
    %c0_60 = arith.constant 0 : index
    %70 = vector.load %arg11[%c80, %c0_60] : memref<144x648xbf16, #tpu.memory_space<vmem>>, vector<16x648xbf16>
    tpu.vector_store %arg11[%c80, %c0_60], %69 {strides = array<i32>} : memref<144x648xbf16, #tpu.memory_space<vmem>>, vector<16x648xbf16>,
    %c0_61 = arith.constant 0 : index
    %c145_62 = arith.constant 145 : index
    %71 = vector.load %arg10[%c0_61, %c145_62] : memref<16x904xbf16, #tpu.memory_space<vmem>>, vector<16x648xbf16>
    %c96 = arith.constant 96 : index
    %c0_63 = arith.constant 0 : index
    %72 = vector.load %arg11[%c96, %c0_63] : memref<144x648xbf16, #tpu.memory_space<vmem>>, vector<16x648xbf16>
    tpu.vector_store %arg11[%c96, %c0_63], %71 {strides = array<i32>} : memref<144x648xbf16, #tpu.memory_space<vmem>>, vector<16x648xbf16>,
    %c0_64 = arith.constant 0 : index
    %c146_65 = arith.constant 146 : index
    %73 = vector.load %arg10[%c0_64, %c146_65] : memref<16x904xbf16, #tpu.memory_space<vmem>>, vector<16x648xbf16>
    %c112 = arith.constant 112 : index
    %c0_66 = arith.constant 0 : index
    %74 = vector.load %arg11[%c112, %c0_66] : memref<144x648xbf16, #tpu.memory_space<vmem>>, vector<16x648xbf16>
    tpu.vector_store %arg11[%c112, %c0_66], %73 {strides = array<i32>} : memref<144x648xbf16, #tpu.memory_space<vmem>>, vector<16x648xbf16>,
    %c0_67 = arith.constant 0 : index
    %c147_68 = arith.constant 147 : index
    %75 = vector.load %arg10[%c0_67, %c147_68] : memref<16x904xbf16, #tpu.memory_space<vmem>>, vector<16x648xbf16>
    %c128_69 = arith.constant 128 : index
    %c0_70 = arith.constant 0 : index
    %76 = vector.load %arg11[%c128_69, %c0_70] : memref<144x648xbf16, #tpu.memory_space<vmem>>, vector<16x648xbf16>
    tpu.vector_store %arg11[%c128_69, %c0_70], %75 {strides = array<i32>} : memref<144x648xbf16, #tpu.memory_space<vmem>>, vector<16x648xbf16>,
    %c0_71 = arith.constant 0 : index
    %c0_72 = arith.constant 0 : index
    %77 = vector.load %arg4[%c0_71, %c0_72] : memref<16x144xbf16, #tpu.memory_space<vmem>>, vector<16x144xbf16>
    %c0_73 = arith.constant 0 : index
    %c0_74 = arith.constant 0 : index
    %78 = vector.load %arg11[%c0_73, %c0_74] : memref<144x648xbf16, #tpu.memory_space<vmem>>, vector<144x648xbf16>
    %cst_75 = arith.constant dense<0.000000e+00> : vector<16x648xf32>
    %79 = tpu.matmul %77, %78, %cst_75 {dimension_numbers = #tpu.dot_dimension_numbers<[1], [0], [0], [1], [0, 0, 1, 1], [], []>} : vector<16x144xbf16>, vector<144x648xbf16>, vector<16x648xf32> -> vector<16x648xf32>
    %80 = vector.broadcast %0 : vector<1x648xf32> to vector<16x648xf32>
    %81 = arith.mulf %79, %80 : vector<16x648xf32>
    %cst_76 = arith.constant dense<0.000000e+00> : vector<16xf32>
    %82 = vector.multi_reduction <add>, %81, %cst_76 [1] : vector<16x648xf32> to vector<16xf32>
    %83 = vector.shape_cast %82 : vector<16xf32> to vector<16x1xf32>
    %cst_77 = arith.constant 0.001953125 : f32
    %84 = vector.broadcast %cst_77 : f32 to vector<16x1xf32>
    %85 = arith.mulf %83, %84 : vector<16x1xf32>
    %86 = arith.mulf %81, %81 : vector<16x648xf32>
    %cst_78 = arith.constant dense<0.000000e+00> : vector<16xf32>
    %87 = vector.multi_reduction <add>, %86, %cst_78 [1] : vector<16x648xf32> to vector<16xf32>
    %88 = vector.shape_cast %87 : vector<16xf32> to vector<16x1xf32>
    %cst_79 = arith.constant 0.001953125 : f32
    %89 = vector.broadcast %cst_79 : f32 to vector<16x1xf32>
    %90 = arith.mulf %88, %89 : vector<16x1xf32>
    %91 = arith.mulf %85, %85 : vector<16x1xf32>
    %92 = arith.subf %90, %91 : vector<16x1xf32>
    %cst_80 = arith.constant 0.000000e+00 : f32
    %93 = vector.broadcast %cst_80 : f32 to vector<16x1xf32>
    %94 = arith.maximumf %92, %93 : vector<16x1xf32>
    %c0_81 = arith.constant 0 : index
    %c0_82 = arith.constant 0 : index
    %95 = vector.load %arg5[%c0_81, %c0_82] : memref<16x2xf32, #tpu.memory_space<vmem>>, vector<16x2xf32>
    %96 = vector.extract_strided_slice %95 {offsets = [0, 0], sizes = [16, 1], strides = [1, 1]} : vector<16x2xf32> to vector<16x1xf32>
    %cst_83 = arith.constant 9.99999974E-6 : f32
    %97 = vector.broadcast %cst_83 : f32 to vector<16x1xf32>
    %98 = arith.addf %94, %97 : vector<16x1xf32>
    %99 = math.rsqrt %98 : vector<16x1xf32>
    %100 = arith.mulf %96, %99 : vector<16x1xf32>
    %101 = vector.broadcast %100 : vector<16x1xf32> to vector<16x648xf32>
    %102 = arith.mulf %79, %101 : vector<16x648xf32>
    %103 = vector.extract_strided_slice %95 {offsets = [0, 1], sizes = [16, 1], strides = [1, 1]} : vector<16x2xf32> to vector<16x1xf32>
    %104 = arith.mulf %85, %100 : vector<16x1xf32>
    %105 = arith.subf %103, %104 : vector<16x1xf32>
    %106 = vector.broadcast %105 : vector<16x1xf32> to vector<16x648xf32>
    %107 = arith.addf %102, %106 : vector<16x648xf32>
    %c0_84 = arith.constant 0 : index
    %c0_85 = arith.constant 0 : index
    %108 = vector.load %arg12[%c0_84, %c0_85] : memref<16x648xf32, #tpu.memory_space<vmem>>, vector<16x648xf32>
    %109 = arith.addf %107, %108 : vector<16x648xf32>
    %cst_86 = arith.constant 0.000000e+00 : f32
    %110 = vector.broadcast %cst_86 : f32 to vector<16x648xf32>
    %111 = arith.maximumf %109, %110 : vector<16x648xf32>
    %112 = vector.broadcast %0 : vector<1x648xf32> to vector<16x648xf32>
    %113 = arith.mulf %111, %112 : vector<16x648xf32>
    %114 = arith.truncf %113 : vector<16x648xf32> to vector<16x648xbf16>
    %c0_87 = arith.constant 0 : index
    %c128_88 = arith.constant 128 : index
    %115 = vector.load %arg10[%c0_87, %c128_88] : memref<16x904xbf16, #tpu.memory_space<vmem>>, vector<16x648xbf16>
    tpu.vector_store %arg10[%c0_87, %c128_88], %114 {strides = array<i32>} : memref<16x904xbf16, #tpu.memory_space<vmem>>, vector<16x648xbf16>,
    %c0_89 = arith.constant 0 : index
    %c109_90 = arith.constant 109 : index
    %116 = vector.load %arg10[%c0_89, %c109_90] : memref<16x904xbf16, #tpu.memory_space<vmem>>, vector<16x648xbf16>
    %c0_91 = arith.constant 0 : index
    %c0_92 = arith.constant 0 : index
    %117 = vector.load %arg11[%c0_91, %c0_92] : memref<144x648xbf16, #tpu.memory_space<vmem>>, vector<16x648xbf16>
    tpu.vector_store %arg11[%c0_91, %c0_92], %116 {strides = array<i32>} : memref<144x648xbf16, #tpu.memory_space<vmem>>, vector<16x648xbf16>,
    %c0_93 = arith.constant 0 : index
    %c110_94 = arith.constant 110 : index
    %118 = vector.load %arg10[%c0_93, %c110_94] : memref<16x904xbf16, #tpu.memory_space<vmem>>, vector<16x648xbf16>
    %c16_95 = arith.constant 16 : index
    %c0_96 = arith.constant 0 : index
    %119 = vector.load %arg11[%c16_95, %c0_96] : memref<144x648xbf16, #tpu.memory_space<vmem>>, vector<16x648xbf16>
    tpu.vector_store %arg11[%c16_95, %c0_96], %118 {strides = array<i32>} : memref<144x648xbf16, #tpu.memory_space<vmem>>, vector<16x648xbf16>,
    %c0_97 = arith.constant 0 : index
    %c111_98 = arith.constant 111 : index
    %120 = vector.load %arg10[%c0_97, %c111_98] : memref<16x904xbf16, #tpu.memory_space<vmem>>, vector<16x648xbf16>
    %c32_99 = arith.constant 32 : index
    %c0_100 = arith.constant 0 : index
    %121 = vector.load %arg11[%c32_99, %c0_100] : memref<144x648xbf16, #tpu.memory_space<vmem>>, vector<16x648xbf16>
    tpu.vector_store %arg11[%c32_99, %c0_100], %120 {strides = array<i32>} : memref<144x648xbf16, #tpu.memory_space<vmem>>, vector<16x648xbf16>,
    %c0_101 = arith.constant 0 : index
    %c127_102 = arith.constant 127 : index
    %122 = vector.load %arg10[%c0_101, %c127_102] : memref<16x904xbf16, #tpu.memory_space<vmem>>, vector<16x648xbf16>
    %c48_103 = arith.constant 48 : index
    %c0_104 = arith.constant 0 : index
    %123 = vector.load %arg11[%c48_103, %c0_104] : memref<144x648xbf16, #tpu.memory_space<vmem>>, vector<16x648xbf16>
    tpu.vector_store %arg11[%c48_103, %c0_104], %122 {strides = array<i32>} : memref<144x648xbf16, #tpu.memory_space<vmem>>, vector<16x648xbf16>,
    %c0_105 = arith.constant 0 : index
    %c128_106 = arith.constant 128 : index
    %124 = vector.load %arg10[%c0_105, %c128_106] : memref<16x904xbf16, #tpu.memory_space<vmem>>, vector<16x648xbf16>
    %c64_107 = arith.constant 64 : index
    %c0_108 = arith.constant 0 : index
    %125 = vector.load %arg11[%c64_107, %c0_108] : memref<144x648xbf16, #tpu.memory_space<vmem>>, vector<16x648xbf16>
    tpu.vector_store %arg11[%c64_107, %c0_108], %124 {strides = array<i32>} : memref<144x648xbf16, #tpu.memory_space<vmem>>, vector<16x648xbf16>,
    %c0_109 = arith.constant 0 : index
    %c129_110 = arith.constant 129 : index
    %126 = vector.load %arg10[%c0_109, %c129_110] : memref<16x904xbf16, #tpu.memory_space<vmem>>, vector<16x648xbf16>
    %c80_111 = arith.constant 80 : index
    %c0_112 = arith.constant 0 : index
    %127 = vector.load %arg11[%c80_111, %c0_112] : memref<144x648xbf16, #tpu.memory_space<vmem>>, vector<16x648xbf16>
    tpu.vector_store %arg11[%c80_111, %c0_112], %126 {strides = array<i32>} : memref<144x648xbf16, #tpu.memory_space<vmem>>, vector<16x648xbf16>,
    %c0_113 = arith.constant 0 : index
    %c145_114 = arith.constant 145 : index
    %128 = vector.load %arg10[%c0_113, %c145_114] : memref<16x904xbf16, #tpu.memory_space<vmem>>, vector<16x648xbf16>
    %c96_115 = arith.constant 96 : index
    %c0_116 = arith.constant 0 : index
    %129 = vector.load %arg11[%c96_115, %c0_116] : memref<144x648xbf16, #tpu.memory_space<vmem>>, vector<16x648xbf16>
    tpu.vector_store %arg11[%c96_115, %c0_116], %128 {strides = array<i32>} : memref<144x648xbf16, #tpu.memory_space<vmem>>, vector<16x648xbf16>,
    %c0_117 = arith.constant 0 : index
    %c146_118 = arith.constant 146 : index
    %130 = vector.load %arg10[%c0_117, %c146_118] : memref<16x904xbf16, #tpu.memory_space<vmem>>, vector<16x648xbf16>
    %c112_119 = arith.constant 112 : index
    %c0_120 = arith.constant 0 : index
    %131 = vector.load %arg11[%c112_119, %c0_120] : memref<144x648xbf16, #tpu.memory_space<vmem>>, vector<16x648xbf16>
    tpu.vector_store %arg11[%c112_119, %c0_120], %130 {strides = array<i32>} : memref<144x648xbf16, #tpu.memory_space<vmem>>, vector<16x648xbf16>,
    %c0_121 = arith.constant 0 : index
    %c147_122 = arith.constant 147 : index
    %132 = vector.load %arg10[%c0_121, %c147_122] : memref<16x904xbf16, #tpu.memory_space<vmem>>, vector<16x648xbf16>
    %c128_123 = arith.constant 128 : index
    %c0_124 = arith.constant 0 : index
    %133 = vector.load %arg11[%c128_123, %c0_124] : memref<144x648xbf16, #tpu.memory_space<vmem>>, vector<16x648xbf16>
    tpu.vector_store %arg11[%c128_123, %c0_124], %132 {strides = array<i32>} : memref<144x648xbf16, #tpu.memory_space<vmem>>, vector<16x648xbf16>,
    %c0_125 = arith.constant 0 : index
    %c0_126 = arith.constant 0 : index
    %134 = vector.load %arg6[%c0_125, %c0_126] : memref<32x144xbf16, #tpu.memory_space<vmem>>, vector<32x144xbf16>
    %c0_127 = arith.constant 0 : index
    %c0_128 = arith.constant 0 : index
    %135 = vector.load %arg11[%c0_127, %c0_128] : memref<144x648xbf16, #tpu.memory_space<vmem>>, vector<144x648xbf16>
    %cst_129 = arith.constant dense<0.000000e+00> : vector<32x648xf32>
    %136 = tpu.matmul %134, %135, %cst_129 {dimension_numbers = #tpu.dot_dimension_numbers<[1], [0], [0], [1], [0, 0, 1, 1], [], []>} : vector<32x144xbf16>, vector<144x648xbf16>, vector<32x648xf32> -> vector<32x648xf32>
    %137 = vector.broadcast %0 : vector<1x648xf32> to vector<32x648xf32>
    %138 = arith.mulf %136, %137 : vector<32x648xf32>
    %cst_130 = arith.constant dense<0.000000e+00> : vector<32xf32>
    %139 = vector.multi_reduction <add>, %138, %cst_130 [1] : vector<32x648xf32> to vector<32xf32>
    %140 = vector.shape_cast %139 : vector<32xf32> to vector<32x1xf32>
    %cst_131 = arith.constant 0.001953125 : f32
    %141 = vector.broadcast %cst_131 : f32 to vector<32x1xf32>
    %142 = arith.mulf %140, %141 : vector<32x1xf32>
    %143 = arith.mulf %138, %138 : vector<32x648xf32>
    %cst_132 = arith.constant dense<0.000000e+00> : vector<32xf32>
    %144 = vector.multi_reduction <add>, %143, %cst_132 [1] : vector<32x648xf32> to vector<32xf32>
    %145 = vector.shape_cast %144 : vector<32xf32> to vector<32x1xf32>
    %cst_133 = arith.constant 0.001953125 : f32
    %146 = vector.broadcast %cst_133 : f32 to vector<32x1xf32>
    %147 = arith.mulf %145, %146 : vector<32x1xf32>
    %148 = arith.mulf %142, %142 : vector<32x1xf32>
    %149 = arith.subf %147, %148 : vector<32x1xf32>
    %cst_134 = arith.constant 0.000000e+00 : f32
    %150 = vector.broadcast %cst_134 : f32 to vector<32x1xf32>
    %151 = arith.maximumf %149, %150 : vector<32x1xf32>
    %c0_135 = arith.constant 0 : index
    %c0_136 = arith.constant 0 : index
    %152 = vector.load %arg7[%c0_135, %c0_136] : memref<32x2xf32, #tpu.memory_space<vmem>>, vector<32x2xf32>
    %153 = vector.extract_strided_slice %152 {offsets = [0, 0], sizes = [32, 1], strides = [1, 1]} : vector<32x2xf32> to vector<32x1xf32>
    %cst_137 = arith.constant 9.99999974E-6 : f32
    %154 = vector.broadcast %cst_137 : f32 to vector<32x1xf32>
    %155 = arith.addf %151, %154 : vector<32x1xf32>
    %156 = math.rsqrt %155 : vector<32x1xf32>
    %157 = arith.mulf %153, %156 : vector<32x1xf32>
    %158 = vector.broadcast %157 : vector<32x1xf32> to vector<32x648xf32>
    %159 = arith.mulf %136, %158 : vector<32x648xf32>
    %160 = vector.extract_strided_slice %152 {offsets = [0, 1], sizes = [32, 1], strides = [1, 1]} : vector<32x2xf32> to vector<32x1xf32>
    %161 = arith.mulf %142, %157 : vector<32x1xf32>
    %162 = arith.subf %160, %161 : vector<32x1xf32>
    %163 = vector.broadcast %162 : vector<32x1xf32> to vector<32x648xf32>
    %164 = arith.addf %159, %163 : vector<32x648xf32>
    %cst_138 = arith.constant 0.000000e+00 : f32
    %165 = vector.broadcast %cst_138 : f32 to vector<32x648xf32>
    %166 = arith.maximumf %164, %165 : vector<32x648xf32>
    %c0_139 = arith.constant 0 : index
    %c0_140 = arith.constant 0 : index
    %167 = vector.load %arg9[%c0_139, %c0_140] : memref<32x648xf32, #tpu.memory_space<vmem>>, vector<32x648xf32>
    tpu.vector_store %arg9[%c0_139, %c0_140], %166 {strides = array<i32>} : memref<32x648xf32, #tpu.memory_space<vmem>>, vector<32x648xf32>,
    return
  }
  func.func @transform_0(%arg0: i32) -> (i32, i32) {
    %c0_i32 = arith.constant 0 : i32
    %c0_i32_0 = arith.constant 0 : i32
    %c0_i32_1 = arith.constant 0 : i32
    return %c0_i32, %c0_i32_0 : i32, i32
  }
  func.func @transform_1(%arg0: i32) -> (i32, i32) {
    %c0_i32 = arith.constant 0 : i32
    %c0_i32_0 = arith.constant 0 : i32
    %c0_i32_1 = arith.constant 0 : i32
    return %c0_i32, %c0_i32_0 : i32, i32
  }
  func.func @transform_2(%arg0: i32) -> (i32, i32) {
    %c0_i32 = arith.constant 0 : i32
    %c0_i32_0 = arith.constant 0 : i32
    %c0_i32_1 = arith.constant 0 : i32
    return %c0_i32, %c0_i32_0 : i32, i32
  }
  func.func @transform_3(%arg0: i32) -> (i32, i32) {
    %c0_i32 = arith.constant 0 : i32
    %c0_i32_0 = arith.constant 0 : i32
    %c0_i32_1 = arith.constant 0 : i32
    return %c0_i32, %c0_i32_0 : i32, i32
  }
  func.func @transform_4(%arg0: i32) -> (i32, i32) {
    %c0_i32 = arith.constant 0 : i32
    %c0_i32_0 = arith.constant 0 : i32
    %c0_i32_1 = arith.constant 0 : i32
    return %c0_i32, %c0_i32_0 : i32, i32
  }
  func.func @transform_5(%arg0: i32) -> (i32, i32) {
    %c0_i32 = arith.constant 0 : i32
    %c0_i32_0 = arith.constant 0 : i32
    %c0_i32_1 = arith.constant 0 : i32
    return %c0_i32, %c0_i32_0 : i32, i32
  }
  func.func @transform_6(%arg0: i32) -> (i32, i32) {
    %c0_i32 = arith.constant 0 : i32
    %c0_i32_0 = arith.constant 0 : i32
    %c0_i32_1 = arith.constant 0 : i32
    return %c0_i32, %c0_i32_0 : i32, i32
  }
  func.func @transform_7(%arg0: i32) -> (i32, i32) {
    %c0_i32 = arith.constant 0 : i32
    %c0_i32_0 = arith.constant 0 : i32
    %c0_i32_1 = arith.constant 0 : i32
    return %c0_i32, %c0_i32_0 : i32, i32
  }
  func.func @transform_8(%arg0: i32) -> (i32, i32) {
    %c0_i32 = arith.constant 0 : i32
    %c0_i32_0 = arith.constant 0 : i32
    %c0_i32_1 = arith.constant 0 : i32
    return %c0_i32, %c0_i32_0 : i32, i32
  }
}

</mosaic_0001>

<llo_original>
// kernel: _lambda_.1
$region0: #{_lambda_.1}
  #allocation0 [shape = 'u32[]', space=smem, size = 0x4, offset = 0x4, fixed_abs, tag = 'smem constant byte address 0x4 - core index']
  #allocation1 [shape = 'u32[144,128]{1,0:T(1,128)}', space=vmem, size = 0x12000, scoped, tag = 'internal scratch']
  #allocation2 [shape = 'bf16[16,904]{1,0:T(8,128)(2,1)}', space=vmem, size = 0x8000, scoped, tag = 'scratch operand']
  #allocation3 [shape = 'bf16[144,648]{1,0:T(8,128)(2,1)}', space=vmem, size = 0x36000, scoped, tag = 'scratch operand']
  #allocation4 [shape = 'f32[16,648]{1,0:T(8,128)}', space=vmem, size = 0xc000, scoped, tag = 'scratch operand']
  %s0 = inlined_call_operand.vmem [shape: bf16[4,904], index: 0, kind: input, shape index: {}]
  %s1 = inlined_call_operand.vmem [shape: bf16[16,36], index: 1, kind: input, shape index: {}]
  %s2 = inlined_call_operand.vmem [shape: f32[16,2], index: 2, kind: input, shape index: {}]
  %s3 = inlined_call_operand.vmem [shape: bf16[16,144], index: 3, kind: input, shape index: {}]
  %s4 = inlined_call_operand.vmem [shape: f32[16,2], index: 4, kind: input, shape index: {}]
  %s5 = inlined_call_operand.vmem [shape: bf16[32,144], index: 5, kind: input, shape index: {}]
  %s6 = inlined_call_operand.vmem [shape: f32[32,2], index: 6, kind: input, shape index: {}]
  %s7 = inlined_call_operand.vmem [shape: f32[1,648], index: 7, kind: input, shape index: {}]
  %s8 = inlined_call_operand.vmem [shape: f32[32,648], index: 8, kind: output, shape index: {}]
  %s9 = sld [smem:[#allocation0]]
  $region42: #{_lambda_.1} parent=0
    _
  %s11 = ssub.s32 1, %s9
  %s12 = scalar_select 0, %s11, %s9
  // Predicated region
  $region2: #{_lambda_.1} parent=0 // pred_check
    _
  $region3: #{_lambda_.1} parent=0 // pred_check_branch
    %14 = sbr.rel (0) target = $region5
  $region4: #{_lambda_.1} parent=0 // pred_region
    _
  $region5: #{_lambda_.1} parent=0 // pred_fallthru
    _
  // Predicated region
  $region6: #{_lambda_.1} parent=0 // pred_check
    _
  $region7: #{_lambda_.1} parent=0 // pred_check_branch
    %16 = sbr.rel (0) target = $region9
  $region8: #{_lambda_.1} parent=0 // pred_region
    _
  $region9: #{_lambda_.1} parent=0 // pred_fallthru
    _
  // Predicated region
  $region10: #{_lambda_.1} parent=0 // pred_check
    _
  $region11: #{_lambda_.1} parent=0 // pred_check_branch
    %18 = sbr.rel (0) target = $region13
  $region12: #{_lambda_.1} parent=0 // pred_region
    _
  $region13: #{_lambda_.1} parent=0 // pred_fallthru
    _
  // Predicated region
  $region14: #{_lambda_.1} parent=0 // pred_check
    _
  $region15: #{_lambda_.1} parent=0 // pred_check_branch
    %20 = sbr.rel (0) target = $region17
  $region16: #{_lambda_.1} parent=0 // pred_region
    _
  $region17: #{_lambda_.1} parent=0 // pred_fallthru
    _
  // Predicated region
  $region18: #{_lambda_.1} parent=0 // pred_check
    _
  $region19: #{_lambda_.1} parent=0 // pred_check_branch
    %22 = sbr.rel (0) target = $region21
  $region20: #{_lambda_.1} parent=0 // pred_region
    _
  $region21: #{_lambda_.1} parent=0 // pred_fallthru
    _
  // Predicated region
  $region22: #{_lambda_.1} parent=0 // pred_check
    _
  $region23: #{_lambda_.1} parent=0 // pred_check_branch
    %24 = sbr.rel (0) target = $region25
  $region24: #{_lambda_.1} parent=0 // pred_region
    _
  $region25: #{_lambda_.1} parent=0 // pred_fallthru
    _
  // Predicated region
  $region26: #{_lambda_.1} parent=0 // pred_check
    _
  $region27: #{_lambda_.1} parent=0 // pred_check_branch
    %26 = sbr.rel (0) target = $region29
  $region28: #{_lambda_.1} parent=0 // pred_region
    _
  $region29: #{_lambda_.1} parent=0 // pred_fallthru
    _
  // Predicated region
  $region30: #{_lambda_.1} parent=0 // pred_check
    _
  $region31: #{_lambda_.1} parent=0 // pred_check_branch
    %28 = sbr.rel (0) target = $region33
  $region32: #{_lambda_.1} parent=0 // pred_region
    _
  $region33: #{_lambda_.1} parent=0 // pred_fallthru
    _
  %v30 = vld [vmem:[%s7] sm:$0x3f]
  %31 = vst [vmem:[#allocation2] sm:$0xff] 0
  %32 = vst [vmem:[#allocation2 + $0x8] sm:$0xff] 0
  %33 = vst [vmem:[#allocation2 + $0x10] sm:$0xff] 0
  %vm34 = vcmask 1043456
  %vm35 = vcmask 64516
  %vm36 = vmor %vm35, %vm34
  %37 = vst.msk [vmem:[#allocation2 + $0x18] sm:$0xff] %vm36, 0
  %38 = vst [vmem:[#allocation2 + $0x20] sm:$0xff] 0
  %39 = vst [vmem:[#allocation2 + $0x28] sm:$0xff] 0
  %40 = vst [vmem:[#allocation2 + $0x30] sm:$0xff] 0
  %41 = vst.msk [vmem:[#allocation2 + $0x38] sm:$0xff] %vm36, 0
  %v42 = vld [vmem:[%s0] sm:$0xff]
  %v43 = vld [vmem:[%s0 + $0x8] sm:$0xf]
  %v46 = vcombine.high %v42, %v42
  %v48 = vunpack.c.l.s4 1983009808
  %v49 = vunpack.c.0.s8 %v48
  %v50 = vlaneseq
  %v51 = vshrl.u32 %v50, 7
  %v52 = vsub.s32 %v49, %v51
  %v53 = vrot.slane %v42, %v52
  %v55 = vunpack.c.l.s4 1983009808
  %v56 = vunpack.c.0.s8 %v55
  %v57 = vlaneseq
  %v58 = vshrl.u32 %v57, 7
  %v59 = vsub.s32 %v56, %v58
  %v60 = vrot.slane %v46, %v59
  %v62 = vunpack.c.l.s4 1983009808
  %v63 = vunpack.c.0.s8 %v62
  %v64 = vlaneseq
  %v65 = vshrl.u32 %v64, 7
  %v66 = vsub.s32 %v63, %v65
  %v67 = vrot.slane %v43, %v66
  %68 = vrot.lane.b32.xlu0 %v53, 19
  %v69 = vpop.permute.xlu0 %68
  %70 = vrot.lane.b32.xlu0 %v60, 19
  %v71 = vpop.permute.xlu0 %70
  %72 = vrot.lane.b32.xlu0 %v67, 19
  %v73 = vpop.permute.xlu0 %72
  %v74 = vrot.slane %v69, 4
  %v75 = vrot.slane %v71, 4
  %v76 = vrot.slane %v73, 4
  %vm77 = vcmask 1043456
  %v78 = vsel %vm77, %v74, %v75
  %vm79 = vcmask 154624
  %v80 = vsel %vm79, %v69, %v78
  %v81 = vsel %vm77, %v75, %v76
  %v82 = vsel %vm79, %v71, %v81
  %v83 = vsel %vm79, %v73, %v76
  %87 = vst [vmem:[#allocation3] sm:$0x33] %v80
  %88 = vst [vmem:[#allocation3 + $0x8] sm:$0x33] %v82
  %vm89 = vcmask 1041408
  %vm90 = vcmask 62468
  %vm91 = vmor %vm90, %vm89
  %92 = vst.msk [vmem:[#allocation3 + $0x10] sm:$0x33] %vm91, %v83
  %v93 = vld [vmem:[%s0] sm:$0xff]
  %v94 = vld [vmem:[%s0 + $0x8] sm:$0xf]
  %v97 = vcombine.low %v93, %v93
  %v99 = vunpack.c.l.s4 1983009808
  %v100 = vunpack.c.0.s8 %v99
  %v101 = vlaneseq
  %v102 = vshrl.u32 %v101, 7
  %v103 = vsub.s32 %v100, %v102
  %v104 = vrot.slane %v97, %v103
  %v106 = vunpack.c.l.s4 1983009808
  %v107 = vunpack.c.0.s8 %v106
  %v108 = vlaneseq
  %v109 = vshrl.u32 %v108, 7
  %v110 = vsub.s32 %v107, %v109
  %v111 = vrot.slane %v93, %v110
  %v112 = vcombine.low %v94, %v94
  %v114 = vunpack.c.l.s4 1983009808
  %v115 = vunpack.c.0.s8 %v114
  %v116 = vlaneseq
  %v117 = vshrl.u32 %v116, 7
  %v118 = vsub.s32 %v115, %v117
  %v119 = vrot.slane %v112, %v118
  %120 = vrot.lane.b32.xlu0 %v104, 18
  %v121 = vpop.permute.xlu0 %120
  %122 = vrot.lane.b32.xlu0 %v111, 18
  %v123 = vpop.permute.xlu0 %122
  %124 = vrot.lane.b32.xlu0 %v119, 18
  %v125 = vpop.permute.xlu0 %124
  %v126 = vrot.slane %v121, 4
  %v127 = vrot.slane %v123, 4
  %v128 = vrot.slane %v125, 4
  %v129 = vsel %vm77, %v126, %v127
  %vm130 = vcmask 146432
  %v131 = vsel %vm130, %v121, %v129
  %v132 = vsel %vm77, %v127, %v128
  %v133 = vsel %vm130, %v123, %v132
  %v134 = vsel %vm130, %v125, %v128
  %138 = vst [vmem:[#allocation3] sm:$0xcc] %v131
  %139 = vst [vmem:[#allocation3 + $0x8] sm:$0xcc] %v133
  %vm140 = vcmask 1043458
  %vm141 = vcmask 64518
  %vm142 = vmor %vm141, %vm140
  %143 = vst.msk [vmem:[#allocation3 + $0x10] sm:$0xcc] %vm142, %v134
  %v144 = vld [vmem:[%s0] sm:$0xff]
  %v145 = vld [vmem:[%s0 + $0x8] sm:$0xf]
  %v148 = vcombine.high %v144, %v144
  %v150 = vunpack.c.l.s4 1983009808
  %v151 = vunpack.c.0.s8 %v150
  %v152 = vlaneseq
  %v153 = vshrl.u32 %v152, 7
  %v154 = vsub.s32 %v151, %v153
  %v155 = vrot.slane %v144, %v154
  %v157 = vunpack.c.l.s4 1983009808
  %v158 = vunpack.c.0.s8 %v157
  %v159 = vlaneseq
  %v160 = vshrl.u32 %v159, 7
  %v161 = vsub.s32 %v158, %v160
  %v162 = vrot.slane %v148, %v161
  %v164 = vunpack.c.l.s4 1983009808
  %v165 = vunpack.c.0.s8 %v164
  %v166 = vlaneseq
  %v167 = vshrl.u32 %v166, 7
  %v168 = vsub.s32 %v165, %v167
  %v169 = vrot.slane %v145, %v168
  %170 = vrot.lane.b32.xlu0 %v155, 17
  %v171 = vpop.permute.xlu0 %170
  %172 = vrot.lane.b32.xlu0 %v162, 17
  %v173 = vpop.permute.xlu0 %172
  %174 = vrot.lane.b32.xlu0 %v169, 17
  %v175 = vpop.permute.xlu0 %174
  %v176 = vrot.slane %v171, 4
  %v177 = vrot.slane %v173, 4
  %v178 = vrot.slane %v175, 4
  %v179 = vsel %vm77, %v176, %v177
  %vm180 = vcmask 138240
  %v181 = vsel %vm180, %v171, %v179
  %v182 = vsel %vm77, %v177, %v178
  %v183 = vsel %vm180, %v173, %v182
  %v184 = vsel %vm180, %v175, %v178
  %188 = vst [vmem:[#allocation3 + $0x18] sm:$0x33] %v181
  %189 = vst [vmem:[#allocation3 + $0x20] sm:$0x33] %v183
  %190 = vst.msk [vmem:[#allocation3 + $0x28] sm:$0x33] %vm91, %v184
  %v191 = vld [vmem:[%s0] sm:$0xff]
  %v192 = vld [vmem:[%s0 + $0x8] sm:$0x3f]
  %v195 = vcombine.low %v191, %v191
  %v197 = vunpack.c.l.s4 1983009808
  %v198 = vunpack.c.0.s8 %v197
  %v199 = vlaneseq
  %v200 = vshrl.u32 %v199, 7
  %v201 = vsub.s32 %v198, %v200
  %v202 = vrot.slane %v195, %v201
  %v204 = vunpack.c.l.s4 1983009808
  %v205 = vunpack.c.0.s8 %v204
  %v206 = vlaneseq
  %v207 = vshrl.u32 %v206, 7
  %v208 = vsub.s32 %v205, %v207
  %v209 = vrot.slane %v191, %v208
  %v210 = vcombine.low %v192, %v192
  %v212 = vunpack.c.l.s4 1983009808
  %v213 = vunpack.c.0.s8 %v212
  %v214 = vlaneseq
  %v215 = vshrl.u32 %v214, 7
  %v216 = vsub.s32 %v213, %v215
  %v217 = vrot.slane %v210, %v216
  %v219 = vunpack.c.l.s4 1983009808
  %v220 = vunpack.c.0.s8 %v219
  %v221 = vlaneseq
  %v222 = vshrl.u32 %v221, 7
  %v223 = vsub.s32 %v220, %v222
  %v224 = vrot.slane %v192, %v223
  %225 = vrot.lane.b32.xlu0 %v202, 1
  %v226 = vpop.permute.xlu0 %225
  %227 = vrot.lane.b32.xlu0 %v209, 1
  %v228 = vpop.permute.xlu0 %227
  %229 = vrot.lane.b32.xlu0 %v217, 1
  %v230 = vpop.permute.xlu0 %229
  %231 = vrot.lane.b32.xlu0 %v224, 1
  %v232 = vpop.permute.xlu0 %231
  %v233 = vrot.slane %v226, 4
  %v234 = vrot.slane %v228, 4
  %v235 = vrot.slane %v230, 4
  %v236 = vrot.slane %v232, 4
  %v237 = vsel %vm77, %v233, %v234
  %vm238 = vcmask 7168
  %v239 = vsel %vm238, %v226, %v237
  %v240 = vsel %vm77, %v234, %v235
  %v241 = vsel %vm238, %v228, %v240
  %v242 = vsel %vm77, %v235, %v236
  %v243 = vsel %vm238, %v230, %v242
  %247 = vst [vmem:[#allocation3 + $0x18] sm:$0xcc] %v239
  %248 = vst [vmem:[#allocation3 + $0x20] sm:$0xcc] %v241
  %249 = vst.msk [vmem:[#allocation3 + $0x28] sm:$0xcc] %vm142, %v243
  %v250 = vld [vmem:[%s0 + $0x2] sm:$0xff]
  %v251 = vld [vmem:[%s0 + $0xa] sm:$0xf]
  %v254 = vcombine.high %v250, %v250
  %v256 = vunpack.c.l.s4 1983009808
  %v257 = vunpack.c.0.s8 %v256
  %v258 = vlaneseq
  %v259 = vshrl.u32 %v258, 7
  %v260 = vsub.s32 %v257, %v259
  %v261 = vrot.slane %v250, %v260
  %v263 = vunpack.c.l.s4 1983009808
  %v264 = vunpack.c.0.s8 %v263
  %v265 = vlaneseq
  %v266 = vshrl.u32 %v265, 7
  %v267 = vsub.s32 %v264, %v266
  %v268 = vrot.slane %v254, %v267
  %v270 = vunpack.c.l.s4 1983009808
  %v271 = vunpack.c.0.s8 %v270
  %v272 = vlaneseq
  %v273 = vshrl.u32 %v272, 7
  %v274 = vsub.s32 %v271, %v273
  %v275 = vrot.slane %v251, %v274
  %279 = vst [vmem:[#allocation3 + $0x30] sm:$0x33] %v261
  %280 = vst [vmem:[#allocation3 + $0x38] sm:$0x33] %v268
  %281 = vst.msk [vmem:[#allocation3 + $0x40] sm:$0x33] %vm91, %v275
  %v282 = vld [vmem:[%s0 + $0x2] sm:$0xff]
  %v283 = vld [vmem:[%s0 + $0xa] sm:$0xf]
  %v286 = vcombine.low %v282, %v282
  %v288 = vunpack.c.l.s4 1983009808
  %v289 = vunpack.c.0.s8 %v288
  %v290 = vlaneseq
  %v291 = vshrl.u32 %v290, 7
  %v292 = vsub.s32 %v289, %v291
  %v293 = vrot.slane %v286, %v292
  %v295 = vunpack.c.l.s4 1983009808
  %v296 = vunpack.c.0.s8 %v295
  %v297 = vlaneseq
  %v298 = vshrl.u32 %v297, 7
  %v299 = vsub.s32 %v296, %v298
  %v300 = vrot.slane %v282, %v299
  %v301 = vcombine.low %v283, %v283
  %v303 = vunpack.c.l.s4 1983009808
  %v304 = vunpack.c.0.s8 %v303
  %v305 = vlaneseq
  %v306 = vshrl.u32 %v305, 7
  %v307 = vsub.s32 %v304, %v306
  %v308 = vrot.slane %v301, %v307
  %309 = vrot.lane.b32.xlu0 %v293, 127
  %v310 = vpop.permute.xlu0 %309
  %311 = vrot.lane.b32.xlu0 %v300, 127
  %v312 = vpop.permute.xlu0 %311
  %313 = vrot.lane.b32.xlu0 %v308, 127
  %v314 = vpop.permute.xlu0 %313
  %v315 = vrot.slane %v310, 4
  %v316 = vrot.slane %v312, 4
  %v317 = vrot.slane %v314, 4
  %v318 = vsel %vm77, %v315, %v316
  %vm319 = vcmask 1039360
  %v320 = vsel %vm319, %v310, %v318
  %v321 = vsel %vm77, %v316, %v317
  %v322 = vsel %vm319, %v312, %v321
  %v323 = vsel %vm319, %v314, %v317
  %327 = vst [vmem:[#allocation3 + $0x30] sm:$0xcc] %v320
  %328 = vst [vmem:[#allocation3 + $0x38] sm:$0xcc] %v322
  %329 = vst.msk [vmem:[#allocation3 + $0x40] sm:$0xcc] %vm142, %v323
  %v330 = vld [vmem:[%s0 + $0x2] sm:$0xff]
  %v331 = vld [vmem:[%s0 + $0xa] sm:$0xf]
  %v334 = vcombine.high %v330, %v330
  %v336 = vunpack.c.l.s4 1983009808
  %v337 = vunpack.c.0.s8 %v336
  %v338 = vlaneseq
  %v339 = vshrl.u32 %v338, 7
  %v340 = vsub.s32 %v337, %v339
  %v341 = vrot.slane %v330, %v340
  %v343 = vunpack.c.l.s4 1983009808
  %v344 = vunpack.c.0.s8 %v343
  %v345 = vlaneseq
  %v346 = vshrl.u32 %v345, 7
  %v347 = vsub.s32 %v344, %v346
  %v348 = vrot.slane %v334, %v347
  %v350 = vunpack.c.l.s4 1983009808
  %v351 = vunpack.c.0.s8 %v350
  %v352 = vlaneseq
  %v353 = vshrl.u32 %v352, 7
  %v354 = vsub.s32 %v351, %v353
  %v355 = vrot.slane %v331, %v354
  %356 = vrot.lane.b32.xlu0 %v341, 111
  %v357 = vpop.permute.xlu0 %356
  %358 = vrot.lane.b32.xlu0 %v348, 111
  %v359 = vpop.permute.xlu0 %358
  %360 = vrot.lane.b32.xlu0 %v355, 111
  %v361 = vpop.permute.xlu0 %360
  %v362 = vrot.slane %v357, 4
  %v363 = vrot.slane %v359, 4
  %v364 = vrot.slane %v361, 4
  %v365 = vsel %vm77, %v362, %v363
  %vm366 = vcmask 908288
  %v367 = vsel %vm366, %v357, %v365
  %v368 = vsel %vm77, %v363, %v364
  %v369 = vsel %vm366, %v359, %v368
  %v370 = vsel %vm366, %v361, %v364
  %374 = vst [vmem:[#allocation3 + $0x48] sm:$0x33] %v367
  %375 = vst [vmem:[#allocation3 + $0x50] sm:$0x33] %v369
  %376 = vst.msk [vmem:[#allocation3 + $0x58] sm:$0x33] %vm91, %v370
  %v377 = vld [vmem:[%s0 + $0x2] sm:$0xff]
  %v378 = vld [vmem:[%s0 + $0xa] sm:$0xf]
  %v381 = vcombine.low %v377, %v377
  %v383 = vunpack.c.l.s4 1983009808
  %v384 = vunpack.c.0.s8 %v383
  %v385 = vlaneseq
  %v386 = vshrl.u32 %v385, 7
  %v387 = vsub.s32 %v384, %v386
  %v388 = vrot.slane %v381, %v387
  %v390 = vunpack.c.l.s4 1983009808
  %v391 = vunpack.c.0.s8 %v390
  %v392 = vlaneseq
  %v393 = vshrl.u32 %v392, 7
  %v394 = vsub.s32 %v391, %v393
  %v395 = vrot.slane %v377, %v394
  %v396 = vcombine.low %v378, %v378
  %v398 = vunpack.c.l.s4 1983009808
  %v399 = vunpack.c.0.s8 %v398
  %v400 = vlaneseq
  %v401 = vshrl.u32 %v400, 7
  %v402 = vsub.s32 %v399, %v401
  %v403 = vrot.slane %v396, %v402
  %404 = vrot.lane.b32.xlu0 %v388, 110
  %v405 = vpop.permute.xlu0 %404
  %406 = vrot.lane.b32.xlu0 %v395, 110
  %v407 = vpop.permute.xlu0 %406
  %408 = vrot.lane.b32.xlu0 %v403, 110
  %v409 = vpop.permute.xlu0 %408
  %v410 = vrot.slane %v405, 4
  %v411 = vrot.slane %v407, 4
  %v412 = vrot.slane %v409, 4
  %v413 = vsel %vm77, %v410, %v411
  %vm414 = vcmask 900096
  %v415 = vsel %vm414, %v405, %v413
  %v416 = vsel %vm77, %v411, %v412
  %v417 = vsel %vm414, %v407, %v416
  %v418 = vsel %vm414, %v409, %v412
  %422 = vst [vmem:[#allocation3 + $0x48] sm:$0xcc] %v415
  %423 = vst [vmem:[#allocation3 + $0x50] sm:$0xcc] %v417
  %424 = vst.msk [vmem:[#allocation3 + $0x58] sm:$0xcc] %vm142, %v418
  %v425 = vld [vmem:[%s0 + $0x2] sm:$0xff]
  %v426 = vld [vmem:[%s0 + $0xa] sm:$0xf]
  %v429 = vcombine.high %v425, %v425
  %v431 = vunpack.c.l.s4 1983009808
  %v432 = vunpack.c.0.s8 %v431
  %v433 = vlaneseq
  %v434 = vshrl.u32 %v433, 7
  %v435 = vsub.s32 %v432, %v434
  %v436 = vrot.slane %v425, %v435
  %v438 = vunpack.c.l.s4 1983009808
  %v439 = vunpack.c.0.s8 %v438
  %v440 = vlaneseq
  %v441 = vshrl.u32 %v440, 7
  %v442 = vsub.s32 %v439, %v441
  %v443 = vrot.slane %v429, %v442
  %v445 = vunpack.c.l.s4 1983009808
  %v446 = vunpack.c.0.s8 %v445
  %v447 = vlaneseq
  %v448 = vshrl.u32 %v447, 7
  %v449 = vsub.s32 %v446, %v448
  %v450 = vrot.slane %v426, %v449
  %451 = vrot.lane.b32.xlu0 %v436, 109
  %v452 = vpop.permute.xlu0 %451
  %453 = vrot.lane.b32.xlu0 %v443, 109
  %v454 = vpop.permute.xlu0 %453
  %455 = vrot.lane.b32.xlu0 %v450, 109
  %v456 = vpop.permute.xlu0 %455
  %v457 = vrot.slane %v452, 4
  %v458 = vrot.slane %v454, 4
  %v459 = vrot.slane %v456, 4
  %v460 = vsel %vm77, %v457, %v458
  %vm461 = vcmask 891904
  %v462 = vsel %vm461, %v452, %v460
  %v463 = vsel %vm77, %v458, %v459
  %v464 = vsel %vm461, %v454, %v463
  %v465 = vsel %vm461, %v456, %v459
  %469 = vst [vmem:[#allocation3 + $0x60] sm:$0x33] %v462
  %470 = vst [vmem:[#allocation3 + $0x68] sm:$0x33] %v464
  %471 = vst.msk [vmem:[#allocation3 + $0x70] sm:$0x33] %vm91, %v465
  %v472 = vld [vmem:[%s1] sm:$0xf]
  %v473 = vld [vmem:[%s1 + $0x4] sm:$0xf]
  %v474 = vld [vmem:[#allocation3] sm:$0xff]
  %v475 = vld [vmem:[#allocation3 + $0x8] sm:$0xff]
  %v476 = vld [vmem:[#allocation3 + $0x10] sm:$0xff]
  %v477 = vld [vmem:[#allocation3 + $0x18] sm:$0xff]
  %v478 = vld [vmem:[#allocation3 + $0x20] sm:$0xff]
  %v479 = vld [vmem:[#allocation3 + $0x28] sm:$0xff]
  %v480 = vld [vmem:[#allocation3 + $0x30] sm:$0xff]
  %v481 = vld [vmem:[#allocation3 + $0x38] sm:$0xff]
  %v482 = vld [vmem:[#allocation3 + $0x40] sm:$0xff]
  %v483 = vld [vmem:[#allocation3 + $0x48] sm:$0xff]
  %v484 = vld [vmem:[#allocation3 + $0x50] sm:$0xff]
  %v485 = vld [vmem:[#allocation3 + $0x58] sm:$0xff]
  %v486 = vld [vmem:[#allocation3 + $0x60] sm:$0x33]
  %v487 = vld [vmem:[#allocation3 + $0x68] sm:$0x33]
  %v488 = vld [vmem:[#allocation3 + $0x70] sm:$0x33]
  %v491 = vunpack.c.l.b16 %v472
  %v492 = vunpack.c.l.b16 %v473
  %v493 = vpack.c.b16 %v492, %v491
  %v509 = vunpack.c.l.b16 %v474
  %v510 = vunpack.c.h.b16 %v474
  %v511 = vunpack.c.l.b16 %v475
  %v512 = vunpack.c.h.b16 %v475
  %v513 = vunpack.c.l.b16 %v476
  %v514 = vunpack.c.h.b16 %v476
  %v515 = vunpack.c.l.b16 %v477
  %v516 = vunpack.c.h.b16 %v477
  %v517 = vunpack.c.l.b16 %v478
  %v518 = vunpack.c.h.b16 %v478
  %v519 = vunpack.c.l.b16 %v479
  %v520 = vunpack.c.h.b16 %v479
  %v521 = vunpack.c.l.b16 %v480
  %v522 = vunpack.c.h.b16 %v480
  %v523 = vunpack.c.l.b16 %v481
  %v524 = vunpack.c.h.b16 %v481
  %v525 = vunpack.c.l.b16 %v482
  %v526 = vunpack.c.h.b16 %v482
  %v527 = vunpack.c.l.b16 %v483
  %v528 = vunpack.c.h.b16 %v483
  %v529 = vunpack.c.l.b16 %v484
  %v530 = vunpack.c.h.b16 %v484
  %v531 = vunpack.c.l.b16 %v485
  %v532 = vunpack.c.h.b16 %v485
  %v533 = vunpack.c.l.b16 %v486
  %v534 = vunpack.c.h.b16 %v486
  %v535 = vunpack.c.l.b16 %v487
  %v536 = vunpack.c.h.b16 %v487
  %v537 = vunpack.c.l.b16 %v488
  %v538 = vunpack.c.h.b16 %v488
  %v539 = vpack.c.b16 %v515, %v509
  %v540 = vpack.c.b16 %v516, %v510
  %v541 = vpack.c.b16 %v517, %v511
  %v542 = vpack.c.b16 %v518, %v512
  %v543 = vpack.c.b16 %v519, %v513
  %v544 = vpack.c.b16 %v520, %v514
  %v545 = vpack.c.b16 %v527, %v521
  %v546 = vpack.c.b16 %v528, %v522
  %v547 = vpack.c.b16 %v529, %v523
  %v548 = vpack.c.b16 %v530, %v524
  %v549 = vpack.c.b16 %v531, %v525
  %v550 = vpack.c.b16 %v532, %v526
  %v551 = vpack.c.b16 %v533, %v533
  %v552 = vpack.c.b16 %v534, %v534
  %v553 = vpack.c.b16 %v535, %v535
  %v554 = vpack.c.b16 %v536, %v536
  %v555 = vpack.c.b16 %v537, %v537
  %v556 = vpack.c.b16 %v538, %v538
  %vm569 = vcmask 293888
  %v571 = vsel %vm569, %v493, 0
  %v574 = vsel %vm89, %v551, 0
  %v577 = vsel %vm89, %v552, 0
  %v580 = vsel %vm89, %v553, 0
  %v583 = vsel %vm89, %v554, 0
  %v586 = vsel %vm89, %v555, 0
  %v589 = vsel %vm89, %v556, 0
  %591 = vmatprep.subr.bf16.mxu0 0
  %592 = vmatpush1.bf16.msra.mxu0 0
  %593 = vmatprep.subr.bf16.mxu0 0
  %594 = vmatpush1.bf16.msra.mxu0 0
  %595 = vmatprep.subr.bf16.mxu0 0
  %596 = vmatpush1.bf16.msra.mxu0 0
  %597 = vmatprep.subr.bf16.mxu0 0
  %598 = vmatpush1.bf16.msra.mxu0 0
  %599 = vmatprep.subr.bf16.mxu0 0
  %600 = vmatpush1.bf16.msra.mxu0 0
  %601 = vmatprep.subr.bf16.mxu0 %v577
  %602 = vmatpush1.bf16.msra.mxu0 %v574
  %603 = vmatprep.subr.bf16.mxu0 %v546
  %604 = vmatpush1.bf16.msra.mxu0 %v545
  %605 = vmatprep.subr.bf16.mxu0 %v540
  %606 = vmatpush1.bf16.msra.mxu0 %v539
  %607 = vmatprep.subr.bf16.mxu0 0
  %608 = vmatpush2.bf16.msra.mxu0 0
  %609 = vmatprep.subr.bf16.mxu0 0
  %610 = vmatpush2.bf16.msra.mxu0 0
  %611 = vmatprep.subr.bf16.mxu0 0
  %612 = vmatpush2.bf16.msra.mxu0 0
  %613 = vmatprep.subr.bf16.mxu0 0
  %614 = vmatpush2.bf16.msra.mxu0 0
  %615 = vmatprep.subr.bf16.mxu0 0
  %616 = vmatpush2.bf16.msra.mxu0 0
  %617 = vmatprep.subr.bf16.mxu0 0
  %618 = vmatpush2.bf16.msra.mxu0 0
  %619 = vmatprep.subr.bf16.mxu0 0
  %620 = vmatpush2.bf16.msra.mxu0 0
  %621 = vmatprep.subr.bf16.mxu0 0
  %622 = vmatpush2.bf16.msra.mxu0 0
  %623 = vmatprep.mubr.bf16.mxu0 0
  %624 = vmatmul.mubr.bf16.gmra.mxu0 %v571
  %v625 = vpop.f32.mrf.mxu0
  %v626 = vadd.f32 0.0, %v625
  %v627 = vpop.f32.mrf.mxu0
  %v628 = vadd.f32 0.0, %v627
  %v629 = vpop.f32.mrf.mxu0
  %v630 = vadd.f32 0.0, %v629
  %v631 = vpop.f32.mrf.mxu0
  %v632 = vadd.f32 0.0, %v631
  %633 = vdwg.mxu0
  %634 = vmatprep.subr.bf16.mxu0 0
  %635 = vmatpush1.bf16.msra.mxu0 0
  %636 = vmatprep.subr.bf16.mxu0 0
  %637 = vmatpush1.bf16.msra.mxu0 0
  %638 = vmatprep.subr.bf16.mxu0 0
  %639 = vmatpush1.bf16.msra.mxu0 0
  %640 = vmatprep.subr.bf16.mxu0 0
  %641 = vmatpush1.bf16.msra.mxu0 0
  %642 = vmatprep.subr.bf16.mxu0 0
  %643 = vmatpush1.bf16.msra.mxu0 0
  %644 = vmatprep.subr.bf16.mxu0 %v583
  %645 = vmatpush1.bf16.msra.mxu0 %v580
  %646 = vmatprep.subr.bf16.mxu0 %v548
  %647 = vmatpush1.bf16.msra.mxu0 %v547
  %648 = vmatprep.subr.bf16.mxu0 %v542
  %649 = vmatpush1.bf16.msra.mxu0 %v541
  %650 = vmatprep.subr.bf16.mxu0 0
  %651 = vmatpush2.bf16.msra.mxu0 0
  %652 = vmatprep.subr.bf16.mxu0 0
  %653 = vmatpush2.bf16.msra.mxu0 0
  %654 = vmatprep.subr.bf16.mxu0 0
  %655 = vmatpush2.bf16.msra.mxu0 0
  %656 = vmatprep.subr.bf16.mxu0 0
  %657 = vmatpush2.bf16.msra.mxu0 0
  %658 = vmatprep.subr.bf16.mxu0 0
  %659 = vmatpush2.bf16.msra.mxu0 0
  %660 = vmatprep.subr.bf16.mxu0 0
  %661 = vmatpush2.bf16.msra.mxu0 0
  %662 = vmatprep.subr.bf16.mxu0 0
  %663 = vmatpush2.bf16.msra.mxu0 0
  %664 = vmatprep.subr.bf16.mxu0 0
  %665 = vmatpush2.bf16.msra.mxu0 0
  %666 = vmatprep.mubr.bf16.mxu0 0
  %667 = vmatmul.mubr.bf16.gmra.mxu0 %v571
  %v668 = vpop.f32.mrf.mxu0
  %v669 = vadd.f32 0.0, %v668
  %v670 = vpop.f32.mrf.mxu0
  %v671 = vadd.f32 0.0, %v670
  %v672 = vpop.f32.mrf.mxu0
  %v673 = vadd.f32 0.0, %v672
  %v674 = vpop.f32.mrf.mxu0
  %v675 = vadd.f32 0.0, %v674
  %676 = vdwg.mxu0
  %677 = vmatprep.subr.bf16.mxu0 0
  %678 = vmatpush1.bf16.msra.mxu0 0
  %679 = vmatprep.subr.bf16.mxu0 0
  %680 = vmatpush1.bf16.msra.mxu0 0
  %681 = vmatprep.subr.bf16.mxu0 0
  %682 = vmatpush1.bf16.msra.mxu0 0
  %683 = vmatprep.subr.bf16.mxu0 0
  %684 = vmatpush1.bf16.msra.mxu0 0
  %685 = vmatprep.subr.bf16.mxu0 0
  %686 = vmatpush1.bf16.msra.mxu0 0
  %687 = vmatprep.subr.bf16.mxu0 %v589
  %688 = vmatpush1.bf16.msra.mxu0 %v586
  %689 = vmatprep.subr.bf16.mxu0 %v550
  %690 = vmatpush1.bf16.msra.mxu0 %v549
  %691 = vmatprep.subr.bf16.mxu0 %v544
  %692 = vmatpush1.bf16.msra.mxu0 %v543
  %693 = vmatprep.subr.bf16.mxu0 0
  %694 = vmatpush2.bf16.msra.mxu0 0
  %695 = vmatprep.subr.bf16.mxu0 0
  %696 = vmatpush2.bf16.msra.mxu0 0
  %697 = vmatprep.subr.bf16.mxu0 0
  %698 = vmatpush2.bf16.msra.mxu0 0
  %699 = vmatprep.subr.bf16.mxu0 0
  %700 = vmatpush2.bf16.msra.mxu0 0
  %701 = vmatprep.subr.bf16.mxu0 0
  %702 = vmatpush2.bf16.msra.mxu0 0
  %703 = vmatprep.subr.bf16.mxu0 0
  %704 = vmatpush2.bf16.msra.mxu0 0
  %705 = vmatprep.subr.bf16.mxu0 0
  %706 = vmatpush2.bf16.msra.mxu0 0
  %707 = vmatprep.subr.bf16.mxu0 0
  %708 = vmatpush2.bf16.msra.mxu0 0
  %709 = vmatprep.mubr.bf16.mxu0 0
  %710 = vmatmul.mubr.bf16.gmra.mxu0 %v571
  %v711 = vpop.f32.mrf.mxu0
  %v712 = vadd.f32 0.0, %v711
  %v713 = vpop.f32.mrf.mxu0
  %v714 = vadd.f32 0.0, %v713
  %v715 = vpop.f32.mrf.mxu0
  %v716 = vadd.f32 0.0, %v715
  %v717 = vpop.f32.mrf.mxu0
  %v718 = vadd.f32 0.0, %v717
  %719 = vdwg.mxu0
  %v721 = vlaneseq
  %v722 = vshrl.u32 %v721, 7
  %v723 = vsub.s32 0, %v722
  %v724 = vrot.slane %v30, %v723
  %v725 = vlaneseq
  %v726 = vshrl.u32 %v725, 7
  %v727 = vsub.s32 1, %v726
  %v728 = vrot.slane %v30, %v727
  %v729 = vlaneseq
  %v730 = vshrl.u32 %v729, 7
  %v731 = vsub.s32 2, %v730
  %v732 = vrot.slane %v30, %v731
  %v733 = vlaneseq
  %v734 = vshrl.u32 %v733, 7
  %v735 = vsub.s32 3, %v734
  %v736 = vrot.slane %v30, %v735
  %v737 = vlaneseq
  %v738 = vshrl.u32 %v737, 7
  %v739 = vsub.s32 4, %v738
  %v740 = vrot.slane %v30, %v739
  %v741 = vlaneseq
  %v742 = vshrl.u32 %v741, 7
  %v743 = vsub.s32 5, %v742
  %v744 = vrot.slane %v30, %v743
  %v751 = vmul.f32 %v626, %v724
  %v752 = vmul.f32 %v628, %v728
  %v753 = vmul.f32 %v669, %v732
  %v754 = vmul.f32 %v671, %v736
  %v755 = vmul.f32 %v712, %v740
  %v756 = vmul.f32 %v714, %v744
  %v757 = vmul.f32 %v630, %v724
  %v758 = vmul.f32 %v632, %v728
  %v759 = vmul.f32 %v673, %v732
  %v760 = vmul.f32 %v675, %v736
  %v761 = vmul.f32 %v716, %v740
  %v762 = vmul.f32 %v718, %v744
  %v763 = vadd.f32 %v751, %v752
  %v764 = vadd.f32 %v763, %v753
  %v765 = vadd.f32 %v764, %v754
  %v766 = vadd.f32 %v765, %v755
  %vm767 = vcmask 64512
  %v768 = vsel %vm767, %v756, 0.0
  %v769 = vadd.f32 %v766, %v768
  %770 = vadd.xlane.f32.xlu0 %v769
  %v771 = vpop.xlane.xlu0 %770
  %v772 = vadd.f32 %v757, %v758
  %v773 = vadd.f32 %v772, %v759
  %v774 = vadd.f32 %v773, %v760
  %v775 = vadd.f32 %v774, %v761
  %v776 = vsel %vm767, %v762, 0.0
  %v777 = vadd.f32 %v775, %v776
  %778 = vadd.xlane.f32.xlu0 %v777
  %v779 = vpop.xlane.xlu0 %778
  %v780 = vmul.f32 %v771, 0.001953125
  %v781 = vmul.f32 %v779, 0.001953125
  %v782 = vmul.f32 %v751, %v751
  %v783 = vmul.f32 %v752, %v752
  %v784 = vmul.f32 %v753, %v753
  %v785 = vmul.f32 %v754, %v754
  %v786 = vmul.f32 %v755, %v755
  %v787 = vmul.f32 %v756, %v756
  %v788 = vmul.f32 %v757, %v757
  %v789 = vmul.f32 %v758, %v758
  %v790 = vmul.f32 %v759, %v759
  %v791 = vmul.f32 %v760, %v760
  %v792 = vmul.f32 %v761, %v761
  %v793 = vmul.f32 %v762, %v762
  %v794 = vadd.f32 %v782, %v783
  %v795 = vadd.f32 %v794, %v784
  %v796 = vadd.f32 %v795, %v785
  %v797 = vadd.f32 %v796, %v786
  %v798 = vsel %vm767, %v787, 0.0
  %v799 = vadd.f32 %v797, %v798
  %800 = vadd.xlane.f32.xlu0 %v799
  %v801 = vpop.xlane.xlu0 %800
  %v802 = vadd.f32 %v788, %v789
  %v803 = vadd.f32 %v802, %v790
  %v804 = vadd.f32 %v803, %v791
  %v805 = vadd.f32 %v804, %v792
  %v806 = vsel %vm767, %v793, 0.0
  %v807 = vadd.f32 %v805, %v806
  %808 = vadd.xlane.f32.xlu0 %v807
  %v809 = vpop.xlane.xlu0 %808
  %v810 = vmul.f32 %v801, 0.001953125
  %v811 = vmul.f32 %v809, 0.001953125
  %v812 = vmul.f32 %v780, %v780
  %v813 = vmul.f32 %v781, %v781
  %v814 = vsub.f32 %v810, %v812
  %v815 = vsub.f32 %v811, %v813
  %v816 = vmax.f32 %v814, 0.0
  %v817 = vmax.f32 %v815, 0.0
  %v818 = vld [vmem:[%s2] sm:$0xff]
  %v819 = vld [vmem:[%s2 + $0x8] sm:$0xff]
  %v820 = vadd.f32 %v816, 1e-05
  %v821 = vadd.f32 %v817, 1e-05
  %v822 = vrsqrt.pop %v820
  %v823 = vrsqrt.pop %v821
  %v824 = vmul.f32 %v818, %v822
  %v825 = vmul.f32 %v819, %v823
  %827 = vset.pattern.permute.xlu0 0
  %828 = vperm.xlu0 %827, %v824
  %v829 = vpop.permute.xlu0 %828
  %832 = vset.pattern.permute.xlu0 0
  %833 = vperm.xlu0 %832, %v825
  %v834 = vpop.permute.xlu0 %833
  %v836 = vmul.f32 %v626, %v829
  %v837 = vmul.f32 %v628, %v829
  %v838 = vmul.f32 %v669, %v829
  %v839 = vmul.f32 %v671, %v829
  %v840 = vmul.f32 %v712, %v829
  %v841 = vmul.f32 %v714, %v829
  %v842 = vmul.f32 %v630, %v834
  %v843 = vmul.f32 %v632, %v834
  %v844 = vmul.f32 %v673, %v834
  %v845 = vmul.f32 %v675, %v834
  %v846 = vmul.f32 %v716, %v834
  %v847 = vmul.f32 %v718, %v834
  %v848 = vmul.f32 %v780, %v824
  %v849 = vmul.f32 %v781, %v825
  %852 = vrot.lane.b32.xlu0 %v848, 1
  %v853 = vpop.permute.xlu0 %852
  %854 = vrot.lane.b32.xlu0 %v849, 1
  %v855 = vpop.permute.xlu0 %854
  %v858 = vsub.f32 %v818, %v853
  %v859 = vsub.f32 %v819, %v855
  %861 = vset.pattern.permute.xlu0 1
  %862 = vperm.xlu0 %861, %v858
  %v863 = vpop.permute.xlu0 %862
  %866 = vset.pattern.permute.xlu0 1
  %867 = vperm.xlu0 %866, %v859
  %v868 = vpop.permute.xlu0 %867
  %v870 = vadd.f32 %v836, %v863
  %v871 = vadd.f32 %v837, %v863
  %v872 = vadd.f32 %v838, %v863
  %v873 = vadd.f32 %v839, %v863
  %v874 = vadd.f32 %v840, %v863
  %v875 = vadd.f32 %v841, %v863
  %v876 = vadd.f32 %v842, %v868
  %v877 = vadd.f32 %v843, %v868
  %v878 = vadd.f32 %v844, %v868
  %v879 = vadd.f32 %v845, %v868
  %v880 = vadd.f32 %v846, %v868
  %v881 = vadd.f32 %v847, %v868
  %v882 = vmax.f32 %v870, 0.0
  %v883 = vmax.f32 %v871, 0.0
  %v884 = vmax.f32 %v872, 0.0
  %v885 = vmax.f32 %v873, 0.0
  %v886 = vmax.f32 %v874, 0.0
  %v887 = vmax.f32 %v875, 0.0
  %v888 = vmax.f32 %v876, 0.0
  %v889 = vmax.f32 %v877, 0.0
  %v890 = vmax.f32 %v878, 0.0
  %v891 = vmax.f32 %v879, 0.0
  %v892 = vmax.f32 %v880, 0.0
  %v893 = vmax.f32 %v881, 0.0
  %v894 = vmul.f32 %v882, %v724
  %v895 = vmul.f32 %v883, %v728
  %v896 = vmul.f32 %v884, %v732
  %v897 = vmul.f32 %v885, %v736
  %v898 = vmul.f32 %v886, %v740
  %v899 = vmul.f32 %v887, %v744
  %v900 = vmul.f32 %v888, %v724
  %v901 = vmul.f32 %v889, %v728
  %v902 = vmul.f32 %v890, %v732
  %v903 = vmul.f32 %v891, %v736
  %v904 = vmul.f32 %v892, %v740
  %v905 = vmul.f32 %v893, %v744
  %v906 = vpack.c.bf16 %v900, %v894
  %v907 = vpack.c.bf16 %v901, %v895
  %v908 = vpack.c.bf16 %v902, %v896
  %v909 = vpack.c.bf16 %v903, %v897
  %v910 = vpack.c.bf16 %v904, %v898
  %v911 = vpack.c.bf16 %v905, %v899
  %v918 = vunpack.c.l.b16 %v906
  %v919 = vunpack.c.l.b16 %v907
  %v920 = vunpack.c.l.b16 %v908
  %v921 = vunpack.c.l.b16 %v909
  %v922 = vunpack.c.l.b16 %v910
  %v923 = vunpack.c.l.b16 %v911
  %v924 = vunpack.c.h.b16 %v906
  %v925 = vunpack.c.h.b16 %v907
  %v926 = vunpack.c.h.b16 %v908
  %v927 = vunpack.c.h.b16 %v909
  %v928 = vunpack.c.h.b16 %v910
  %v929 = vunpack.c.h.b16 %v911
  %v930 = vpack.c.b16 %v919, %v918
  %v931 = vpack.c.b16 %v921, %v920
  %v932 = vpack.c.b16 %v923, %v922
  %v933 = vpack.c.b16 %v925, %v924
  %v934 = vpack.c.b16 %v927, %v926
  %v935 = vpack.c.b16 %v929, %v928
  %942 = vst [vmem:[#allocation2 + $0x4] sm:$0xff] %v930
  %943 = vst [vmem:[#allocation2 + $0xc] sm:$0xff] %v931
  %944 = vst.msk [vmem:[#allocation2 + $0x14] sm:$0xff] %vm36, %v932
  %945 = vst [vmem:[#allocation2 + $0x24] sm:$0xff] %v933
  %946 = vst [vmem:[#allocation2 + $0x2c] sm:$0xff] %v934
  %947 = vst.msk [vmem:[#allocation2 + $0x34] sm:$0xff] %vm36, %v935
  %948 = vst [vmem:[#allocation4] sm:$0xff] %v894
  %949 = vst [vmem:[#allocation4 + $0x8] sm:$0xff] %v895
  %950 = vst [vmem:[#allocation4 + $0x10] sm:$0xff] %v896
  %951 = vst [vmem:[#allocation4 + $0x18] sm:$0xff] %v897
  %952 = vst [vmem:[#allocation4 + $0x20] sm:$0xff] %v898
  %953 = vst.msk [vmem:[#allocation4 + $0x28] sm:$0xff] %vm767, %v899
  %954 = vst [vmem:[#allocation4 + $0x30] sm:$0xff] %v900
  %955 = vst [vmem:[#allocation4 + $0x38] sm:$0xff] %v901
  %956 = vst [vmem:[#allocation4 + $0x40] sm:$0xff] %v902
  %957 = vst [vmem:[#allocation4 + $0x48] sm:$0xff] %v903
  %958 = vst [vmem:[#allocation4 + $0x50] sm:$0xff] %v904
  %959 = vst.msk [vmem:[#allocation4 + $0x58] sm:$0xff] %vm767, %v905
  %v960 = vld [vmem:[#allocation2] sm:$0xff]
  %v961 = vld [vmem:[#allocation2 + $0x8] sm:$0xff]
  %v962 = vld [vmem:[#allocation2 + $0x10] sm:$0xff]
  %v963 = vld [vmem:[#allocation2 + $0x20] sm:$0xff]
  %v964 = vld [vmem:[#allocation2 + $0x28] sm:$0xff]
  %v965 = vld [vmem:[#allocation2 + $0x30] sm:$0xff]
  %972 = vrot.lane.b32.xlu0 %v960, 19
  %v973 = vpop.permute.xlu0 %972
  %974 = vrot.lane.b32.xlu0 %v961, 19
  %v975 = vpop.permute.xlu0 %974
  %976 = vrot.lane.b32.xlu0 %v962, 19
  %v977 = vpop.permute.xlu0 %976
  %978 = vrot.lane.b32.xlu0 %v963, 19
  %v979 = vpop.permute.xlu0 %978
  %980 = vrot.lane.b32.xlu0 %v964, 19
  %v981 = vpop.permute.xlu0 %980
  %982 = vrot.lane.b32.xlu0 %v965, 19
  %v983 = vpop.permute.xlu0 %982
  %v984 = vrot.slane %v973, 4
  %v985 = vrot.slane %v975, 4
  %v986 = vrot.slane %v977, 4
  %v987 = vrot.slane %v979, 4
  %v988 = vrot.slane %v981, 4
  %v989 = vrot.slane %v983, 4
  %v990 = vsel %vm77, %v984, %v985
  %v991 = vsel %vm79, %v973, %v990
  %v992 = vsel %vm77, %v985, %v986
  %v993 = vsel %vm79, %v975, %v992
  %v994 = vsel %vm79, %v977, %v986
  %v995 = vsel %vm77, %v987, %v988
  %v996 = vsel %vm79, %v979, %v995
  %v997 = vsel %vm77, %v988, %v989
  %v998 = vsel %vm79, %v981, %v997
  %v999 = vsel %vm79, %v983, %v989
  %1006 = vst [vmem:[#allocation3] sm:$0xff] %v991
  %1007 = vst [vmem:[#allocation3 + $0x8] sm:$0xff] %v993
  %1008 = vst.msk [vmem:[#allocation3 + $0x10] sm:$0xff] %vm36, %v994
  %1009 = vst [vmem:[#allocation3 + $0x18] sm:$0xff] %v996
  %1010 = vst [vmem:[#allocation3 + $0x20] sm:$0xff] %v998
  %1011 = vst.msk [vmem:[#allocation3 + $0x28] sm:$0xff] %vm36, %v999
  %v1012 = vld [vmem:[#allocation2] sm:$0xff]
  %v1013 = vld [vmem:[#allocation2 + $0x8] sm:$0xff]
  %v1014 = vld [vmem:[#allocation2 + $0x10] sm:$0xff]
  %v1015 = vld [vmem:[#allocation2 + $0x20] sm:$0xff]
  %v1016 = vld [vmem:[#allocation2 + $0x28] sm:$0xff]
  %v1017 = vld [vmem:[#allocation2 + $0x30] sm:$0xff]
  %1024 = vrot.lane.b32.xlu0 %v1012, 18
  %v1025 = vpop.permute.xlu0 %1024
  %1026 = vrot.lane.b32.xlu0 %v1013, 18
  %v1027 = vpop.permute.xlu0 %1026
  %1028 = vrot.lane.b32.xlu0 %v1014, 18
  %v1029 = vpop.permute.xlu0 %1028
  %1030 = vrot.lane.b32.xlu0 %v1015, 18
  %v1031 = vpop.permute.xlu0 %1030
  %1032 = vrot.lane.b32.xlu0 %v1016, 18
  %v1033 = vpop.permute.xlu0 %1032
  %1034 = vrot.lane.b32.xlu0 %v1017, 18
  %v1035 = vpop.permute.xlu0 %1034
  %v1036 = vrot.slane %v1025, 4
  %v1037 = vrot.slane %v1027, 4
  %v1038 = vrot.slane %v1029, 4
  %v1039 = vrot.slane %v1031, 4
  %v1040 = vrot.slane %v1033, 4
  %v1041 = vrot.slane %v1035, 4
  %v1042 = vsel %vm77, %v1036, %v1037
  %v1043 = vsel %vm130, %v1025, %v1042
  %v1044 = vsel %vm77, %v1037, %v1038
  %v1045 = vsel %vm130, %v1027, %v1044
  %v1046 = vsel %vm130, %v1029, %v1038
  %v1047 = vsel %vm77, %v1039, %v1040
  %v1048 = vsel %vm130, %v1031, %v1047
  %v1049 = vsel %vm77, %v1040, %v1041
  %v1050 = vsel %vm130, %v1033, %v1049
  %v1051 = vsel %vm130, %v1035, %v1041
  %1058 = vst [vmem:[#allocation3 + $0x30] sm:$0xff] %v1043
  %1059 = vst [vmem:[#allocation3 + $0x38] sm:$0xff] %v1045
  %1060 = vst.msk [vmem:[#allocation3 + $0x40] sm:$0xff] %vm36, %v1046
  %1061 = vst [vmem:[#allocation3 + $0x48] sm:$0xff] %v1048
  %1062 = vst [vmem:[#allocation3 + $0x50] sm:$0xff] %v1050
  %1063 = vst.msk [vmem:[#allocation3 + $0x58] sm:$0xff] %vm36, %v1051
  %v1064 = vld [vmem:[#allocation2] sm:$0xff]
  %v1065 = vld [vmem:[#allocation2 + $0x8] sm:$0xff]
  %v1066 = vld [vmem:[#allocation2 + $0x10] sm:$0xff]
  %v1067 = vld [vmem:[#allocation2 + $0x20] sm:$0xff]
  %v1068 = vld [vmem:[#allocation2 + $0x28] sm:$0xff]
  %v1069 = vld [vmem:[#allocation2 + $0x30] sm:$0xff]
  %1076 = vrot.lane.b32.xlu0 %v1064, 17
  %v1077 = vpop.permute.xlu0 %1076
  %1078 = vrot.lane.b32.xlu0 %v1065, 17
  %v1079 = vpop.permute.xlu0 %1078
  %1080 = vrot.lane.b32.xlu0 %v1066, 17
  %v1081 = vpop.permute.xlu0 %1080
  %1082 = vrot.lane.b32.xlu0 %v1067, 17
  %v1083 = vpop.permute.xlu0 %1082
  %1084 = vrot.lane.b32.xlu0 %v1068, 17
  %v1085 = vpop.permute.xlu0 %1084
  %1086 = vrot.lane.b32.xlu0 %v1069, 17
  %v1087 = vpop.permute.xlu0 %1086
  %v1088 = vrot.slane %v1077, 4
  %v1089 = vrot.slane %v1079, 4
  %v1090 = vrot.slane %v1081, 4
  %v1091 = vrot.slane %v1083, 4
  %v1092 = vrot.slane %v1085, 4
  %v1093 = vrot.slane %v1087, 4
  %v1094 = vsel %vm77, %v1088, %v1089
  %v1095 = vsel %vm180, %v1077, %v1094
  %v1096 = vsel %vm77, %v1089, %v1090
  %v1097 = vsel %vm180, %v1079, %v1096
  %v1098 = vsel %vm180, %v1081, %v1090
  %v1099 = vsel %vm77, %v1091, %v1092
  %v1100 = vsel %vm180, %v1083, %v1099
  %v1101 = vsel %vm77, %v1092, %v1093
  %v1102 = vsel %vm180, %v1085, %v1101
  %v1103 = vsel %vm180, %v1087, %v1093
  %1110 = vst [vmem:[#allocation3 + $0x60] sm:$0xff] %v1095
  %1111 = vst [vmem:[#allocation3 + $0x68] sm:$0xff] %v1097
  %1112 = vst.msk [vmem:[#allocation3 + $0x70] sm:$0xff] %vm36, %v1098
  %1113 = vst [vmem:[#allocation3 + $0x78] sm:$0xff] %v1100
  %1114 = vst [vmem:[#allocation3 + $0x80] sm:$0xff] %v1102
  %1115 = vst.msk [vmem:[#allocation3 + $0x88] sm:$0xff] %vm36, %v1103
  %v1116 = vld [vmem:[#allocation2] sm:$0xff]
  %v1117 = vld [vmem:[#allocation2 + $0x8] sm:$0xff]
  %v1118 = vld [vmem:[#allocation2 + $0x10] sm:$0xff]
  %v1119 = vld [vmem:[#allocation2 + $0x18] sm:$0xf]
  %v1120 = vld [vmem:[#allocation2 + $0x20] sm:$0xff]
  %v1121 = vld [vmem:[#allocation2 + $0x28] sm:$0xff]
  %v1122 = vld [vmem:[#allocation2 + $0x30] sm:$0xff]
  %v1123 = vld [vmem:[#allocation2 + $0x38] sm:$0xf]
  %1132 = vrot.lane.b32.xlu0 %v1116, 1
  %v1133 = vpop.permute.xlu0 %1132
  %1134 = vrot.lane.b32.xlu0 %v1117, 1
  %v1135 = vpop.permute.xlu0 %1134
  %1136 = vrot.lane.b32.xlu0 %v1118, 1
  %v1137 = vpop.permute.xlu0 %1136
  %1138 = vrot.lane.b32.xlu0 %v1119, 1
  %v1139 = vpop.permute.xlu0 %1138
  %1140 = vrot.lane.b32.xlu0 %v1120, 1
  %v1141 = vpop.permute.xlu0 %1140
  %1142 = vrot.lane.b32.xlu0 %v1121, 1
  %v1143 = vpop.permute.xlu0 %1142
  %1144 = vrot.lane.b32.xlu0 %v1122, 1
  %v1145 = vpop.permute.xlu0 %1144
  %1146 = vrot.lane.b32.xlu0 %v1123, 1
  %v1147 = vpop.permute.xlu0 %1146
  %v1148 = vrot.slane %v1133, 4
  %v1149 = vrot.slane %v1135, 4
  %v1150 = vrot.slane %v1137, 4
  %v1151 = vrot.slane %v1139, 4
  %v1152 = vrot.slane %v1141, 4
  %v1153 = vrot.slane %v1143, 4
  %v1154 = vrot.slane %v1145, 4
  %v1155 = vrot.slane %v1147, 4
  %v1156 = vsel %vm77, %v1148, %v1149
  %v1157 = vsel %vm238, %v1133, %v1156
  %v1158 = vsel %vm77, %v1149, %v1150
  %v1159 = vsel %vm238, %v1135, %v1158
  %v1160 = vsel %vm77, %v1150, %v1151
  %v1161 = vsel %vm238, %v1137, %v1160
  %v1162 = vsel %vm77, %v1152, %v1153
  %v1163 = vsel %vm238, %v1141, %v1162
  %v1164 = vsel %vm77, %v1153, %v1154
  %v1165 = vsel %vm238, %v1143, %v1164
  %v1166 = vsel %vm77, %v1154, %v1155
  %v1167 = vsel %vm238, %v1145, %v1166
  %1174 = vst [vmem:[#allocation3 + $0x90] sm:$0xff] %v1157
  %1175 = vst [vmem:[#allocation3 + $0x98] sm:$0xff] %v1159
  %1176 = vst.msk [vmem:[#allocation3 + $0xa0] sm:$0xff] %vm36, %v1161
  %1177 = vst [vmem:[#allocation3 + $0xa8] sm:$0xff] %v1163
  %1178 = vst [vmem:[#allocation3 + $0xb0] sm:$0xff] %v1165
  %1179 = vst.msk [vmem:[#allocation3 + $0xb8] sm:$0xff] %vm36, %v1167
  %v1180 = vld [vmem:[#allocation2 + $0x4] sm:$0xff]
  %v1181 = vld [vmem:[#allocation2 + $0xc] sm:$0xff]
  %v1182 = vld [vmem:[#allocation2 + $0x14] sm:$0xff]
  %v1183 = vld [vmem:[#allocation2 + $0x24] sm:$0xff]
  %v1184 = vld [vmem:[#allocation2 + $0x2c] sm:$0xff]
  %v1185 = vld [vmem:[#allocation2 + $0x34] sm:$0xff]
  %1186 = vst [vmem:[#allocation3 + $0xc0] sm:$0xff] %v1180
  %1187 = vst [vmem:[#allocation3 + $0xc8] sm:$0xff] %v1181
  %1188 = vst.msk [vmem:[#allocation3 + $0xd0] sm:$0xff] %vm36, %v1182
  %1189 = vst [vmem:[#allocation3 + $0xd8] sm:$0xff] %v1183
  %1190 = vst [vmem:[#allocation3 + $0xe0] sm:$0xff] %v1184
  %1191 = vst.msk [vmem:[#allocation3 + $0xe8] sm:$0xff] %vm36, %v1185
  %v1192 = vld [vmem:[#allocation2 + $0x4] sm:$0xff]
  %v1193 = vld [vmem:[#allocation2 + $0xc] sm:$0xff]
  %v1194 = vld [vmem:[#allocation2 + $0x14] sm:$0xff]
  %v1195 = vld [vmem:[#allocation2 + $0x24] sm:$0xff]
  %v1196 = vld [vmem:[#allocation2 + $0x2c] sm:$0xff]
  %v1197 = vld [vmem:[#allocation2 + $0x34] sm:$0xff]
  %1204 = vrot.lane.b32.xlu0 %v1192, 127
  %v1205 = vpop.permute.xlu0 %1204
  %1206 = vrot.lane.b32.xlu0 %v1193, 127
  %v1207 = vpop.permute.xlu0 %1206
  %1208 = vrot.lane.b32.xlu0 %v1194, 127
  %v1209 = vpop.permute.xlu0 %1208
  %1210 = vrot.lane.b32.xlu0 %v1195, 127
  %v1211 = vpop.permute.xlu0 %1210
  %1212 = vrot.lane.b32.xlu0 %v1196, 127
  %v1213 = vpop.permute.xlu0 %1212
  %1214 = vrot.lane.b32.xlu0 %v1197, 127
  %v1215 = vpop.permute.xlu0 %1214
  %v1216 = vrot.slane %v1205, 4
  %v1217 = vrot.slane %v1207, 4
  %v1218 = vrot.slane %v1209, 4
  %v1219 = vrot.slane %v1211, 4
  %v1220 = vrot.slane %v1213, 4
  %v1221 = vrot.slane %v1215, 4
  %v1222 = vsel %vm77, %v1216, %v1217
  %v1223 = vsel %vm319, %v1205, %v1222
  %v1224 = vsel %vm77, %v1217, %v1218
  %v1225 = vsel %vm319, %v1207, %v1224
  %v1226 = vsel %vm319, %v1209, %v1218
  %v1227 = vsel %vm77, %v1219, %v1220
  %v1228 = vsel %vm319, %v1211, %v1227
  %v1229 = vsel %vm77, %v1220, %v1221
  %v1230 = vsel %vm319, %v1213, %v1229
  %v1231 = vsel %vm319, %v1215, %v1221
  %1238 = vst [vmem:[#allocation3 + $0xf0] sm:$0xff] %v1223
  %1239 = vst [vmem:[#allocation3 + $0xf8] sm:$0xff] %v1225
  %1240 = vst.msk [vmem:[#allocation3 + $0x100] sm:$0xff] %vm36, %v1226
  %1241 = vst [vmem:[#allocation3 + $0x108] sm:$0xff] %v1228
  %1242 = vst [vmem:[#allocation3 + $0x110] sm:$0xff] %v1230
  %1243 = vst.msk [vmem:[#allocation3 + $0x118] sm:$0xff] %vm36, %v1231
  %v1244 = vld [vmem:[#allocation2 + $0x4] sm:$0xff]
  %v1245 = vld [vmem:[#allocation2 + $0xc] sm:$0xff]
  %v1246 = vld [vmem:[#allocation2 + $0x14] sm:$0xff]
  %v1247 = vld [vmem:[#allocation2 + $0x24] sm:$0xff]
  %v1248 = vld [vmem:[#allocation2 + $0x2c] sm:$0xff]
  %v1249 = vld [vmem:[#allocation2 + $0x34] sm:$0xff]
  %1256 = vrot.lane.b32.xlu0 %v1244, 111
  %v1257 = vpop.permute.xlu0 %1256
  %1258 = vrot.lane.b32.xlu0 %v1245, 111
  %v1259 = vpop.permute.xlu0 %1258
  %1260 = vrot.lane.b32.xlu0 %v1246, 111
  %v1261 = vpop.permute.xlu0 %1260
  %1262 = vrot.lane.b32.xlu0 %v1247, 111
  %v1263 = vpop.permute.xlu0 %1262
  %1264 = vrot.lane.b32.xlu0 %v1248, 111
  %v1265 = vpop.permute.xlu0 %1264
  %1266 = vrot.lane.b32.xlu0 %v1249, 111
  %v1267 = vpop.permute.xlu0 %1266
  %v1268 = vrot.slane %v1257, 4
  %v1269 = vrot.slane %v1259, 4
  %v1270 = vrot.slane %v1261, 4
  %v1271 = vrot.slane %v1263, 4
  %v1272 = vrot.slane %v1265, 4
  %v1273 = vrot.slane %v1267, 4
  %v1274 = vsel %vm77, %v1268, %v1269
  %v1275 = vsel %vm366, %v1257, %v1274
  %v1276 = vsel %vm77, %v1269, %v1270
  %v1277 = vsel %vm366, %v1259, %v1276
  %v1278 = vsel %vm366, %v1261, %v1270
  %v1279 = vsel %vm77, %v1271, %v1272
  %v1280 = vsel %vm366, %v1263, %v1279
  %v1281 = vsel %vm77, %v1272, %v1273
  %v1282 = vsel %vm366, %v1265, %v1281
  %v1283 = vsel %vm366, %v1267, %v1273
  %1290 = vst [vmem:[#allocation3 + $0x120] sm:$0xff] %v1275
  %1291 = vst [vmem:[#allocation3 + $0x128] sm:$0xff] %v1277
  %1292 = vst.msk [vmem:[#allocation3 + $0x130] sm:$0xff] %vm36, %v1278
  %1293 = vst [vmem:[#allocation3 + $0x138] sm:$0xff] %v1280
  %1294 = vst [vmem:[#allocation3 + $0x140] sm:$0xff] %v1282
  %1295 = vst.msk [vmem:[#allocation3 + $0x148] sm:$0xff] %vm36, %v1283
  %v1296 = vld [vmem:[#allocation2 + $0x4] sm:$0xff]
  %v1297 = vld [vmem:[#allocation2 + $0xc] sm:$0xff]
  %v1298 = vld [vmem:[#allocation2 + $0x14] sm:$0xff]
  %v1299 = vld [vmem:[#allocation2 + $0x24] sm:$0xff]
  %v1300 = vld [vmem:[#allocation2 + $0x2c] sm:$0xff]
  %v1301 = vld [vmem:[#allocation2 + $0x34] sm:$0xff]
  %1308 = vrot.lane.b32.xlu0 %v1296, 110
  %v1309 = vpop.permute.xlu0 %1308
  %1310 = vrot.lane.b32.xlu0 %v1297, 110
  %v1311 = vpop.permute.xlu0 %1310
  %1312 = vrot.lane.b32.xlu0 %v1298, 110
  %v1313 = vpop.permute.xlu0 %1312
  %1314 = vrot.lane.b32.xlu0 %v1299, 110
  %v1315 = vpop.permute.xlu0 %1314
  %1316 = vrot.lane.b32.xlu0 %v1300, 110
  %v1317 = vpop.permute.xlu0 %1316
  %1318 = vrot.lane.b32.xlu0 %v1301, 110
  %v1319 = vpop.permute.xlu0 %1318
  %v1320 = vrot.slane %v1309, 4
  %v1321 = vrot.slane %v1311, 4
  %v1322 = vrot.slane %v1313, 4
  %v1323 = vrot.slane %v1315, 4
  %v1324 = vrot.slane %v1317, 4
  %v1325 = vrot.slane %v1319, 4
  %v1326 = vsel %vm77, %v1320, %v1321
  %v1327 = vsel %vm414, %v1309, %v1326
  %v1328 = vsel %vm77, %v1321, %v1322
  %v1329 = vsel %vm414, %v1311, %v1328
  %v1330 = vsel %vm414, %v1313, %v1322
  %v1331 = vsel %vm77, %v1323, %v1324
  %v1332 = vsel %vm414, %v1315, %v1331
  %v1333 = vsel %vm77, %v1324, %v1325
  %v1334 = vsel %vm414, %v1317, %v1333
  %v1335 = vsel %vm414, %v1319, %v1325
  %1342 = vst [vmem:[#allocation3 + $0x150] sm:$0xff] %v1327
  %1343 = vst [vmem:[#allocation3 + $0x158] sm:$0xff] %v1329
  %1344 = vst.msk [vmem:[#allocation3 + $0x160] sm:$0xff] %vm36, %v1330
  %1345 = vst [vmem:[#allocation3 + $0x168] sm:$0xff] %v1332
  %1346 = vst [vmem:[#allocation3 + $0x170] sm:$0xff] %v1334
  %1347 = vst.msk [vmem:[#allocation3 + $0x178] sm:$0xff] %vm36, %v1335
  %v1348 = vld [vmem:[#allocation2 + $0x4] sm:$0xff]
  %v1349 = vld [vmem:[#allocation2 + $0xc] sm:$0xff]
  %v1350 = vld [vmem:[#allocation2 + $0x14] sm:$0xff]
  %v1351 = vld [vmem:[#allocation2 + $0x24] sm:$0xff]
  %v1352 = vld [vmem:[#allocation2 + $0x2c] sm:$0xff]
  %v1353 = vld [vmem:[#allocation2 + $0x34] sm:$0xff]
  %1360 = vrot.lane.b32.xlu0 %v1348, 109
  %v1361 = vpop.permute.xlu0 %1360
  %1362 = vrot.lane.b32.xlu0 %v1349, 109
  %v1363 = vpop.permute.xlu0 %1362
  %1364 = vrot.lane.b32.xlu0 %v1350, 109
  %v1365 = vpop.permute.xlu0 %1364
  %1366 = vrot.lane.b32.xlu0 %v1351, 109
  %v1367 = vpop.permute.xlu0 %1366
  %1368 = vrot.lane.b32.xlu0 %v1352, 109
  %v1369 = vpop.permute.xlu0 %1368
  %1370 = vrot.lane.b32.xlu0 %v1353, 109
  %v1371 = vpop.permute.xlu0 %1370
  %v1372 = vrot.slane %v1361, 4
  %v1373 = vrot.slane %v1363, 4
  %v1374 = vrot.slane %v1365, 4
  %v1375 = vrot.slane %v1367, 4
  %v1376 = vrot.slane %v1369, 4
  %v1377 = vrot.slane %v1371, 4
  %v1378 = vsel %vm77, %v1372, %v1373
  %v1379 = vsel %vm461, %v1361, %v1378
  %v1380 = vsel %vm77, %v1373, %v1374
  %v1381 = vsel %vm461, %v1363, %v1380
  %v1382 = vsel %vm461, %v1365, %v1374
  %v1383 = vsel %vm77, %v1375, %v1376
  %v1384 = vsel %vm461, %v1367, %v1383
  %v1385 = vsel %vm77, %v1376, %v1377
  %v1386 = vsel %vm461, %v1369, %v1385
  %v1387 = vsel %vm461, %v1371, %v1377
  %1394 = vst [vmem:[#allocation3 + $0x180] sm:$0xff] %v1379
  %1395 = vst [vmem:[#allocation3 + $0x188] sm:$0xff] %v1381
  %1396 = vst.msk [vmem:[#allocation3 + $0x190] sm:$0xff] %vm36, %v1382
  %1397 = vst [vmem:[#allocation3 + $0x198] sm:$0xff] %v1384
  %1398 = vst [vmem:[#allocation3 + $0x1a0] sm:$0xff] %v1386
  %1399 = vst.msk [vmem:[#allocation3 + $0x1a8] sm:$0xff] %vm36, %v1387
  %v1400 = vld [vmem:[%s3] sm:$0xff]
  %v1401 = vld [vmem:[%s3 + $0x8] sm:$0xff]
  %v1402 = vld [vmem:[#allocation3] sm:$0xff]
  %v1403 = vld [vmem:[#allocation3 + $0x8] sm:$0xff]
  %v1404 = vld [vmem:[#allocation3 + $0x10] sm:$0xff]
  %v1405 = vld [vmem:[#allocation3 + $0x18] sm:$0xff]
  %v1406 = vld [vmem:[#allocation3 + $0x20] sm:$0xff]
  %v1407 = vld [vmem:[#allocation3 + $0x28] sm:$0xff]
  %v1408 = vld [vmem:[#allocation3 + $0x30] sm:$0xff]
  %v1409 = vld [vmem:[#allocation3 + $0x38] sm:$0xff]
  %v1410 = vld [vmem:[#allocation3 + $0x40] sm:$0xff]
  %v1411 = vld [vmem:[#allocation3 + $0x48] sm:$0xff]
  %v1412 = vld [vmem:[#allocation3 + $0x50] sm:$0xff]
  %v1413 = vld [vmem:[#allocation3 + $0x58] sm:$0xff]
  %v1414 = vld [vmem:[#allocation3 + $0x60] sm:$0xff]
  %v1415 = vld [vmem:[#allocation3 + $0x68] sm:$0xff]
  %v1416 = vld [vmem:[#allocation3 + $0x70] sm:$0xff]
  %v1417 = vld [vmem:[#allocation3 + $0x78] sm:$0xff]
  %v1418 = vld [vmem:[#allocation3 + $0x80] sm:$0xff]
  %v1419 = vld [vmem:[#allocation3 + $0x88] sm:$0xff]
  %v1420 = vld [vmem:[#allocation3 + $0x90] sm:$0xff]
  %v1421 = vld [vmem:[#allocation3 + $0x98] sm:$0xff]
  %v1422 = vld [vmem:[#allocation3 + $0xa0] sm:$0xff]
  %v1423 = vld [vmem:[#allocation3 + $0xa8] sm:$0xff]
  %v1424 = vld [vmem:[#allocation3 + $0xb0] sm:$0xff]
  %v1425 = vld [vmem:[#allocation3 + $0xb8] sm:$0xff]
  %v1426 = vld [vmem:[#allocation3 + $0xc0] sm:$0xff]
  %v1427 = vld [vmem:[#allocation3 + $0xc8] sm:$0xff]
  %v1428 = vld [vmem:[#allocation3 + $0xd0] sm:$0xff]
  %v1429 = vld [vmem:[#allocation3 + $0xd8] sm:$0xff]
  %v1430 = vld [vmem:[#allocation3 + $0xe0] sm:$0xff]
  %v1431 = vld [vmem:[#allocation3 + $0xe8] sm:$0xff]
  %v1432 = vld [vmem:[#allocation3 + $0xf0] sm:$0xff]
  %v1433 = vld [vmem:[#allocation3 + $0xf8] sm:$0xff]
  %v1434 = vld [vmem:[#allocation3 + $0x100] sm:$0xff]
  %v1435 = vld [vmem:[#allocation3 + $0x108] sm:$0xff]
  %v1436 = vld [vmem:[#allocation3 + $0x110] sm:$0xff]
  %v1437 = vld [vmem:[#allocation3 + $0x118] sm:$0xff]
  %v1438 = vld [vmem:[#allocation3 + $0x120] sm:$0xff]
  %v1439 = vld [vmem:[#allocation3 + $0x128] sm:$0xff]
  %v1440 = vld [vmem:[#allocation3 + $0x130] sm:$0xff]
  %v1441 = vld [vmem:[#allocation3 + $0x138] sm:$0xff]
  %v1442 = vld [vmem:[#allocation3 + $0x140] sm:$0xff]
  %v1443 = vld [vmem:[#allocation3 + $0x148] sm:$0xff]
  %v1444 = vld [vmem:[#allocation3 + $0x150] sm:$0xff]
  %v1445 = vld [vmem:[#allocation3 + $0x158] sm:$0xff]
  %v1446 = vld [vmem:[#allocation3 + $0x160] sm:$0xff]
  %v1447 = vld [vmem:[#allocation3 + $0x168] sm:$0xff]
  %v1448 = vld [vmem:[#allocation3 + $0x170] sm:$0xff]
  %v1449 = vld [vmem:[#allocation3 + $0x178] sm:$0xff]
  %v1450 = vld [vmem:[#allocation3 + $0x180] sm:$0xff]
  %v1451 = vld [vmem:[#allocation3 + $0x188] sm:$0xff]
  %v1452 = vld [vmem:[#allocation3 + $0x190] sm:$0xff]
  %v1453 = vld [vmem:[#allocation3 + $0x198] sm:$0xff]
  %v1454 = vld [vmem:[#allocation3 + $0x1a0] sm:$0xff]
  %v1455 = vld [vmem:[#allocation3 + $0x1a8] sm:$0xff]
  %v1458 = vunpack.c.l.b16 %v1400
  %v1459 = vunpack.c.h.b16 %v1400
  %v1460 = vunpack.c.l.b16 %v1401
  %v1461 = vunpack.c.h.b16 %v1401
  %v1462 = vpack.c.b16 %v1460, %v1458
  %v1463 = vpack.c.b16 %v1461, %v1459
  %v1519 = vunpack.c.l.b16 %v1402
  %v1520 = vunpack.c.h.b16 %v1402
  %v1521 = vunpack.c.l.b16 %v1403
  %v1522 = vunpack.c.h.b16 %v1403
  %v1523 = vunpack.c.l.b16 %v1404
  %v1524 = vunpack.c.h.b16 %v1404
  %v1525 = vunpack.c.l.b16 %v1405
  %v1526 = vunpack.c.h.b16 %v1405
  %v1527 = vunpack.c.l.b16 %v1406
  %v1528 = vunpack.c.h.b16 %v1406
  %v1529 = vunpack.c.l.b16 %v1407
  %v1530 = vunpack.c.h.b16 %v1407
  %v1531 = vunpack.c.l.b16 %v1408
  %v1532 = vunpack.c.h.b16 %v1408
  %v1533 = vunpack.c.l.b16 %v1409
  %v1534 = vunpack.c.h.b16 %v1409
  %v1535 = vunpack.c.l.b16 %v1410
  %v1536 = vunpack.c.h.b16 %v1410
  %v1537 = vunpack.c.l.b16 %v1411
  %v1538 = vunpack.c.h.b16 %v1411
  %v1539 = vunpack.c.l.b16 %v1412
  %v1540 = vunpack.c.h.b16 %v1412
  %v1541 = vunpack.c.l.b16 %v1413
  %v1542 = vunpack.c.h.b16 %v1413
  %v1543 = vunpack.c.l.b16 %v1414
  %v1544 = vunpack.c.h.b16 %v1414
  %v1545 = vunpack.c.l.b16 %v1415
  %v1546 = vunpack.c.h.b16 %v1415
  %v1547 = vunpack.c.l.b16 %v1416
  %v1548 = vunpack.c.h.b16 %v1416
  %v1549 = vunpack.c.l.b16 %v1417
  %v1550 = vunpack.c.h.b16 %v1417
  %v1551 = vunpack.c.l.b16 %v1418
  %v1552 = vunpack.c.h.b16 %v1418
  %v1553 = vunpack.c.l.b16 %v1419
  %v1554 = vunpack.c.h.b16 %v1419
  %v1555 = vunpack.c.l.b16 %v1420
  %v1556 = vunpack.c.h.b16 %v1420
  %v1557 = vunpack.c.l.b16 %v1421
  %v1558 = vunpack.c.h.b16 %v1421
  %v1559 = vunpack.c.l.b16 %v1422
  %v1560 = vunpack.c.h.b16 %v1422
  %v1561 = vunpack.c.l.b16 %v1423
  %v1562 = vunpack.c.h.b16 %v1423
  %v1563 = vunpack.c.l.b16 %v1424
  %v1564 = vunpack.c.h.b16 %v1424
  %v1565 = vunpack.c.l.b16 %v1425
  %v1566 = vunpack.c.h.b16 %v1425
  %v1567 = vunpack.c.l.b16 %v1426
  %v1568 = vunpack.c.h.b16 %v1426
  %v1569 = vunpack.c.l.b16 %v1427
  %v1570 = vunpack.c.h.b16 %v1427
  %v1571 = vunpack.c.l.b16 %v1428
  %v1572 = vunpack.c.h.b16 %v1428
  %v1573 = vunpack.c.l.b16 %v1429
  %v1574 = vunpack.c.h.b16 %v1429
  %v1575 = vunpack.c.l.b16 %v1430
  %v1576 = vunpack.c.h.b16 %v1430
  %v1577 = vunpack.c.l.b16 %v1431
  %v1578 = vunpack.c.h.b16 %v1431
  %v1579 = vunpack.c.l.b16 %v1432
  %v1580 = vunpack.c.h.b16 %v1432
  %v1581 = vunpack.c.l.b16 %v1433
  %v1582 = vunpack.c.h.b16 %v1433
  %v1583 = vunpack.c.l.b16 %v1434
  %v1584 = vunpack.c.h.b16 %v1434
  %v1585 = vunpack.c.l.b16 %v1435
  %v1586 = vunpack.c.h.b16 %v1435
  %v1587 = vunpack.c.l.b16 %v1436
  %v1588 = vunpack.c.h.b16 %v1436
  %v1589 = vunpack.c.l.b16 %v1437
  %v1590 = vunpack.c.h.b16 %v1437
  %v1591 = vunpack.c.l.b16 %v1438
  %v1592 = vunpack.c.h.b16 %v1438
  %v1593 = vunpack.c.l.b16 %v1439
  %v1594 = vunpack.c.h.b16 %v1439
  %v1595 = vunpack.c.l.b16 %v1440
  %v1596 = vunpack.c.h.b16 %v1440
  %v1597 = vunpack.c.l.b16 %v1441
  %v1598 = vunpack.c.h.b16 %v1441
  %v1599 = vunpack.c.l.b16 %v1442
  %v1600 = vunpack.c.h.b16 %v1442
  %v1601 = vunpack.c.l.b16 %v1443
  %v1602 = vunpack.c.h.b16 %v1443
  %v1603 = vunpack.c.l.b16 %v1444
  %v1604 = vunpack.c.h.b16 %v1444
  %v1605 = vunpack.c.l.b16 %v1445
  %v1606 = vunpack.c.h.b16 %v1445
  %v1607 = vunpack.c.l.b16 %v1446
  %v1608 = vunpack.c.h.b16 %v1446
  %v1609 = vunpack.c.l.b16 %v1447
  %v1610 = vunpack.c.h.b16 %v1447
  %v1611 = vunpack.c.l.b16 %v1448
  %v1612 = vunpack.c.h.b16 %v1448
  %v1613 = vunpack.c.l.b16 %v1449
  %v1614 = vunpack.c.h.b16 %v1449
  %v1615 = vunpack.c.l.b16 %v1450
  %v1616 = vunpack.c.h.b16 %v1450
  %v1617 = vunpack.c.l.b16 %v1451
  %v1618 = vunpack.c.h.b16 %v1451
  %v1619 = vunpack.c.l.b16 %v1452
  %v1620 = vunpack.c.h.b16 %v1452
  %v1621 = vunpack.c.l.b16 %v1453
  %v1622 = vunpack.c.h.b16 %v1453
  %v1623 = vunpack.c.l.b16 %v1454
  %v1624 = vunpack.c.h.b16 %v1454
  %v1625 = vunpack.c.l.b16 %v1455
  %v1626 = vunpack.c.h.b16 %v1455
  %v1627 = vpack.c.b16 %v1525, %v1519
  %v1628 = vpack.c.b16 %v1526, %v1520
  %v1629 = vpack.c.b16 %v1527, %v1521
  %v1630 = vpack.c.b16 %v1528, %v1522
  %v1631 = vpack.c.b16 %v1529, %v1523
  %v1632 = vpack.c.b16 %v1530, %v1524
  %v1633 = vpack.c.b16 %v1537, %v1531
  %v1634 = vpack.c.b16 %v1538, %v1532
  %v1635 = vpack.c.b16 %v1539, %v1533
  %v1636 = vpack.c.b16 %v1540, %v1534
  %v1637 = vpack.c.b16 %v1541, %v1535
  %v1638 = vpack.c.b16 %v1542, %v1536
  %v1639 = vpack.c.b16 %v1549, %v1543
  %v1640 = vpack.c.b16 %v1550, %v1544
  %v1641 = vpack.c.b16 %v1551, %v1545
  %v1642 = vpack.c.b16 %v1552, %v1546
  %v1643 = vpack.c.b16 %v1553, %v1547
  %v1644 = vpack.c.b16 %v1554, %v1548
  %v1645 = vpack.c.b16 %v1561, %v1555
  %v1646 = vpack.c.b16 %v1562, %v1556
  %v1647 = vpack.c.b16 %v1563, %v1557
  %v1648 = vpack.c.b16 %v1564, %v1558
  %v1649 = vpack.c.b16 %v1565, %v1559
  %v1650 = vpack.c.b16 %v1566, %v1560
  %v1651 = vpack.c.b16 %v1573, %v1567
  %v1652 = vpack.c.b16 %v1574, %v1568
  %v1653 = vpack.c.b16 %v1575, %v1569
  %v1654 = vpack.c.b16 %v1576, %v1570
  %v1655 = vpack.c.b16 %v1577, %v1571
  %v1656 = vpack.c.b16 %v1578, %v1572
  %v1657 = vpack.c.b16 %v1585, %v1579
  %v1658 = vpack.c.b16 %v1586, %v1580
  %v1659 = vpack.c.b16 %v1587, %v1581
  %v1660 = vpack.c.b16 %v1588, %v1582
  %v1661 = vpack.c.b16 %v1589, %v1583
  %v1662 = vpack.c.b16 %v1590, %v1584
  %v1663 = vpack.c.b16 %v1597, %v1591
  %v1664 = vpack.c.b16 %v1598, %v1592
  %v1665 = vpack.c.b16 %v1599, %v1593
  %v1666 = vpack.c.b16 %v1600, %v1594
  %v1667 = vpack.c.b16 %v1601, %v1595
  %v1668 = vpack.c.b16 %v1602, %v1596
  %v1669 = vpack.c.b16 %v1609, %v1603
  %v1670 = vpack.c.b16 %v1610, %v1604
  %v1671 = vpack.c.b16 %v1611, %v1605
  %v1672 = vpack.c.b16 %v1612, %v1606
  %v1673 = vpack.c.b16 %v1613, %v1607
  %v1674 = vpack.c.b16 %v1614, %v1608
  %v1675 = vpack.c.b16 %v1621, %v1615
  %v1676 = vpack.c.b16 %v1622, %v1616
  %v1677 = vpack.c.b16 %v1623, %v1617
  %v1678 = vpack.c.b16 %v1624, %v1618
  %v1679 = vpack.c.b16 %v1625, %v1619
  %v1680 = vpack.c.b16 %v1626, %v1620
  %vm1735 = vcmask 130048
  %v1737 = vsel %vm1735, %v1463, 0
  %1739 = vmatprep.subr.bf16.mxu0 %v1670
  %1740 = vmatpush1.bf16.msra.mxu0 %v1669
  %1741 = vmatprep.subr.bf16.mxu0 %v1664
  %1742 = vmatpush1.bf16.msra.mxu0 %v1663
  %1743 = vmatprep.subr.bf16.mxu0 %v1658
  %1744 = vmatpush1.bf16.msra.mxu0 %v1657
  %1745 = vmatprep.subr.bf16.mxu0 %v1652
  %1746 = vmatpush1.bf16.msra.mxu0 %v1651
  %1747 = vmatprep.subr.bf16.mxu0 %v1646
  %1748 = vmatpush1.bf16.msra.mxu0 %v1645
  %1749 = vmatprep.subr.bf16.mxu0 %v1640
  %1750 = vmatpush1.bf16.msra.mxu0 %v1639
  %1751 = vmatprep.subr.bf16.mxu0 %v1634
  %1752 = vmatpush1.bf16.msra.mxu0 %v1633
  %1753 = vmatprep.subr.bf16.mxu0 %v1628
  %1754 = vmatpush1.bf16.msra.mxu0 %v1627
  %1755 = vmatprep.subr.bf16.mxu0 0
  %1756 = vmatpush2.bf16.msra.mxu0 0
  %1757 = vmatprep.subr.bf16.mxu0 0
  %1758 = vmatpush2.bf16.msra.mxu0 0
  %1759 = vmatprep.subr.bf16.mxu0 0
  %1760 = vmatpush2.bf16.msra.mxu0 0
  %1761 = vmatprep.subr.bf16.mxu0 0
  %1762 = vmatpush2.bf16.msra.mxu0 0
  %1763 = vmatprep.subr.bf16.mxu0 0
  %1764 = vmatpush2.bf16.msra.mxu0 0
  %1765 = vmatprep.subr.bf16.mxu0 0
  %1766 = vmatpush2.bf16.msra.mxu0 0
  %1767 = vmatprep.subr.bf16.mxu0 0
  %1768 = vmatpush2.bf16.msra.mxu0 0
  %1769 = vmatprep.subr.bf16.mxu0 %v1676
  %1770 = vmatpush2.bf16.msra.mxu0 %v1675
  %1771 = vmatprep.mubr.bf16.mxu0 %v1737
  %1772 = vmatmul.mubr.bf16.gmra.mxu0 %v1462
  %v1773 = vpop.f32.mrf.mxu0
  %v1774 = vadd.f32 0.0, %v1773
  %v1775 = vpop.f32.mrf.mxu0
  %v1776 = vadd.f32 0.0, %v1775
  %v1777 = vpop.f32.mrf.mxu0
  %v1778 = vadd.f32 0.0, %v1777
  %v1779 = vpop.f32.mrf.mxu0
  %v1780 = vadd.f32 0.0, %v1779
  %1781 = vdwg.mxu0
  %1782 = vmatprep.subr.bf16.mxu0 %v1672
  %1783 = vmatpush1.bf16.msra.mxu0 %v1671
  %1784 = vmatprep.subr.bf16.mxu0 %v1666
  %1785 = vmatpush1.bf16.msra.mxu0 %v1665
  %1786 = vmatprep.subr.bf16.mxu0 %v1660
  %1787 = vmatpush1.bf16.msra.mxu0 %v1659
  %1788 = vmatprep.subr.bf16.mxu0 %v1654
  %1789 = vmatpush1.bf16.msra.mxu0 %v1653
  %1790 = vmatprep.subr.bf16.mxu0 %v1648
  %1791 = vmatpush1.bf16.msra.mxu0 %v1647
  %1792 = vmatprep.subr.bf16.mxu0 %v1642
  %1793 = vmatpush1.bf16.msra.mxu0 %v1641
  %1794 = vmatprep.subr.bf16.mxu0 %v1636
  %1795 = vmatpush1.bf16.msra.mxu0 %v1635
  %1796 = vmatprep.subr.bf16.mxu0 %v1630
  %1797 = vmatpush1.bf16.msra.mxu0 %v1629
  %1798 = vmatprep.subr.bf16.mxu0 0
  %1799 = vmatpush2.bf16.msra.mxu0 0
  %1800 = vmatprep.subr.bf16.mxu0 0
  %1801 = vmatpush2.bf16.msra.mxu0 0
  %1802 = vmatprep.subr.bf16.mxu0 0
  %1803 = vmatpush2.bf16.msra.mxu0 0
  %1804 = vmatprep.subr.bf16.mxu0 0
  %1805 = vmatpush2.bf16.msra.mxu0 0
  %1806 = vmatprep.subr.bf16.mxu0 0
  %1807 = vmatpush2.bf16.msra.mxu0 0
  %1808 = vmatprep.subr.bf16.mxu0 0
  %1809 = vmatpush2.bf16.msra.mxu0 0
  %1810 = vmatprep.subr.bf16.mxu0 0
  %1811 = vmatpush2.bf16.msra.mxu0 0
  %1812 = vmatprep.subr.bf16.mxu0 %v1678
  %1813 = vmatpush2.bf16.msra.mxu0 %v1677
  %1814 = vmatprep.mubr.bf16.mxu0 %v1737
  %1815 = vmatmul.mubr.bf16.gmra.mxu0 %v1462
  %v1816 = vpop.f32.mrf.mxu0
  %v1817 = vadd.f32 0.0, %v1816
  %v1818 = vpop.f32.mrf.mxu0
  %v1819 = vadd.f32 0.0, %v1818
  %v1820 = vpop.f32.mrf.mxu0
  %v1821 = vadd.f32 0.0, %v1820
  %v1822 = vpop.f32.mrf.mxu0
  %v1823 = vadd.f32 0.0, %v1822
  %1824 = vdwg.mxu0
  %1825 = vmatprep.subr.bf16.mxu0 %v1674
  %1826 = vmatpush1.bf16.msra.mxu0 %v1673
  %1827 = vmatprep.subr.bf16.mxu0 %v1668
  %1828 = vmatpush1.bf16.msra.mxu0 %v1667
  %1829 = vmatprep.subr.bf16.mxu0 %v1662
  %1830 = vmatpush1.bf16.msra.mxu0 %v1661
  %1831 = vmatprep.subr.bf16.mxu0 %v1656
  %1832 = vmatpush1.bf16.msra.mxu0 %v1655
  %1833 = vmatprep.subr.bf16.mxu0 %v1650
  %1834 = vmatpush1.bf16.msra.mxu0 %v1649
  %1835 = vmatprep.subr.bf16.mxu0 %v1644
  %1836 = vmatpush1.bf16.msra.mxu0 %v1643
  %1837 = vmatprep.subr.bf16.mxu0 %v1638
  %1838 = vmatpush1.bf16.msra.mxu0 %v1637
  %1839 = vmatprep.subr.bf16.mxu0 %v1632
  %1840 = vmatpush1.bf16.msra.mxu0 %v1631
  %1841 = vmatprep.subr.bf16.mxu0 0
  %1842 = vmatpush2.bf16.msra.mxu0 0
  %1843 = vmatprep.subr.bf16.mxu0 0
  %1844 = vmatpush2.bf16.msra.mxu0 0
  %1845 = vmatprep.subr.bf16.mxu0 0
  %1846 = vmatpush2.bf16.msra.mxu0 0
  %1847 = vmatprep.subr.bf16.mxu0 0
  %1848 = vmatpush2.bf16.msra.mxu0 0
  %1849 = vmatprep.subr.bf16.mxu0 0
  %1850 = vmatpush2.bf16.msra.mxu0 0
  %1851 = vmatprep.subr.bf16.mxu0 0
  %1852 = vmatpush2.bf16.msra.mxu0 0
  %1853 = vmatprep.subr.bf16.mxu0 0
  %1854 = vmatpush2.bf16.msra.mxu0 0
  %1855 = vmatprep.subr.bf16.mxu0 %v1680
  %1856 = vmatpush2.bf16.msra.mxu0 %v1679
  %1857 = vmatprep.mubr.bf16.mxu0 %v1737
  %1858 = vmatmul.mubr.bf16.gmra.mxu0 %v1462
  %v1859 = vpop.f32.mrf.mxu0
  %v1860 = vadd.f32 0.0, %v1859
  %v1861 = vpop.f32.mrf.mxu0
  %v1862 = vadd.f32 0.0, %v1861
  %v1863 = vpop.f32.mrf.mxu0
  %v1864 = vadd.f32 0.0, %v1863
  %v1865 = vpop.f32.mrf.mxu0
  %v1866 = vadd.f32 0.0, %v1865
  %1867 = vdwg.mxu0
  %v1868 = vmul.f32 %v1774, %v724
  %v1869 = vmul.f32 %v1776, %v728
  %v1870 = vmul.f32 %v1817, %v732
  %v1871 = vmul.f32 %v1819, %v736
  %v1872 = vmul.f32 %v1860, %v740
  %v1873 = vmul.f32 %v1862, %v744
  %v1874 = vmul.f32 %v1778, %v724
  %v1875 = vmul.f32 %v1780, %v728
  %v1876 = vmul.f32 %v1821, %v732
  %v1877 = vmul.f32 %v1823, %v736
  %v1878 = vmul.f32 %v1864, %v740
  %v1879 = vmul.f32 %v1866, %v744
  %v1880 = vadd.f32 %v1868, %v1869
  %v1881 = vadd.f32 %v1880, %v1870
  %v1882 = vadd.f32 %v1881, %v1871
  %v1883 = vadd.f32 %v1882, %v1872
  %v1884 = vsel %vm767, %v1873, 0.0
  %v1885 = vadd.f32 %v1883, %v1884
  %1886 = vadd.xlane.f32.xlu0 %v1885
  %v1887 = vpop.xlane.xlu0 %1886
  %v1888 = vadd.f32 %v1874, %v1875
  %v1889 = vadd.f32 %v1888, %v1876
  %v1890 = vadd.f32 %v1889, %v1877
  %v1891 = vadd.f32 %v1890, %v1878
  %v1892 = vsel %vm767, %v1879, 0.0
  %v1893 = vadd.f32 %v1891, %v1892
  %1894 = vadd.xlane.f32.xlu0 %v1893
  %v1895 = vpop.xlane.xlu0 %1894
  %v1896 = vmul.f32 %v1887, 0.001953125
  %v1897 = vmul.f32 %v1895, 0.001953125
  %v1898 = vmul.f32 %v1868, %v1868
  %v1899 = vmul.f32 %v1869, %v1869
  %v1900 = vmul.f32 %v1870, %v1870
  %v1901 = vmul.f32 %v1871, %v1871
  %v1902 = vmul.f32 %v1872, %v1872
  %v1903 = vmul.f32 %v1873, %v1873
  %v1904 = vmul.f32 %v1874, %v1874
  %v1905 = vmul.f32 %v1875, %v1875
  %v1906 = vmul.f32 %v1876, %v1876
  %v1907 = vmul.f32 %v1877, %v1877
  %v1908 = vmul.f32 %v1878, %v1878
  %v1909 = vmul.f32 %v1879, %v1879
  %v1910 = vadd.f32 %v1898, %v1899
  %v1911 = vadd.f32 %v1910, %v1900
  %v1912 = vadd.f32 %v1911, %v1901
  %v1913 = vadd.f32 %v1912, %v1902
  %v1914 = vsel %vm767, %v1903, 0.0
  %v1915 = vadd.f32 %v1913, %v1914
  %1916 = vadd.xlane.f32.xlu0 %v1915
  %v1917 = vpop.xlane.xlu0 %1916
  %v1918 = vadd.f32 %v1904, %v1905
  %v1919 = vadd.f32 %v1918, %v1906
  %v1920 = vadd.f32 %v1919, %v1907
  %v1921 = vadd.f32 %v1920, %v1908
  %v1922 = vsel %vm767, %v1909, 0.0
  %v1923 = vadd.f32 %v1921, %v1922
  %1924 = vadd.xlane.f32.xlu0 %v1923
  %v1925 = vpop.xlane.xlu0 %1924
  %v1926 = vmul.f32 %v1917, 0.001953125
  %v1927 = vmul.f32 %v1925, 0.001953125
  %v1928 = vmul.f32 %v1896, %v1896
  %v1929 = vmul.f32 %v1897, %v1897
  %v1930 = vsub.f32 %v1926, %v1928
  %v1931 = vsub.f32 %v1927, %v1929
  %v1932 = vmax.f32 %v1930, 0.0
  %v1933 = vmax.f32 %v1931, 0.0
  %v1934 = vld [vmem:[%s4] sm:$0xff]
  %v1935 = vld [vmem:[%s4 + $0x8] sm:$0xff]
  %v1936 = vadd.f32 %v1932, 1e-05
  %v1937 = vadd.f32 %v1933, 1e-05
  %v1938 = vrsqrt.pop %v1936
  %v1939 = vrsqrt.pop %v1937
  %v1940 = vmul.f32 %v1934, %v1938
  %v1941 = vmul.f32 %v1935, %v1939
  %1943 = vset.pattern.permute.xlu0 0
  %1944 = vperm.xlu0 %1943, %v1940
  %v1945 = vpop.permute.xlu0 %1944
  %1948 = vset.pattern.permute.xlu0 0
  %1949 = vperm.xlu0 %1948, %v1941
  %v1950 = vpop.permute.xlu0 %1949
  %v1952 = vmul.f32 %v1774, %v1945
  %v1953 = vmul.f32 %v1776, %v1945
  %v1954 = vmul.f32 %v1817, %v1945
  %v1955 = vmul.f32 %v1819, %v1945
  %v1956 = vmul.f32 %v1860, %v1945
  %v1957 = vmul.f32 %v1862, %v1945
  %v1958 = vmul.f32 %v1778, %v1950
  %v1959 = vmul.f32 %v1780, %v1950
  %v1960 = vmul.f32 %v1821, %v1950
  %v1961 = vmul.f32 %v1823, %v1950
  %v1962 = vmul.f32 %v1864, %v1950
  %v1963 = vmul.f32 %v1866, %v1950
  %v1964 = vmul.f32 %v1896, %v1940
  %v1965 = vmul.f32 %v1897, %v1941
  %1968 = vrot.lane.b32.xlu0 %v1964, 1
  %v1969 = vpop.permute.xlu0 %1968
  %1970 = vrot.lane.b32.xlu0 %v1965, 1
  %v1971 = vpop.permute.xlu0 %1970
  %v1974 = vsub.f32 %v1934, %v1969
  %v1975 = vsub.f32 %v1935, %v1971
  %1977 = vset.pattern.permute.xlu0 1
  %1978 = vperm.xlu0 %1977, %v1974
  %v1979 = vpop.permute.xlu0 %1978
  %1982 = vset.pattern.permute.xlu0 1
  %1983 = vperm.xlu0 %1982, %v1975
  %v1984 = vpop.permute.xlu0 %1983
  %v1986 = vadd.f32 %v1952, %v1979
  %v1987 = vadd.f32 %v1953, %v1979
  %v1988 = vadd.f32 %v1954, %v1979
  %v1989 = vadd.f32 %v1955, %v1979
  %v1990 = vadd.f32 %v1956, %v1979
  %v1991 = vadd.f32 %v1957, %v1979
  %v1992 = vadd.f32 %v1958, %v1984
  %v1993 = vadd.f32 %v1959, %v1984
  %v1994 = vadd.f32 %v1960, %v1984
  %v1995 = vadd.f32 %v1961, %v1984
  %v1996 = vadd.f32 %v1962, %v1984
  %v1997 = vadd.f32 %v1963, %v1984
  %v1998 = vld [vmem:[#allocation4] sm:$0xff]
  %v1999 = vld [vmem:[#allocation4 + $0x8] sm:$0xff]
  %v2000 = vld [vmem:[#allocation4 + $0x10] sm:$0xff]
  %v2001 = vld [vmem:[#allocation4 + $0x18] sm:$0xff]
  %v2002 = vld [vmem:[#allocation4 + $0x20] sm:$0xff]
  %v2003 = vld [vmem:[#allocation4 + $0x28] sm:$0xff]
  %v2004 = vld [vmem:[#allocation4 + $0x30] sm:$0xff]
  %v2005 = vld [vmem:[#allocation4 + $0x38] sm:$0xff]
  %v2006 = vld [vmem:[#allocation4 + $0x40] sm:$0xff]
  %v2007 = vld [vmem:[#allocation4 + $0x48] sm:$0xff]
  %v2008 = vld [vmem:[#allocation4 + $0x50] sm:$0xff]
  %v2009 = vld [vmem:[#allocation4 + $0x58] sm:$0xff]
  %v2010 = vadd.f32 %v1986, %v1998
  %v2011 = vadd.f32 %v1987, %v1999
  %v2012 = vadd.f32 %v1988, %v2000
  %v2013 = vadd.f32 %v1989, %v2001
  %v2014 = vadd.f32 %v1990, %v2002
  %v2015 = vadd.f32 %v1991, %v2003
  %v2016 = vadd.f32 %v1992, %v2004
  %v2017 = vadd.f32 %v1993, %v2005
  %v2018 = vadd.f32 %v1994, %v2006
  %v2019 = vadd.f32 %v1995, %v2007
  %v2020 = vadd.f32 %v1996, %v2008
  %v2021 = vadd.f32 %v1997, %v2009
  %v2022 = vmax.f32 %v2010, 0.0
  %v2023 = vmax.f32 %v2011, 0.0
  %v2024 = vmax.f32 %v2012, 0.0
  %v2025 = vmax.f32 %v2013, 0.0
  %v2026 = vmax.f32 %v2014, 0.0
  %v2027 = vmax.f32 %v2015, 0.0
  %v2028 = vmax.f32 %v2016, 0.0
  %v2029 = vmax.f32 %v2017, 0.0
  %v2030 = vmax.f32 %v2018, 0.0
  %v2031 = vmax.f32 %v2019, 0.0
  %v2032 = vmax.f32 %v2020, 0.0
  %v2033 = vmax.f32 %v2021, 0.0
  %v2034 = vmul.f32 %v2022, %v724
  %v2035 = vmul.f32 %v2023, %v728
  %v2036 = vmul.f32 %v2024, %v732
  %v2037 = vmul.f32 %v2025, %v736
  %v2038 = vmul.f32 %v2026, %v740
  %v2039 = vmul.f32 %v2027, %v744
  %v2040 = vmul.f32 %v2028, %v724
  %v2041 = vmul.f32 %v2029, %v728
  %v2042 = vmul.f32 %v2030, %v732
  %v2043 = vmul.f32 %v2031, %v736
  %v2044 = vmul.f32 %v2032, %v740
  %v2045 = vmul.f32 %v2033, %v744
  %v2046 = vpack.c.bf16 %v2040, %v2034
  %v2047 = vpack.c.bf16 %v2041, %v2035
  %v2048 = vpack.c.bf16 %v2042, %v2036
  %v2049 = vpack.c.bf16 %v2043, %v2037
  %v2050 = vpack.c.bf16 %v2044, %v2038
  %v2051 = vpack.c.bf16 %v2045, %v2039
  %v2058 = vunpack.c.l.b16 %v2046
  %v2059 = vunpack.c.l.b16 %v2047
  %v2060 = vunpack.c.l.b16 %v2048
  %v2061 = vunpack.c.l.b16 %v2049
  %v2062 = vunpack.c.l.b16 %v2050
  %v2063 = vunpack.c.l.b16 %v2051
  %v2064 = vunpack.c.h.b16 %v2046
  %v2065 = vunpack.c.h.b16 %v2047
  %v2066 = vunpack.c.h.b16 %v2048
  %v2067 = vunpack.c.h.b16 %v2049
  %v2068 = vunpack.c.h.b16 %v2050
  %v2069 = vunpack.c.h.b16 %v2051
  %v2070 = vpack.c.b16 %v2059, %v2058
  %v2071 = vpack.c.b16 %v2061, %v2060
  %v2072 = vpack.c.b16 %v2063, %v2062
  %v2073 = vpack.c.b16 %v2065, %v2064
  %v2074 = vpack.c.b16 %v2067, %v2066
  %v2075 = vpack.c.b16 %v2069, %v2068
  %2082 = vst [vmem:[#allocation2 + $0x4] sm:$0xff] %v2070
  %2083 = vst [vmem:[#allocation2 + $0xc] sm:$0xff] %v2071
  %2084 = vst.msk [vmem:[#allocation2 + $0x14] sm:$0xff] %vm36, %v2072
  %2085 = vst [vmem:[#allocation2 + $0x24] sm:$0xff] %v2073
  %2086 = vst [vmem:[#allocation2 + $0x2c] sm:$0xff] %v2074
  %2087 = vst.msk [vmem:[#allocation2 + $0x34] sm:$0xff] %vm36, %v2075
  %v2088 = vld [vmem:[#allocation2] sm:$0xff]
  %v2089 = vld [vmem:[#allocation2 + $0x8] sm:$0xff]
  %v2090 = vld [vmem:[#allocation2 + $0x10] sm:$0xff]
  %v2091 = vld [vmem:[#allocation2 + $0x20] sm:$0xff]
  %v2092 = vld [vmem:[#allocation2 + $0x28] sm:$0xff]
  %v2093 = vld [vmem:[#allocation2 + $0x30] sm:$0xff]
  %2100 = vrot.lane.b32.xlu0 %v2088, 19
  %v2101 = vpop.permute.xlu0 %2100
  %2102 = vrot.lane.b32.xlu0 %v2089, 19
  %v2103 = vpop.permute.xlu0 %2102
  %2104 = vrot.lane.b32.xlu0 %v2090, 19
  %v2105 = vpop.permute.xlu0 %2104
  %2106 = vrot.lane.b32.xlu0 %v2091, 19
  %v2107 = vpop.permute.xlu0 %2106
  %2108 = vrot.lane.b32.xlu0 %v2092, 19
  %v2109 = vpop.permute.xlu0 %2108
  %2110 = vrot.lane.b32.xlu0 %v2093, 19
  %v2111 = vpop.permute.xlu0 %2110
  %v2112 = vrot.slane %v2101, 4
  %v2113 = vrot.slane %v2103, 4
  %v2114 = vrot.slane %v2105, 4
  %v2115 = vrot.slane %v2107, 4
  %v2116 = vrot.slane %v2109, 4
  %v2117 = vrot.slane %v2111, 4
  %v2118 = vsel %vm77, %v2112, %v2113
  %v2119 = vsel %vm79, %v2101, %v2118
  %v2120 = vsel %vm77, %v2113, %v2114
  %v2121 = vsel %vm79, %v2103, %v2120
  %v2122 = vsel %vm79, %v2105, %v2114
  %v2123 = vsel %vm77, %v2115, %v2116
  %v2124 = vsel %vm79, %v2107, %v2123
  %v2125 = vsel %vm77, %v2116, %v2117
  %v2126 = vsel %vm79, %v2109, %v2125
  %v2127 = vsel %vm79, %v2111, %v2117
  %2134 = vst [vmem:[#allocation3] sm:$0xff] %v2119
  %2135 = vst [vmem:[#allocation3 + $0x8] sm:$0xff] %v2121
  %2136 = vst.msk [vmem:[#allocation3 + $0x10] sm:$0xff] %vm36, %v2122
  %2137 = vst [vmem:[#allocation3 + $0x18] sm:$0xff] %v2124
  %2138 = vst [vmem:[#allocation3 + $0x20] sm:$0xff] %v2126
  %2139 = vst.msk [vmem:[#allocation3 + $0x28] sm:$0xff] %vm36, %v2127
  %v2140 = vld [vmem:[#allocation2] sm:$0xff]
  %v2141 = vld [vmem:[#allocation2 + $0x8] sm:$0xff]
  %v2142 = vld [vmem:[#allocation2 + $0x10] sm:$0xff]
  %v2143 = vld [vmem:[#allocation2 + $0x20] sm:$0xff]
  %v2144 = vld [vmem:[#allocation2 + $0x28] sm:$0xff]
  %v2145 = vld [vmem:[#allocation2 + $0x30] sm:$0xff]
  %2152 = vrot.lane.b32.xlu0 %v2140, 18
  %v2153 = vpop.permute.xlu0 %2152
  %2154 = vrot.lane.b32.xlu0 %v2141, 18
  %v2155 = vpop.permute.xlu0 %2154
  %2156 = vrot.lane.b32.xlu0 %v2142, 18
  %v2157 = vpop.permute.xlu0 %2156
  %2158 = vrot.lane.b32.xlu0 %v2143, 18
  %v2159 = vpop.permute.xlu0 %2158
  %2160 = vrot.lane.b32.xlu0 %v2144, 18
  %v2161 = vpop.permute.xlu0 %2160
  %2162 = vrot.lane.b32.xlu0 %v2145, 18
  %v2163 = vpop.permute.xlu0 %2162
  %v2164 = vrot.slane %v2153, 4
  %v2165 = vrot.slane %v2155, 4
  %v2166 = vrot.slane %v2157, 4
  %v2167 = vrot.slane %v2159, 4
  %v2168 = vrot.slane %v2161, 4
  %v2169 = vrot.slane %v2163, 4
  %v2170 = vsel %vm77, %v2164, %v2165
  %v2171 = vsel %vm130, %v2153, %v2170
  %v2172 = vsel %vm77, %v2165, %v2166
  %v2173 = vsel %vm130, %v2155, %v2172
  %v2174 = vsel %vm130, %v2157, %v2166
  %v2175 = vsel %vm77, %v2167, %v2168
  %v2176 = vsel %vm130, %v2159, %v2175
  %v2177 = vsel %vm77, %v2168, %v2169
  %v2178 = vsel %vm130, %v2161, %v2177
  %v2179 = vsel %vm130, %v2163, %v2169
  %2186 = vst [vmem:[#allocation3 + $0x30] sm:$0xff] %v2171
  %2187 = vst [vmem:[#allocation3 + $0x38] sm:$0xff] %v2173
  %2188 = vst.msk [vmem:[#allocation3 + $0x40] sm:$0xff] %vm36, %v2174
  %2189 = vst [vmem:[#allocation3 + $0x48] sm:$0xff] %v2176
  %2190 = vst [vmem:[#allocation3 + $0x50] sm:$0xff] %v2178
  %2191 = vst.msk [vmem:[#allocation3 + $0x58] sm:$0xff] %vm36, %v2179
  %v2192 = vld [vmem:[#allocation2] sm:$0xff]
  %v2193 = vld [vmem:[#allocation2 + $0x8] sm:$0xff]
  %v2194 = vld [vmem:[#allocation2 + $0x10] sm:$0xff]
  %v2195 = vld [vmem:[#allocation2 + $0x20] sm:$0xff]
  %v2196 = vld [vmem:[#allocation2 + $0x28] sm:$0xff]
  %v2197 = vld [vmem:[#allocation2 + $0x30] sm:$0xff]
  %2204 = vrot.lane.b32.xlu0 %v2192, 17
  %v2205 = vpop.permute.xlu0 %2204
  %2206 = vrot.lane.b32.xlu0 %v2193, 17
  %v2207 = vpop.permute.xlu0 %2206
  %2208 = vrot.lane.b32.xlu0 %v2194, 17
  %v2209 = vpop.permute.xlu0 %2208
  %2210 = vrot.lane.b32.xlu0 %v2195, 17
  %v2211 = vpop.permute.xlu0 %2210
  %2212 = vrot.lane.b32.xlu0 %v2196, 17
  %v2213 = vpop.permute.xlu0 %2212
  %2214 = vrot.lane.b32.xlu0 %v2197, 17
  %v2215 = vpop.permute.xlu0 %2214
  %v2216 = vrot.slane %v2205, 4
  %v2217 = vrot.slane %v2207, 4
  %v2218 = vrot.slane %v2209, 4
  %v2219 = vrot.slane %v2211, 4
  %v2220 = vrot.slane %v2213, 4
  %v2221 = vrot.slane %v2215, 4
  %v2222 = vsel %vm77, %v2216, %v2217
  %v2223 = vsel %vm180, %v2205, %v2222
  %v2224 = vsel %vm77, %v2217, %v2218
  %v2225 = vsel %vm180, %v2207, %v2224
  %v2226 = vsel %vm180, %v2209, %v2218
  %v2227 = vsel %vm77, %v2219, %v2220
  %v2228 = vsel %vm180, %v2211, %v2227
  %v2229 = vsel %vm77, %v2220, %v2221
  %v2230 = vsel %vm180, %v2213, %v2229
  %v2231 = vsel %vm180, %v2215, %v2221
  %2238 = vst [vmem:[#allocation3 + $0x60] sm:$0xff] %v2223
  %2239 = vst [vmem:[#allocation3 + $0x68] sm:$0xff] %v2225
  %2240 = vst.msk [vmem:[#allocation3 + $0x70] sm:$0xff] %vm36, %v2226
  %2241 = vst [vmem:[#allocation3 + $0x78] sm:$0xff] %v2228
  %2242 = vst [vmem:[#allocation3 + $0x80] sm:$0xff] %v2230
  %2243 = vst.msk [vmem:[#allocation3 + $0x88] sm:$0xff] %vm36, %v2231
  %v2244 = vld [vmem:[#allocation2] sm:$0xff]
  %v2245 = vld [vmem:[#allocation2 + $0x8] sm:$0xff]
  %v2246 = vld [vmem:[#allocation2 + $0x10] sm:$0xff]
  %v2247 = vld [vmem:[#allocation2 + $0x18] sm:$0xf]
  %v2248 = vld [vmem:[#allocation2 + $0x20] sm:$0xff]
  %v2249 = vld [vmem:[#allocation2 + $0x28] sm:$0xff]
  %v2250 = vld [vmem:[#allocation2 + $0x30] sm:$0xff]
  %v2251 = vld [vmem:[#allocation2 + $0x38] sm:$0xf]
  %2260 = vrot.lane.b32.xlu0 %v2244, 1
  %v2261 = vpop.permute.xlu0 %2260
  %2262 = vrot.lane.b32.xlu0 %v2245, 1
  %v2263 = vpop.permute.xlu0 %2262
  %2264 = vrot.lane.b32.xlu0 %v2246, 1
  %v2265 = vpop.permute.xlu0 %2264
  %2266 = vrot.lane.b32.xlu0 %v2247, 1
  %v2267 = vpop.permute.xlu0 %2266
  %2268 = vrot.lane.b32.xlu0 %v2248, 1
  %v2269 = vpop.permute.xlu0 %2268
  %2270 = vrot.lane.b32.xlu0 %v2249, 1
  %v2271 = vpop.permute.xlu0 %2270
  %2272 = vrot.lane.b32.xlu0 %v2250, 1
  %v2273 = vpop.permute.xlu0 %2272
  %2274 = vrot.lane.b32.xlu0 %v2251, 1
  %v2275 = vpop.permute.xlu0 %2274
  %v2276 = vrot.slane %v2261, 4
  %v2277 = vrot.slane %v2263, 4
  %v2278 = vrot.slane %v2265, 4
  %v2279 = vrot.slane %v2267, 4
  %v2280 = vrot.slane %v2269, 4
  %v2281 = vrot.slane %v2271, 4
  %v2282 = vrot.slane %v2273, 4
  %v2283 = vrot.slane %v2275, 4
  %v2284 = vsel %vm77, %v2276, %v2277
  %v2285 = vsel %vm238, %v2261, %v2284
  %v2286 = vsel %vm77, %v2277, %v2278
  %v2287 = vsel %vm238, %v2263, %v2286
  %v2288 = vsel %vm77, %v2278, %v2279
  %v2289 = vsel %vm238, %v2265, %v2288
  %v2290 = vsel %vm77, %v2280, %v2281
  %v2291 = vsel %vm238, %v2269, %v2290
  %v2292 = vsel %vm77, %v2281, %v2282
  %v2293 = vsel %vm238, %v2271, %v2292
  %v2294 = vsel %vm77, %v2282, %v2283
  %v2295 = vsel %vm238, %v2273, %v2294
  %2302 = vst [vmem:[#allocation3 + $0x90] sm:$0xff] %v2285
  %2303 = vst [vmem:[#allocation3 + $0x98] sm:$0xff] %v2287
  %2304 = vst.msk [vmem:[#allocation3 + $0xa0] sm:$0xff] %vm36, %v2289
  %2305 = vst [vmem:[#allocation3 + $0xa8] sm:$0xff] %v2291
  %2306 = vst [vmem:[#allocation3 + $0xb0] sm:$0xff] %v2293
  %2307 = vst.msk [vmem:[#allocation3 + $0xb8] sm:$0xff] %vm36, %v2295
  %v2308 = vld [vmem:[#allocation2 + $0x4] sm:$0xff]
  %v2309 = vld [vmem:[#allocation2 + $0xc] sm:$0xff]
  %v2310 = vld [vmem:[#allocation2 + $0x14] sm:$0xff]
  %v2311 = vld [vmem:[#allocation2 + $0x24] sm:$0xff]
  %v2312 = vld [vmem:[#allocation2 + $0x2c] sm:$0xff]
  %v2313 = vld [vmem:[#allocation2 + $0x34] sm:$0xff]
  %2314 = vst [vmem:[#allocation3 + $0xc0] sm:$0xff] %v2308
  %2315 = vst [vmem:[#allocation3 + $0xc8] sm:$0xff] %v2309
  %2316 = vst.msk [vmem:[#allocation3 + $0xd0] sm:$0xff] %vm36, %v2310
  %2317 = vst [vmem:[#allocation3 + $0xd8] sm:$0xff] %v2311
  %2318 = vst [vmem:[#allocation3 + $0xe0] sm:$0xff] %v2312
  %2319 = vst.msk [vmem:[#allocation3 + $0xe8] sm:$0xff] %vm36, %v2313
  %v2320 = vld [vmem:[#allocation2 + $0x4] sm:$0xff]
  %v2321 = vld [vmem:[#allocation2 + $0xc] sm:$0xff]
  %v2322 = vld [vmem:[#allocation2 + $0x14] sm:$0xff]
  %v2323 = vld [vmem:[#allocation2 + $0x24] sm:$0xff]
  %v2324 = vld [vmem:[#allocation2 + $0x2c] sm:$0xff]
  %v2325 = vld [vmem:[#allocation2 + $0x34] sm:$0xff]
  %2332 = vrot.lane.b32.xlu0 %v2320, 127
  %v2333 = vpop.permute.xlu0 %2332
  %2334 = vrot.lane.b32.xlu0 %v2321, 127
  %v2335 = vpop.permute.xlu0 %2334
  %2336 = vrot.lane.b32.xlu0 %v2322, 127
  %v2337 = vpop.permute.xlu0 %2336
  %2338 = vrot.lane.b32.xlu0 %v2323, 127
  %v2339 = vpop.permute.xlu0 %2338
  %2340 = vrot.lane.b32.xlu0 %v2324, 127
  %v2341 = vpop.permute.xlu0 %2340
  %2342 = vrot.lane.b32.xlu0 %v2325, 127
  %v2343 = vpop.permute.xlu0 %2342
  %v2344 = vrot.slane %v2333, 4
  %v2345 = vrot.slane %v2335, 4
  %v2346 = vrot.slane %v2337, 4
  %v2347 = vrot.slane %v2339, 4
  %v2348 = vrot.slane %v2341, 4
  %v2349 = vrot.slane %v2343, 4
  %v2350 = vsel %vm77, %v2344, %v2345
  %v2351 = vsel %vm319, %v2333, %v2350
  %v2352 = vsel %vm77, %v2345, %v2346
  %v2353 = vsel %vm319, %v2335, %v2352
  %v2354 = vsel %vm319, %v2337, %v2346
  %v2355 = vsel %vm77, %v2347, %v2348
  %v2356 = vsel %vm319, %v2339, %v2355
  %v2357 = vsel %vm77, %v2348, %v2349
  %v2358 = vsel %vm319, %v2341, %v2357
  %v2359 = vsel %vm319, %v2343, %v2349
  %2366 = vst [vmem:[#allocation3 + $0xf0] sm:$0xff] %v2351
  %2367 = vst [vmem:[#allocation3 + $0xf8] sm:$0xff] %v2353
  %2368 = vst.msk [vmem:[#allocation3 + $0x100] sm:$0xff] %vm36, %v2354
  %2369 = vst [vmem:[#allocation3 + $0x108] sm:$0xff] %v2356
  %2370 = vst [vmem:[#allocation3 + $0x110] sm:$0xff] %v2358
  %2371 = vst.msk [vmem:[#allocation3 + $0x118] sm:$0xff] %vm36, %v2359
  %v2372 = vld [vmem:[#allocation2 + $0x4] sm:$0xff]
  %v2373 = vld [vmem:[#allocation2 + $0xc] sm:$0xff]
  %v2374 = vld [vmem:[#allocation2 + $0x14] sm:$0xff]
  %v2375 = vld [vmem:[#allocation2 + $0x24] sm:$0xff]
  %v2376 = vld [vmem:[#allocation2 + $0x2c] sm:$0xff]
  %v2377 = vld [vmem:[#allocation2 + $0x34] sm:$0xff]
  %2384 = vrot.lane.b32.xlu0 %v2372, 111
  %v2385 = vpop.permute.xlu0 %2384
  %2386 = vrot.lane.b32.xlu0 %v2373, 111
  %v2387 = vpop.permute.xlu0 %2386
  %2388 = vrot.lane.b32.xlu0 %v2374, 111
  %v2389 = vpop.permute.xlu0 %2388
  %2390 = vrot.lane.b32.xlu0 %v2375, 111
  %v2391 = vpop.permute.xlu0 %2390
  %2392 = vrot.lane.b32.xlu0 %v2376, 111
  %v2393 = vpop.permute.xlu0 %2392
  %2394 = vrot.lane.b32.xlu0 %v2377, 111
  %v2395 = vpop.permute.xlu0 %2394
  %v2396 = vrot.slane %v2385, 4
  %v2397 = vrot.slane %v2387, 4
  %v2398 = vrot.slane %v2389, 4
  %v2399 = vrot.slane %v2391, 4
  %v2400 = vrot.slane %v2393, 4
  %v2401 = vrot.slane %v2395, 4
  %v2402 = vsel %vm77, %v2396, %v2397
  %v2403 = vsel %vm366, %v2385, %v2402
  %v2404 = vsel %vm77, %v2397, %v2398
  %v2405 = vsel %vm366, %v2387, %v2404
  %v2406 = vsel %vm366, %v2389, %v2398
  %v2407 = vsel %vm77, %v2399, %v2400
  %v2408 = vsel %vm366, %v2391, %v2407
  %v2409 = vsel %vm77, %v2400, %v2401
  %v2410 = vsel %vm366, %v2393, %v2409
  %v2411 = vsel %vm366, %v2395, %v2401
  %2418 = vst [vmem:[#allocation3 + $0x120] sm:$0xff] %v2403
  %2419 = vst [vmem:[#allocation3 + $0x128] sm:$0xff] %v2405
  %2420 = vst.msk [vmem:[#allocation3 + $0x130] sm:$0xff] %vm36, %v2406
  %2421 = vst [vmem:[#allocation3 + $0x138] sm:$0xff] %v2408
  %2422 = vst [vmem:[#allocation3 + $0x140] sm:$0xff] %v2410
  %2423 = vst.msk [vmem:[#allocation3 + $0x148] sm:$0xff] %vm36, %v2411
  %v2424 = vld [vmem:[#allocation2 + $0x4] sm:$0xff]
  %v2425 = vld [vmem:[#allocation2 + $0xc] sm:$0xff]
  %v2426 = vld [vmem:[#allocation2 + $0x14] sm:$0xff]
  %v2427 = vld [vmem:[#allocation2 + $0x24] sm:$0xff]
  %v2428 = vld [vmem:[#allocation2 + $0x2c] sm:$0xff]
  %v2429 = vld [vmem:[#allocation2 + $0x34] sm:$0xff]
  %2436 = vrot.lane.b32.xlu0 %v2424, 110
  %v2437 = vpop.permute.xlu0 %2436
  %2438 = vrot.lane.b32.xlu0 %v2425, 110
  %v2439 = vpop.permute.xlu0 %2438
  %2440 = vrot.lane.b32.xlu0 %v2426, 110
  %v2441 = vpop.permute.xlu0 %2440
  %2442 = vrot.lane.b32.xlu0 %v2427, 110
  %v2443 = vpop.permute.xlu0 %2442
  %2444 = vrot.lane.b32.xlu0 %v2428, 110
  %v2445 = vpop.permute.xlu0 %2444
  %2446 = vrot.lane.b32.xlu0 %v2429, 110
  %v2447 = vpop.permute.xlu0 %2446
  %v2448 = vrot.slane %v2437, 4
  %v2449 = vrot.slane %v2439, 4
  %v2450 = vrot.slane %v2441, 4
  %v2451 = vrot.slane %v2443, 4
  %v2452 = vrot.slane %v2445, 4
  %v2453 = vrot.slane %v2447, 4
  %v2454 = vsel %vm77, %v2448, %v2449
  %v2455 = vsel %vm414, %v2437, %v2454
  %v2456 = vsel %vm77, %v2449, %v2450
  %v2457 = vsel %vm414, %v2439, %v2456
  %v2458 = vsel %vm414, %v2441, %v2450
  %v2459 = vsel %vm77, %v2451, %v2452
  %v2460 = vsel %vm414, %v2443, %v2459
  %v2461 = vsel %vm77, %v2452, %v2453
  %v2462 = vsel %vm414, %v2445, %v2461
  %v2463 = vsel %vm414, %v2447, %v2453
  %2470 = vst [vmem:[#allocation3 + $0x150] sm:$0xff] %v2455
  %2471 = vst [vmem:[#allocation3 + $0x158] sm:$0xff] %v2457
  %2472 = vst.msk [vmem:[#allocation3 + $0x160] sm:$0xff] %vm36, %v2458
  %2473 = vst [vmem:[#allocation3 + $0x168] sm:$0xff] %v2460
  %2474 = vst [vmem:[#allocation3 + $0x170] sm:$0xff] %v2462
  %2475 = vst.msk [vmem:[#allocation3 + $0x178] sm:$0xff] %vm36, %v2463
  %v2476 = vld [vmem:[#allocation2 + $0x4] sm:$0xff]
  %v2477 = vld [vmem:[#allocation2 + $0xc] sm:$0xff]
  %v2478 = vld [vmem:[#allocation2 + $0x14] sm:$0xff]
  %v2479 = vld [vmem:[#allocation2 + $0x24] sm:$0xff]
  %v2480 = vld [vmem:[#allocation2 + $0x2c] sm:$0xff]
  %v2481 = vld [vmem:[#allocation2 + $0x34] sm:$0xff]
  %2488 = vrot.lane.b32.xlu0 %v2476, 109
  %v2489 = vpop.permute.xlu0 %2488
  %2490 = vrot.lane.b32.xlu0 %v2477, 109
  %v2491 = vpop.permute.xlu0 %2490
  %2492 = vrot.lane.b32.xlu0 %v2478, 109
  %v2493 = vpop.permute.xlu0 %2492
  %2494 = vrot.lane.b32.xlu0 %v2479, 109
  %v2495 = vpop.permute.xlu0 %2494
  %2496 = vrot.lane.b32.xlu0 %v2480, 109
  %v2497 = vpop.permute.xlu0 %2496
  %2498 = vrot.lane.b32.xlu0 %v2481, 109
  %v2499 = vpop.permute.xlu0 %2498
  %v2500 = vrot.slane %v2489, 4
  %v2501 = vrot.slane %v2491, 4
  %v2502 = vrot.slane %v2493, 4
  %v2503 = vrot.slane %v2495, 4
  %v2504 = vrot.slane %v2497, 4
  %v2505 = vrot.slane %v2499, 4
  %v2506 = vsel %vm77, %v2500, %v2501
  %v2507 = vsel %vm461, %v2489, %v2506
  %v2508 = vsel %vm77, %v2501, %v2502
  %v2509 = vsel %vm461, %v2491, %v2508
  %v2510 = vsel %vm461, %v2493, %v2502
  %v2511 = vsel %vm77, %v2503, %v2504
  %v2512 = vsel %vm461, %v2495, %v2511
  %v2513 = vsel %vm77, %v2504, %v2505
  %v2514 = vsel %vm461, %v2497, %v2513
  %v2515 = vsel %vm461, %v2499, %v2505
  %2522 = vst [vmem:[#allocation3 + $0x180] sm:$0xff] %v2507
  %2523 = vst [vmem:[#allocation3 + $0x188] sm:$0xff] %v2509
  %2524 = vst.msk [vmem:[#allocation3 + $0x190] sm:$0xff] %vm36, %v2510
  %2525 = vst [vmem:[#allocation3 + $0x198] sm:$0xff] %v2512
  %2526 = vst [vmem:[#allocation3 + $0x1a0] sm:$0xff] %v2514
  %2527 = vst.msk [vmem:[#allocation3 + $0x1a8] sm:$0xff] %vm36, %v2515
  %v2528 = vld [vmem:[%s5] sm:$0xff]
  %v2529 = vld [vmem:[%s5 + $0x8] sm:$0xff]
  %v2530 = vld [vmem:[%s5 + $0x10] sm:$0xff]
  %v2531 = vld [vmem:[%s5 + $0x18] sm:$0xff]
  %v2532 = vld [vmem:[#allocation3] sm:$0xff]
  %v2533 = vld [vmem:[#allocation3 + $0x8] sm:$0xff]
  %v2534 = vld [vmem:[#allocation3 + $0x10] sm:$0xff]
  %v2535 = vld [vmem:[#allocation3 + $0x18] sm:$0xff]
  %v2536 = vld [vmem:[#allocation3 + $0x20] sm:$0xff]
  %v2537 = vld [vmem:[#allocation3 + $0x28] sm:$0xff]
  %v2538 = vld [vmem:[#allocation3 + $0x30] sm:$0xff]
  %v2539 = vld [vmem:[#allocation3 + $0x38] sm:$0xff]
  %v2540 = vld [vmem:[#allocation3 + $0x40] sm:$0xff]
  %v2541 = vld [vmem:[#allocation3 + $0x48] sm:$0xff]
  %v2542 = vld [vmem:[#allocation3 + $0x50] sm:$0xff]
  %v2543 = vld [vmem:[#allocation3 + $0x58] sm:$0xff]
  %v2544 = vld [vmem:[#allocation3 + $0x60] sm:$0xff]
  %v2545 = vld [vmem:[#allocation3 + $0x68] sm:$0xff]
  %v2546 = vld [vmem:[#allocation3 + $0x70] sm:$0xff]
  %v2547 = vld [vmem:[#allocation3 + $0x78] sm:$0xff]
  %v2548 = vld [vmem:[#allocation3 + $0x80] sm:$0xff]
  %v2549 = vld [vmem:[#allocation3 + $0x88] sm:$0xff]
  %v2550 = vld [vmem:[#allocation3 + $0x90] sm:$0xff]
  %v2551 = vld [vmem:[#allocation3 + $0x98] sm:$0xff]
  %v2552 = vld [vmem:[#allocation3 + $0xa0] sm:$0xff]
  %v2553 = vld [vmem:[#allocation3 + $0xa8] sm:$0xff]
  %v2554 = vld [vmem:[#allocation3 + $0xb0] sm:$0xff]
  %v2555 = vld [vmem:[#allocation3 + $0xb8] sm:$0xff]
  %v2556 = vld [vmem:[#allocation3 + $0xc0] sm:$0xff]
  %v2557 = vld [vmem:[#allocation3 + $0xc8] sm:$0xff]
  %v2558 = vld [vmem:[#allocation3 + $0xd0] sm:$0xff]
  %v2559 = vld [vmem:[#allocation3 + $0xd8] sm:$0xff]
  %v2560 = vld [vmem:[#allocation3 + $0xe0] sm:$0xff]
  %v2561 = vld [vmem:[#allocation3 + $0xe8] sm:$0xff]
  %v2562 = vld [vmem:[#allocation3 + $0xf0] sm:$0xff]
  %v2563 = vld [vmem:[#allocation3 + $0xf8] sm:$0xff]
  %v2564 = vld [vmem:[#allocation3 + $0x100] sm:$0xff]
  %v2565 = vld [vmem:[#allocation3 + $0x108] sm:$0xff]
  %v2566 = vld [vmem:[#allocation3 + $0x110] sm:$0xff]
  %v2567 = vld [vmem:[#allocation3 + $0x118] sm:$0xff]
  %v2568 = vld [vmem:[#allocation3 + $0x120] sm:$0xff]
  %v2569 = vld [vmem:[#allocation3 + $0x128] sm:$0xff]
  %v2570 = vld [vmem:[#allocation3 + $0x130] sm:$0xff]
  %v2571 = vld [vmem:[#allocation3 + $0x138] sm:$0xff]
  %v2572 = vld [vmem:[#allocation3 + $0x140] sm:$0xff]
  %v2573 = vld [vmem:[#allocation3 + $0x148] sm:$0xff]
  %v2574 = vld [vmem:[#allocation3 + $0x150] sm:$0xff]
  %v2575 = vld [vmem:[#allocation3 + $0x158] sm:$0xff]
  %v2576 = vld [vmem:[#allocation3 + $0x160] sm:$0xff]
  %v2577 = vld [vmem:[#allocation3 + $0x168] sm:$0xff]
  %v2578 = vld [vmem:[#allocation3 + $0x170] sm:$0xff]
  %v2579 = vld [vmem:[#allocation3 + $0x178] sm:$0xff]
  %v2580 = vld [vmem:[#allocation3 + $0x180] sm:$0xff]
  %v2581 = vld [vmem:[#allocation3 + $0x188] sm:$0xff]
  %v2582 = vld [vmem:[#allocation3 + $0x190] sm:$0xff]
  %v2583 = vld [vmem:[#allocation3 + $0x198] sm:$0xff]
  %v2584 = vld [vmem:[#allocation3 + $0x1a0] sm:$0xff]
  %v2585 = vld [vmem:[#allocation3 + $0x1a8] sm:$0xff]
  %v2590 = vunpack.c.l.b16 %v2528
  %v2591 = vunpack.c.h.b16 %v2528
  %v2592 = vunpack.c.l.b16 %v2529
  %v2593 = vunpack.c.h.b16 %v2529
  %v2594 = vunpack.c.l.b16 %v2530
  %v2595 = vunpack.c.h.b16 %v2530
  %v2596 = vunpack.c.l.b16 %v2531
  %v2597 = vunpack.c.h.b16 %v2531
  %v2598 = vpack.c.b16 %v2592, %v2590
  %v2599 = vpack.c.b16 %v2593, %v2591
  %v2600 = vpack.c.b16 %v2596, %v2594
  %v2601 = vpack.c.b16 %v2597, %v2595
  %v2658 = vunpack.c.l.b16 %v2532
  %v2659 = vunpack.c.h.b16 %v2532
  %v2660 = vunpack.c.l.b16 %v2533
  %v2661 = vunpack.c.h.b16 %v2533
  %v2662 = vunpack.c.l.b16 %v2534
  %v2663 = vunpack.c.h.b16 %v2534
  %v2664 = vunpack.c.l.b16 %v2535
  %v2665 = vunpack.c.h.b16 %v2535
  %v2666 = vunpack.c.l.b16 %v2536
  %v2667 = vunpack.c.h.b16 %v2536
  %v2668 = vunpack.c.l.b16 %v2537
  %v2669 = vunpack.c.h.b16 %v2537
  %v2670 = vunpack.c.l.b16 %v2538
  %v2671 = vunpack.c.h.b16 %v2538
  %v2672 = vunpack.c.l.b16 %v2539
  %v2673 = vunpack.c.h.b16 %v2539
  %v2674 = vunpack.c.l.b16 %v2540
  %v2675 = vunpack.c.h.b16 %v2540
  %v2676 = vunpack.c.l.b16 %v2541
  %v2677 = vunpack.c.h.b16 %v2541
  %v2678 = vunpack.c.l.b16 %v2542
  %v2679 = vunpack.c.h.b16 %v2542
  %v2680 = vunpack.c.l.b16 %v2543
  %v2681 = vunpack.c.h.b16 %v2543
  %v2682 = vunpack.c.l.b16 %v2544
  %v2683 = vunpack.c.h.b16 %v2544
  %v2684 = vunpack.c.l.b16 %v2545
  %v2685 = vunpack.c.h.b16 %v2545
  %v2686 = vunpack.c.l.b16 %v2546
  %v2687 = vunpack.c.h.b16 %v2546
  %v2688 = vunpack.c.l.b16 %v2547
  %v2689 = vunpack.c.h.b16 %v2547
  %v2690 = vunpack.c.l.b16 %v2548
  %v2691 = vunpack.c.h.b16 %v2548
  %v2692 = vunpack.c.l.b16 %v2549
  %v2693 = vunpack.c.h.b16 %v2549
  %v2694 = vunpack.c.l.b16 %v2550
  %v2695 = vunpack.c.h.b16 %v2550
  %v2696 = vunpack.c.l.b16 %v2551
  %v2697 = vunpack.c.h.b16 %v2551
  %v2698 = vunpack.c.l.b16 %v2552
  %v2699 = vunpack.c.h.b16 %v2552
  %v2700 = vunpack.c.l.b16 %v2553
  %v2701 = vunpack.c.h.b16 %v2553
  %v2702 = vunpack.c.l.b16 %v2554
  %v2703 = vunpack.c.h.b16 %v2554
  %v2704 = vunpack.c.l.b16 %v2555
  %v2705 = vunpack.c.h.b16 %v2555
  %v2706 = vunpack.c.l.b16 %v2556
  %v2707 = vunpack.c.h.b16 %v2556
  %v2708 = vunpack.c.l.b16 %v2557
  %v2709 = vunpack.c.h.b16 %v2557
  %v2710 = vunpack.c.l.b16 %v2558
  %v2711 = vunpack.c.h.b16 %v2558
  %v2712 = vunpack.c.l.b16 %v2559
  %v2713 = vunpack.c.h.b16 %v2559
  %v2714 = vunpack.c.l.b16 %v2560
  %v2715 = vunpack.c.h.b16 %v2560
  %v2716 = vunpack.c.l.b16 %v2561
  %v2717 = vunpack.c.h.b16 %v2561
  %v2718 = vunpack.c.l.b16 %v2562
  %v2719 = vunpack.c.h.b16 %v2562
  %v2720 = vunpack.c.l.b16 %v2563
  %v2721 = vunpack.c.h.b16 %v2563
  %v2722 = vunpack.c.l.b16 %v2564
  %v2723 = vunpack.c.h.b16 %v2564
  %v2724 = vunpack.c.l.b16 %v2565
  %v2725 = vunpack.c.h.b16 %v2565
  %v2726 = vunpack.c.l.b16 %v2566
  %v2727 = vunpack.c.h.b16 %v2566
  %v2728 = vunpack.c.l.b16 %v2567
  %v2729 = vunpack.c.h.b16 %v2567
  %v2730 = vunpack.c.l.b16 %v2568
  %v2731 = vunpack.c.h.b16 %v2568
  %v2732 = vunpack.c.l.b16 %v2569
  %v2733 = vunpack.c.h.b16 %v2569
  %v2734 = vunpack.c.l.b16 %v2570
  %v2735 = vunpack.c.h.b16 %v2570
  %v2736 = vunpack.c.l.b16 %v2571
  %v2737 = vunpack.c.h.b16 %v2571
  %v2738 = vunpack.c.l.b16 %v2572
  %v2739 = vunpack.c.h.b16 %v2572
  %v2740 = vunpack.c.l.b16 %v2573
  %v2741 = vunpack.c.h.b16 %v2573
  %v2742 = vunpack.c.l.b16 %v2574
  %v2743 = vunpack.c.h.b16 %v2574
  %v2744 = vunpack.c.l.b16 %v2575
  %v2745 = vunpack.c.h.b16 %v2575
  %v2746 = vunpack.c.l.b16 %v2576
  %v2747 = vunpack.c.h.b16 %v2576
  %v2748 = vunpack.c.l.b16 %v2577
  %v2749 = vunpack.c.h.b16 %v2577
  %v2750 = vunpack.c.l.b16 %v2578
  %v2751 = vunpack.c.h.b16 %v2578
  %v2752 = vunpack.c.l.b16 %v2579
  %v2753 = vunpack.c.h.b16 %v2579
  %v2754 = vunpack.c.l.b16 %v2580
  %v2755 = vunpack.c.h.b16 %v2580
  %v2756 = vunpack.c.l.b16 %v2581
  %v2757 = vunpack.c.h.b16 %v2581
  %v2758 = vunpack.c.l.b16 %v2582
  %v2759 = vunpack.c.h.b16 %v2582
  %v2760 = vunpack.c.l.b16 %v2583
  %v2761 = vunpack.c.h.b16 %v2583
  %v2762 = vunpack.c.l.b16 %v2584
  %v2763 = vunpack.c.h.b16 %v2584
  %v2764 = vunpack.c.l.b16 %v2585
  %v2765 = vunpack.c.h.b16 %v2585
  %v2766 = vpack.c.b16 %v2664, %v2658
  %v2767 = vpack.c.b16 %v2665, %v2659
  %v2768 = vpack.c.b16 %v2666, %v2660
  %v2769 = vpack.c.b16 %v2667, %v2661
  %v2770 = vpack.c.b16 %v2668, %v2662
  %v2771 = vpack.c.b16 %v2669, %v2663
  %v2772 = vpack.c.b16 %v2676, %v2670
  %v2773 = vpack.c.b16 %v2677, %v2671
  %v2774 = vpack.c.b16 %v2678, %v2672
  %v2775 = vpack.c.b16 %v2679, %v2673
  %v2776 = vpack.c.b16 %v2680, %v2674
  %v2777 = vpack.c.b16 %v2681, %v2675
  %v2778 = vpack.c.b16 %v2688, %v2682
  %v2779 = vpack.c.b16 %v2689, %v2683
  %v2780 = vpack.c.b16 %v2690, %v2684
  %v2781 = vpack.c.b16 %v2691, %v2685
  %v2782 = vpack.c.b16 %v2692, %v2686
  %v2783 = vpack.c.b16 %v2693, %v2687
  %v2784 = vpack.c.b16 %v2700, %v2694
  %v2785 = vpack.c.b16 %v2701, %v2695
  %v2786 = vpack.c.b16 %v2702, %v2696
  %v2787 = vpack.c.b16 %v2703, %v2697
  %v2788 = vpack.c.b16 %v2704, %v2698
  %v2789 = vpack.c.b16 %v2705, %v2699
  %v2790 = vpack.c.b16 %v2712, %v2706
  %v2791 = vpack.c.b16 %v2713, %v2707
  %v2792 = vpack.c.b16 %v2714, %v2708
  %v2793 = vpack.c.b16 %v2715, %v2709
  %v2794 = vpack.c.b16 %v2716, %v2710
  %v2795 = vpack.c.b16 %v2717, %v2711
  %v2796 = vpack.c.b16 %v2724, %v2718
  %v2797 = vpack.c.b16 %v2725, %v2719
  %v2798 = vpack.c.b16 %v2726, %v2720
  %v2799 = vpack.c.b16 %v2727, %v2721
  %v2800 = vpack.c.b16 %v2728, %v2722
  %v2801 = vpack.c.b16 %v2729, %v2723
  %v2802 = vpack.c.b16 %v2736, %v2730
  %v2803 = vpack.c.b16 %v2737, %v2731
  %v2804 = vpack.c.b16 %v2738, %v2732
  %v2805 = vpack.c.b16 %v2739, %v2733
  %v2806 = vpack.c.b16 %v2740, %v2734
  %v2807 = vpack.c.b16 %v2741, %v2735
  %v2808 = vpack.c.b16 %v2748, %v2742
  %v2809 = vpack.c.b16 %v2749, %v2743
  %v2810 = vpack.c.b16 %v2750, %v2744
  %v2811 = vpack.c.b16 %v2751, %v2745
  %v2812 = vpack.c.b16 %v2752, %v2746
  %v2813 = vpack.c.b16 %v2753, %v2747
  %v2814 = vpack.c.b16 %v2760, %v2754
  %v2815 = vpack.c.b16 %v2761, %v2755
  %v2816 = vpack.c.b16 %v2762, %v2756
  %v2817 = vpack.c.b16 %v2763, %v2757
  %v2818 = vpack.c.b16 %v2764, %v2758
  %v2819 = vpack.c.b16 %v2765, %v2759
  %v2875 = vsel %vm1735, %v2599, 0
  %v2878 = vsel %vm1735, %v2601, 0
  %2880 = vmatprep.subr.bf16.mxu0 %v2809
  %2881 = vmatpush1.bf16.msra.mxu0 %v2808
  %2882 = vmatprep.subr.bf16.mxu0 %v2803
  %2883 = vmatpush1.bf16.msra.mxu0 %v2802
  %2884 = vmatprep.subr.bf16.mxu0 %v2797
  %2885 = vmatpush1.bf16.msra.mxu0 %v2796
  %2886 = vmatprep.subr.bf16.mxu0 %v2791
  %2887 = vmatpush1.bf16.msra.mxu0 %v2790
  %2888 = vmatprep.subr.bf16.mxu0 %v2785
  %2889 = vmatpush1.bf16.msra.mxu0 %v2784
  %2890 = vmatprep.subr.bf16.mxu0 %v2779
  %2891 = vmatpush1.bf16.msra.mxu0 %v2778
  %2892 = vmatprep.subr.bf16.mxu0 %v2773
  %2893 = vmatpush1.bf16.msra.mxu0 %v2772
  %2894 = vmatprep.subr.bf16.mxu0 %v2767
  %2895 = vmatpush1.bf16.msra.mxu0 %v2766
  %2896 = vmatprep.subr.bf16.mxu0 0
  %2897 = vmatpush2.bf16.msra.mxu0 0
  %2898 = vmatprep.subr.bf16.mxu0 0
  %2899 = vmatpush2.bf16.msra.mxu0 0
  %2900 = vmatprep.subr.bf16.mxu0 0
  %2901 = vmatpush2.bf16.msra.mxu0 0
  %2902 = vmatprep.subr.bf16.mxu0 0
  %2903 = vmatpush2.bf16.msra.mxu0 0
  %2904 = vmatprep.subr.bf16.mxu0 0
  %2905 = vmatpush2.bf16.msra.mxu0 0
  %2906 = vmatprep.subr.bf16.mxu0 0
  %2907 = vmatpush2.bf16.msra.mxu0 0
  %2908 = vmatprep.subr.bf16.mxu0 0
  %2909 = vmatpush2.bf16.msra.mxu0 0
  %2910 = vmatprep.subr.bf16.mxu0 %v2815
  %2911 = vmatpush2.bf16.msra.mxu0 %v2814
  %2912 = vmatprep.mubr.bf16.mxu0 %v2875
  %2913 = vmatmul.mubr.bf16.gmra.mxu0 %v2598
  %v2914 = vpop.f32.mrf.mxu0
  %v2915 = vadd.f32 0.0, %v2914
  %v2916 = vpop.f32.mrf.mxu0
  %v2917 = vadd.f32 0.0, %v2916
  %v2918 = vpop.f32.mrf.mxu0
  %v2919 = vadd.f32 0.0, %v2918
  %v2920 = vpop.f32.mrf.mxu0
  %v2921 = vadd.f32 0.0, %v2920
  %2922 = vmatprep.mubr.bf16.mxu0 %v2878
  %2923 = vmatmul.mubr.bf16.gmra.mxu0 %v2600
  %v2924 = vpop.f32.mrf.mxu0
  %v2925 = vadd.f32 0.0, %v2924
  %v2926 = vpop.f32.mrf.mxu0
  %v2927 = vadd.f32 0.0, %v2926
  %v2928 = vpop.f32.mrf.mxu0
  %v2929 = vadd.f32 0.0, %v2928
  %v2930 = vpop.f32.mrf.mxu0
  %v2931 = vadd.f32 0.0, %v2930
  %2932 = vdwg.mxu0
  %2933 = vmatprep.subr.bf16.mxu0 %v2811
  %2934 = vmatpush1.bf16.msra.mxu0 %v2810
  %2935 = vmatprep.subr.bf16.mxu0 %v2805
  %2936 = vmatpush1.bf16.msra.mxu0 %v2804
  %2937 = vmatprep.subr.bf16.mxu0 %v2799
  %2938 = vmatpush1.bf16.msra.mxu0 %v2798
  %2939 = vmatprep.subr.bf16.mxu0 %v2793
  %2940 = vmatpush1.bf16.msra.mxu0 %v2792
  %2941 = vmatprep.subr.bf16.mxu0 %v2787
  %2942 = vmatpush1.bf16.msra.mxu0 %v2786
  %2943 = vmatprep.subr.bf16.mxu0 %v2781
  %2944 = vmatpush1.bf16.msra.mxu0 %v2780
  %2945 = vmatprep.subr.bf16.mxu0 %v2775
  %2946 = vmatpush1.bf16.msra.mxu0 %v2774
  %2947 = vmatprep.subr.bf16.mxu0 %v2769
  %2948 = vmatpush1.bf16.msra.mxu0 %v2768
  %2949 = vmatprep.subr.bf16.mxu0 0
  %2950 = vmatpush2.bf16.msra.mxu0 0
  %2951 = vmatprep.subr.bf16.mxu0 0
  %2952 = vmatpush2.bf16.msra.mxu0 0
  %2953 = vmatprep.subr.bf16.mxu0 0
  %2954 = vmatpush2.bf16.msra.mxu0 0
  %2955 = vmatprep.subr.bf16.mxu0 0
  %2956 = vmatpush2.bf16.msra.mxu0 0
  %2957 = vmatprep.subr.bf16.mxu0 0
  %2958 = vmatpush2.bf16.msra.mxu0 0
  %2959 = vmatprep.subr.bf16.mxu0 0
  %2960 = vmatpush2.bf16.msra.mxu0 0
  %2961 = vmatprep.subr.bf16.mxu0 0
  %2962 = vmatpush2.bf16.msra.mxu0 0
  %2963 = vmatprep.subr.bf16.mxu0 %v2817
  %2964 = vmatpush2.bf16.msra.mxu0 %v2816
  %2965 = vmatprep.mubr.bf16.mxu0 %v2875
  %2966 = vmatmul.mubr.bf16.gmra.mxu0 %v2598
  %v2967 = vpop.f32.mrf.mxu0
  %v2968 = vadd.f32 0.0, %v2967
  %v2969 = vpop.f32.mrf.mxu0
  %v2970 = vadd.f32 0.0, %v2969
  %v2971 = vpop.f32.mrf.mxu0
  %v2972 = vadd.f32 0.0, %v2971
  %v2973 = vpop.f32.mrf.mxu0
  %v2974 = vadd.f32 0.0, %v2973
  %2975 = vmatprep.mubr.bf16.mxu0 %v2878
  %2976 = vmatmul.mubr.bf16.gmra.mxu0 %v2600
  %v2977 = vpop.f32.mrf.mxu0
  %v2978 = vadd.f32 0.0, %v2977
  %v2979 = vpop.f32.mrf.mxu0
  %v2980 = vadd.f32 0.0, %v2979
  %v2981 = vpop.f32.mrf.mxu0
  %v2982 = vadd.f32 0.0, %v2981
  %v2983 = vpop.f32.mrf.mxu0
  %v2984 = vadd.f32 0.0, %v2983
  %2985 = vdwg.mxu0
  %2986 = vmatprep.subr.bf16.mxu0 %v2813
  %2987 = vmatpush1.bf16.msra.mxu0 %v2812
  %2988 = vmatprep.subr.bf16.mxu0 %v2807
  %2989 = vmatpush1.bf16.msra.mxu0 %v2806
  %2990 = vmatprep.subr.bf16.mxu0 %v2801
  %2991 = vmatpush1.bf16.msra.mxu0 %v2800
  %2992 = vmatprep.subr.bf16.mxu0 %v2795
  %2993 = vmatpush1.bf16.msra.mxu0 %v2794
  %2994 = vmatprep.subr.bf16.mxu0 %v2789
  %2995 = vmatpush1.bf16.msra.mxu0 %v2788
  %2996 = vmatprep.subr.bf16.mxu0 %v2783
  %2997 = vmatpush1.bf16.msra.mxu0 %v2782
  %2998 = vmatprep.subr.bf16.mxu0 %v2777
  %2999 = vmatpush1.bf16.msra.mxu0 %v2776
  %3000 = vmatprep.subr.bf16.mxu0 %v2771
  %3001 = vmatpush1.bf16.msra.mxu0 %v2770
  %3002 = vmatprep.subr.bf16.mxu0 0
  %3003 = vmatpush2.bf16.msra.mxu0 0
  %3004 = vmatprep.subr.bf16.mxu0 0
  %3005 = vmatpush2.bf16.msra.mxu0 0
  %3006 = vmatprep.subr.bf16.mxu0 0
  %3007 = vmatpush2.bf16.msra.mxu0 0
  %3008 = vmatprep.subr.bf16.mxu0 0
  %3009 = vmatpush2.bf16.msra.mxu0 0
  %3010 = vmatprep.subr.bf16.mxu0 0
  %3011 = vmatpush2.bf16.msra.mxu0 0
  %3012 = vmatprep.subr.bf16.mxu0 0
  %3013 = vmatpush2.bf16.msra.mxu0 0
  %3014 = vmatprep.subr.bf16.mxu0 0
  %3015 = vmatpush2.bf16.msra.mxu0 0
  %3016 = vmatprep.subr.bf16.mxu0 %v2819
  %3017 = vmatpush2.bf16.msra.mxu0 %v2818
  %3018 = vmatprep.mubr.bf16.mxu0 %v2875
  %3019 = vmatmul.mubr.bf16.gmra.mxu0 %v2598
  %v3020 = vpop.f32.mrf.mxu0
  %v3021 = vadd.f32 0.0, %v3020
  %v3022 = vpop.f32.mrf.mxu0
  %v3023 = vadd.f32 0.0, %v3022
  %v3024 = vpop.f32.mrf.mxu0
  %v3025 = vadd.f32 0.0, %v3024
  %v3026 = vpop.f32.mrf.mxu0
  %v3027 = vadd.f32 0.0, %v3026
  %3028 = vmatprep.mubr.bf16.mxu0 %v2878
  %3029 = vmatmul.mubr.bf16.gmra.mxu0 %v2600
  %v3030 = vpop.f32.mrf.mxu0
  %v3031 = vadd.f32 0.0, %v3030
  %v3032 = vpop.f32.mrf.mxu0
  %v3033 = vadd.f32 0.0, %v3032
  %v3034 = vpop.f32.mrf.mxu0
  %v3035 = vadd.f32 0.0, %v3034
  %v3036 = vpop.f32.mrf.mxu0
  %v3037 = vadd.f32 0.0, %v3036
  %3038 = vdwg.mxu0
  %v3039 = vmul.f32 %v2915, %v724
  %v3040 = vmul.f32 %v2917, %v728
  %v3041 = vmul.f32 %v2968, %v732
  %v3042 = vmul.f32 %v2970, %v736
  %v3043 = vmul.f32 %v3021, %v740
  %v3044 = vmul.f32 %v3023, %v744
  %v3045 = vmul.f32 %v2919, %v724
  %v3046 = vmul.f32 %v2921, %v728
  %v3047 = vmul.f32 %v2972, %v732
  %v3048 = vmul.f32 %v2974, %v736
  %v3049 = vmul.f32 %v3025, %v740
  %v3050 = vmul.f32 %v3027, %v744
  %v3051 = vmul.f32 %v2925, %v724
  %v3052 = vmul.f32 %v2927, %v728
  %v3053 = vmul.f32 %v2978, %v732
  %v3054 = vmul.f32 %v2980, %v736
  %v3055 = vmul.f32 %v3031, %v740
  %v3056 = vmul.f32 %v3033, %v744
  %v3057 = vmul.f32 %v2929, %v724
  %v3058 = vmul.f32 %v2931, %v728
  %v3059 = vmul.f32 %v2982, %v732
  %v3060 = vmul.f32 %v2984, %v736
  %v3061 = vmul.f32 %v3035, %v740
  %v3062 = vmul.f32 %v3037, %v744
  %v3063 = vadd.f32 %v3039, %v3040
  %v3064 = vadd.f32 %v3063, %v3041
  %v3065 = vadd.f32 %v3064, %v3042
  %v3066 = vadd.f32 %v3065, %v3043
  %v3067 = vsel %vm767, %v3044, 0.0
  %v3068 = vadd.f32 %v3066, %v3067
  %3069 = vadd.xlane.f32.xlu0 %v3068
  %v3070 = vpop.xlane.xlu0 %3069
  %v3071 = vadd.f32 %v3045, %v3046
  %v3072 = vadd.f32 %v3071, %v3047
  %v3073 = vadd.f32 %v3072, %v3048
  %v3074 = vadd.f32 %v3073, %v3049
  %v3075 = vsel %vm767, %v3050, 0.0
  %v3076 = vadd.f32 %v3074, %v3075
  %3077 = vadd.xlane.f32.xlu0 %v3076
  %v3078 = vpop.xlane.xlu0 %3077
  %v3079 = vadd.f32 %v3051, %v3052
  %v3080 = vadd.f32 %v3079, %v3053
  %v3081 = vadd.f32 %v3080, %v3054
  %v3082 = vadd.f32 %v3081, %v3055
  %v3083 = vsel %vm767, %v3056, 0.0
  %v3084 = vadd.f32 %v3082, %v3083
  %3085 = vadd.xlane.f32.xlu0 %v3084
  %v3086 = vpop.xlane.xlu0 %3085
  %v3087 = vadd.f32 %v3057, %v3058
  %v3088 = vadd.f32 %v3087, %v3059
  %v3089 = vadd.f32 %v3088, %v3060
  %v3090 = vadd.f32 %v3089, %v3061
  %v3091 = vsel %vm767, %v3062, 0.0
  %v3092 = vadd.f32 %v3090, %v3091
  %3093 = vadd.xlane.f32.xlu0 %v3092
  %v3094 = vpop.xlane.xlu0 %3093
  %v3095 = vmul.f32 %v3070, 0.001953125
  %v3096 = vmul.f32 %v3078, 0.001953125
  %v3097 = vmul.f32 %v3086, 0.001953125
  %v3098 = vmul.f32 %v3094, 0.001953125
  %v3099 = vmul.f32 %v3039, %v3039
  %v3100 = vmul.f32 %v3040, %v3040
  %v3101 = vmul.f32 %v3041, %v3041
  %v3102 = vmul.f32 %v3042, %v3042
  %v3103 = vmul.f32 %v3043, %v3043
  %v3104 = vmul.f32 %v3044, %v3044
  %v3105 = vmul.f32 %v3045, %v3045
  %v3106 = vmul.f32 %v3046, %v3046
  %v3107 = vmul.f32 %v3047, %v3047
  %v3108 = vmul.f32 %v3048, %v3048
  %v3109 = vmul.f32 %v3049, %v3049
  %v3110 = vmul.f32 %v3050, %v3050
  %v3111 = vmul.f32 %v3051, %v3051
  %v3112 = vmul.f32 %v3052, %v3052
  %v3113 = vmul.f32 %v3053, %v3053
  %v3114 = vmul.f32 %v3054, %v3054
  %v3115 = vmul.f32 %v3055, %v3055
  %v3116 = vmul.f32 %v3056, %v3056
  %v3117 = vmul.f32 %v3057, %v3057
  %v3118 = vmul.f32 %v3058, %v3058
  %v3119 = vmul.f32 %v3059, %v3059
  %v3120 = vmul.f32 %v3060, %v3060
  %v3121 = vmul.f32 %v3061, %v3061
  %v3122 = vmul.f32 %v3062, %v3062
  %v3123 = vadd.f32 %v3099, %v3100
  %v3124 = vadd.f32 %v3123, %v3101
  %v3125 = vadd.f32 %v3124, %v3102
  %v3126 = vadd.f32 %v3125, %v3103
  %v3127 = vsel %vm767, %v3104, 0.0
  %v3128 = vadd.f32 %v3126, %v3127
  %3129 = vadd.xlane.f32.xlu0 %v3128
  %v3130 = vpop.xlane.xlu0 %3129
  %v3131 = vadd.f32 %v3105, %v3106
  %v3132 = vadd.f32 %v3131, %v3107
  %v3133 = vadd.f32 %v3132, %v3108
  %v3134 = vadd.f32 %v3133, %v3109
  %v3135 = vsel %vm767, %v3110, 0.0
  %v3136 = vadd.f32 %v3134, %v3135
  %3137 = vadd.xlane.f32.xlu0 %v3136
  %v3138 = vpop.xlane.xlu0 %3137
  %v3139 = vadd.f32 %v3111, %v3112
  %v3140 = vadd.f32 %v3139, %v3113
  %v3141 = vadd.f32 %v3140, %v3114
  %v3142 = vadd.f32 %v3141, %v3115
  %v3143 = vsel %vm767, %v3116, 0.0
  %v3144 = vadd.f32 %v3142, %v3143
  %3145 = vadd.xlane.f32.xlu0 %v3144
  %v3146 = vpop.xlane.xlu0 %3145
  %v3147 = vadd.f32 %v3117, %v3118
  %v3148 = vadd.f32 %v3147, %v3119
  %v3149 = vadd.f32 %v3148, %v3120
  %v3150 = vadd.f32 %v3149, %v3121
  %v3151 = vsel %vm767, %v3122, 0.0
  %v3152 = vadd.f32 %v3150, %v3151
  %3153 = vadd.xlane.f32.xlu0 %v3152
  %v3154 = vpop.xlane.xlu0 %3153
  %v3155 = vmul.f32 %v3130, 0.001953125
  %v3156 = vmul.f32 %v3138, 0.001953125
  %v3157 = vmul.f32 %v3146, 0.001953125
  %v3158 = vmul.f32 %v3154, 0.001953125
  %v3159 = vmul.f32 %v3095, %v3095
  %v3160 = vmul.f32 %v3096, %v3096
  %v3161 = vmul.f32 %v3097, %v3097
  %v3162 = vmul.f32 %v3098, %v3098
  %v3163 = vsub.f32 %v3155, %v3159
  %v3164 = vsub.f32 %v3156, %v3160
  %v3165 = vsub.f32 %v3157, %v3161
  %v3166 = vsub.f32 %v3158, %v3162
  %v3167 = vmax.f32 %v3163, 0.0
  %v3168 = vmax.f32 %v3164, 0.0
  %v3169 = vmax.f32 %v3165, 0.0
  %v3170 = vmax.f32 %v3166, 0.0
  %v3171 = vld [vmem:[%s6] sm:$0xff]
  %v3172 = vld [vmem:[%s6 + $0x8] sm:$0xff]
  %v3173 = vld [vmem:[%s6 + $0x10] sm:$0xff]
  %v3174 = vld [vmem:[%s6 + $0x18] sm:$0xff]
  %v3175 = vadd.f32 %v3167, 1e-05
  %v3176 = vadd.f32 %v3168, 1e-05
  %v3177 = vadd.f32 %v3169, 1e-05
  %v3178 = vadd.f32 %v3170, 1e-05
  %v3179 = vrsqrt.pop %v3175
  %v3180 = vrsqrt.pop %v3176
  %v3181 = vrsqrt.pop %v3177
  %v3182 = vrsqrt.pop %v3178
  %v3183 = vmul.f32 %v3171, %v3179
  %v3184 = vmul.f32 %v3172, %v3180
  %v3185 = vmul.f32 %v3173, %v3181
  %v3186 = vmul.f32 %v3174, %v3182
  %3188 = vset.pattern.permute.xlu0 0
  %3189 = vperm.xlu0 %3188, %v3183
  %v3190 = vpop.permute.xlu0 %3189
  %3193 = vset.pattern.permute.xlu0 0
  %3194 = vperm.xlu0 %3193, %v3184
  %v3195 = vpop.permute.xlu0 %3194
  %3198 = vset.pattern.permute.xlu0 0
  %3199 = vperm.xlu0 %3198, %v3185
  %v3200 = vpop.permute.xlu0 %3199
  %3203 = vset.pattern.permute.xlu0 0
  %3204 = vperm.xlu0 %3203, %v3186
  %v3205 = vpop.permute.xlu0 %3204
  %v3207 = vmul.f32 %v2915, %v3190
  %v3208 = vmul.f32 %v2917, %v3190
  %v3209 = vmul.f32 %v2968, %v3190
  %v3210 = vmul.f32 %v2970, %v3190
  %v3211 = vmul.f32 %v3021, %v3190
  %v3212 = vmul.f32 %v3023, %v3190
  %v3213 = vmul.f32 %v2919, %v3195
  %v3214 = vmul.f32 %v2921, %v3195
  %v3215 = vmul.f32 %v2972, %v3195
  %v3216 = vmul.f32 %v2974, %v3195
  %v3217 = vmul.f32 %v3025, %v3195
  %v3218 = vmul.f32 %v3027, %v3195
  %v3219 = vmul.f32 %v2925, %v3200
  %v3220 = vmul.f32 %v2927, %v3200
  %v3221 = vmul.f32 %v2978, %v3200
  %v3222 = vmul.f32 %v2980, %v3200
  %v3223 = vmul.f32 %v3031, %v3200
  %v3224 = vmul.f32 %v3033, %v3200
  %v3225 = vmul.f32 %v2929, %v3205
  %v3226 = vmul.f32 %v2931, %v3205
  %v3227 = vmul.f32 %v2982, %v3205
  %v3228 = vmul.f32 %v2984, %v3205
  %v3229 = vmul.f32 %v3035, %v3205
  %v3230 = vmul.f32 %v3037, %v3205
  %v3231 = vmul.f32 %v3095, %v3183
  %v3232 = vmul.f32 %v3096, %v3184
  %v3233 = vmul.f32 %v3097, %v3185
  %v3234 = vmul.f32 %v3098, %v3186
  %3239 = vrot.lane.b32.xlu0 %v3231, 1
  %v3240 = vpop.permute.xlu0 %3239
  %3241 = vrot.lane.b32.xlu0 %v3232, 1
  %v3242 = vpop.permute.xlu0 %3241
  %3243 = vrot.lane.b32.xlu0 %v3233, 1
  %v3244 = vpop.permute.xlu0 %3243
  %3245 = vrot.lane.b32.xlu0 %v3234, 1
  %v3246 = vpop.permute.xlu0 %3245
  %v3251 = vsub.f32 %v3171, %v3240
  %v3252 = vsub.f32 %v3172, %v3242
  %v3253 = vsub.f32 %v3173, %v3244
  %v3254 = vsub.f32 %v3174, %v3246
  %3256 = vset.pattern.permute.xlu0 1
  %3257 = vperm.xlu0 %3256, %v3251
  %v3258 = vpop.permute.xlu0 %3257
  %3261 = vset.pattern.permute.xlu0 1
  %3262 = vperm.xlu0 %3261, %v3252
  %v3263 = vpop.permute.xlu0 %3262
  %3266 = vset.pattern.permute.xlu0 1
  %3267 = vperm.xlu0 %3266, %v3253
  %v3268 = vpop.permute.xlu0 %3267
  %3271 = vset.pattern.permute.xlu0 1
  %3272 = vperm.xlu0 %3271, %v3254
  %v3273 = vpop.permute.xlu0 %3272
  %v3275 = vadd.f32 %v3207, %v3258
  %v3276 = vadd.f32 %v3208, %v3258
  %v3277 = vadd.f32 %v3209, %v3258
  %v3278 = vadd.f32 %v3210, %v3258
  %v3279 = vadd.f32 %v3211, %v3258
  %v3280 = vadd.f32 %v3212, %v3258
  %v3281 = vadd.f32 %v3213, %v3263
  %v3282 = vadd.f32 %v3214, %v3263
  %v3283 = vadd.f32 %v3215, %v3263
  %v3284 = vadd.f32 %v3216, %v3263
  %v3285 = vadd.f32 %v3217, %v3263
  %v3286 = vadd.f32 %v3218, %v3263
  %v3287 = vadd.f32 %v3219, %v3268
  %v3288 = vadd.f32 %v3220, %v3268
  %v3289 = vadd.f32 %v3221, %v3268
  %v3290 = vadd.f32 %v3222, %v3268
  %v3291 = vadd.f32 %v3223, %v3268
  %v3292 = vadd.f32 %v3224, %v3268
  %v3293 = vadd.f32 %v3225, %v3273
  %v3294 = vadd.f32 %v3226, %v3273
  %v3295 = vadd.f32 %v3227, %v3273
  %v3296 = vadd.f32 %v3228, %v3273
  %v3297 = vadd.f32 %v3229, %v3273
  %v3298 = vadd.f32 %v3230, %v3273
  %v3299 = vmax.f32 %v3275, 0.0
  %v3300 = vmax.f32 %v3276, 0.0
  %v3301 = vmax.f32 %v3277, 0.0
  %v3302 = vmax.f32 %v3278, 0.0
  %v3303 = vmax.f32 %v3279, 0.0
  %v3304 = vmax.f32 %v3280, 0.0
  %v3305 = vmax.f32 %v3281, 0.0
  %v3306 = vmax.f32 %v3282, 0.0
  %v3307 = vmax.f32 %v3283, 0.0
  %v3308 = vmax.f32 %v3284, 0.0
  %v3309 = vmax.f32 %v3285, 0.0
  %v3310 = vmax.f32 %v3286, 0.0
  %v3311 = vmax.f32 %v3287, 0.0
  %v3312 = vmax.f32 %v3288, 0.0
  %v3313 = vmax.f32 %v3289, 0.0
  %v3314 = vmax.f32 %v3290, 0.0
  %v3315 = vmax.f32 %v3291, 0.0
  %v3316 = vmax.f32 %v3292, 0.0
  %v3317 = vmax.f32 %v3293, 0.0
  %v3318 = vmax.f32 %v3294, 0.0
  %v3319 = vmax.f32 %v3295, 0.0
  %v3320 = vmax.f32 %v3296, 0.0
  %v3321 = vmax.f32 %v3297, 0.0
  %v3322 = vmax.f32 %v3298, 0.0
  %3323 = vst [vmem:[%s8] sm:$0xff] %v3299
  %3324 = vst [vmem:[%s8 + $0x8] sm:$0xff] %v3300
  %3325 = vst [vmem:[%s8 + $0x10] sm:$0xff] %v3301
  %3326 = vst [vmem:[%s8 + $0x18] sm:$0xff] %v3302
  %3327 = vst [vmem:[%s8 + $0x20] sm:$0xff] %v3303
  %3328 = vst.msk [vmem:[%s8 + $0x28] sm:$0xff] %vm767, %v3304
  %3329 = vst [vmem:[%s8 + $0x30] sm:$0xff] %v3305
  %3330 = vst [vmem:[%s8 + $0x38] sm:$0xff] %v3306
  %3331 = vst [vmem:[%s8 + $0x40] sm:$0xff] %v3307
  %3332 = vst [vmem:[%s8 + $0x48] sm:$0xff] %v3308
  %3333 = vst [vmem:[%s8 + $0x50] sm:$0xff] %v3309
  %3334 = vst.msk [vmem:[%s8 + $0x58] sm:$0xff] %vm767, %v3310
  %3335 = vst [vmem:[%s8 + $0x60] sm:$0xff] %v3311
  %3336 = vst [vmem:[%s8 + $0x68] sm:$0xff] %v3312
  %3337 = vst [vmem:[%s8 + $0x70] sm:$0xff] %v3313
  %3338 = vst [vmem:[%s8 + $0x78] sm:$0xff] %v3314
  %3339 = vst [vmem:[%s8 + $0x80] sm:$0xff] %v3315
  %3340 = vst.msk [vmem:[%s8 + $0x88] sm:$0xff] %vm767, %v3316
  %3341 = vst [vmem:[%s8 + $0x90] sm:$0xff] %v3317
  %3342 = vst [vmem:[%s8 + $0x98] sm:$0xff] %v3318
  %3343 = vst [vmem:[%s8 + $0xa0] sm:$0xff] %v3319
  %3344 = vst [vmem:[%s8 + $0xa8] sm:$0xff] %v3320
  %3345 = vst [vmem:[%s8 + $0xb0] sm:$0xff] %v3321
  %3346 = vst.msk [vmem:[%s8 + $0xb8] sm:$0xff] %vm767, %v3322
  // Predicated region
  $region34: #{_lambda_.1} parent=0 // pred_check
    _
  $region35: #{_lambda_.1} parent=0 // pred_check_branch
    %3348 = sbr.rel (0) target = $region37
  $region36: #{_lambda_.1} parent=0 // pred_region
    _
  $region37: #{_lambda_.1} parent=0 // pred_fallthru
    _
  // Predicated region
  $region38: #{_lambda_.1} parent=0 // pred_check
    _
  $region39: #{_lambda_.1} parent=0 // pred_check_branch
    %3350 = sbr.rel (0) target = $region41
  $region40: #{_lambda_.1} parent=0 // pred_region
    _
  $region41: #{_lambda_.1} parent=0 // pred_fallthru
    _

</llo_original>
